<compile_context>
chip_gen: v7x
topology: tpu7x:2x2x1
jax: 0.10.0
libtpu: 0.0.40
codegen_flags: <defaults>
</compile_context>

<pallas_src>
import functools

import jax
import jax.numpy as jnp
from jax.experimental import pallas as pl
from jax.experimental.pallas import tpu as pltpu


# ----------------------------------------------------------------------------
# Pallas kernels
# ----------------------------------------------------------------------------
def conv_pool_kernel(x_ref, band_ref, bias_ref, rsel_ref, csel_ref, o_ref, *,
                     K, OW):
    """Fused valid conv (stride 1) + bias + ReLU + 2x2/2 maxpool for one image.

    x_ref    : (1, Cin*H, W)            image slab (channels stacked on sublanes)
    band_ref : (K, Cout*OH, Cin*H)      banded weights, one slab per kw tap
    bias_ref : (Cout*OH, 1)             per-row bias (bias[co] repeated OH times)
    rsel_ref : (Cout*OH//2, Cout*OH-1)  0/1 even-row selector
    csel_ref : (OW-1, OW//2)            0/1 even-col selector
    o_ref    : (1, Cout*OH//2, OW//2)   pooled output slab
    """
    x = x_ref[0]                                            # (Cin*H, W)

    # conv as 5 accumulated MXU matmuls over lane-shifted slices of the slab
    acc = jnp.dot(band_ref[0], x[:, 0:OW],
                  preferred_element_type=jnp.float32)       # (Cout*OH, OW)
    for kw in range(1, K):
        acc = acc + jnp.dot(band_ref[kw], x[:, kw:kw + OW],
                            preferred_element_type=jnp.float32)

    acc = jnp.maximum(acc + bias_ref[...], 0.0)             # bias + ReLU

    # 2x2 stride-2 max pool: pairwise maxima of shifted slices, then select the
    # even (row, col) entries with exact 0/1 selection matmuls.
    rmax = jnp.maximum(acc[:-1, :], acc[1:, :])             # (R-1, OW)
    wmax = jnp.maximum(rmax[:, :-1], rmax[:, 1:])           # (R-1, OW-1)
    pooled = jnp.dot(rsel_ref[...], wmax,
                     preferred_element_type=jnp.float32)    # (R//2, OW-1)
    pooled = jnp.dot(pooled, csel_ref[...],
                     preferred_element_type=jnp.float32)    # (R//2, OW//2)
    o_ref[0] = pooled.astype(o_ref.dtype)


def fc_kernel(x_ref, w1_ref, b1_ref, w2_ref, b2_ref, w3_ref, b3_ref, o_ref):
    """Fused fc1+ReLU -> fc2+ReLU -> fc3 for the whole batch (one launch)."""
    h = jnp.dot(x_ref[...], w1_ref[...], preferred_element_type=jnp.float32)
    h = jnp.maximum(h + b1_ref[...], 0.0)
    h = jnp.dot(h, w2_ref[...], preferred_element_type=jnp.float32)
    h = jnp.maximum(h + b2_ref[...], 0.0)
    h = jnp.dot(h, w3_ref[...], preferred_element_type=jnp.float32) + b3_ref[...]
    o_ref[...] = h.astype(o_ref.dtype)


# ----------------------------------------------------------------------------
# Pallas wrappers
# ----------------------------------------------------------------------------
def conv_pool_stage(x_slab, band, bias_col, rsel, csel, *, OW):
    """x_slab: (N, Cin*H, W) -> (N, Cout*OH//2, OW//2) fused conv+ReLU+pool."""
    n = x_slab.shape[0]
    K, R, _ = band.shape
    rp, pw = R // 2, OW // 2
    kernel = functools.partial(conv_pool_kernel, K=K, OW=OW)
    return pl.pallas_call(
        kernel,
        out_shape=jax.ShapeDtypeStruct((n, rp, pw), jnp.float32),
        grid=(n,),
        in_specs=[
            pl.BlockSpec((1,) + x_slab.shape[1:], lambda i: (i, 0, 0)),
            pl.BlockSpec(band.shape, lambda i: (0, 0, 0)),
            pl.BlockSpec(bias_col.shape, lambda i: (0, 0)),
            pl.BlockSpec(rsel.shape, lambda i: (0, 0)),
            pl.BlockSpec(csel.shape, lambda i: (0, 0)),
        ],
        out_specs=pl.BlockSpec((1, rp, pw), lambda i: (i, 0, 0)),
        compiler_params=pltpu.CompilerParams(
            dimension_semantics=("parallel",)),
    )(x_slab, band, bias_col, rsel, csel)


def fc_head(xf, w1, b1, w2, b2, w3, b3):
    n = xf.shape[0]
    args = (xf, w1, b1.reshape(1, -1), w2, b2.reshape(1, -1),
            w3, b3.reshape(1, -1))
    return pl.pallas_call(
        fc_kernel,
        out_shape=jax.ShapeDtypeStruct((n, w3.shape[1]), jnp.float32),
        grid=(1,),
        in_specs=[pl.BlockSpec(a.shape, lambda i: (0, 0)) for a in args],
        out_specs=pl.BlockSpec((n, w3.shape[1]), lambda i: (0, 0)),
    )(*args)


# ----------------------------------------------------------------------------
# Trace-time parameter preprocessing (pure layout / weight folding)
# ----------------------------------------------------------------------------
def _band_matrices(w, H):
    """Fold the (cin, kh) contraction of a KxK valid conv into K banded mats.

    w: (Cout, Cin, K, K) -> band: (K, Cout*OH, Cin*H) with
       band[kw, co*OH+oh, ci*H+r] = w[co, ci, r-oh, kw] if 0 <= r-oh < K else 0
    so  conv(x)[co, oh, ow] = sum_kw (band[kw] @ x2d[:, kw:kw+OW])[co*OH+oh, ow]
    with x2d = x reshaped to (Cin*H, W).
    """
    cout, cin, k, _ = w.shape
    oh = H - k + 1
    d = jnp.arange(H)[None, :] - jnp.arange(oh)[:, None]          # (OH, H) = r-oh
    valid = (d >= 0) & (d < k)
    taps = w[:, :, jnp.clip(d, 0, k - 1), :]                      # (Cout,Cin,OH,H,K)
    taps = taps * valid[None, None, :, :, None].astype(w.dtype)
    return jnp.transpose(taps, (4, 0, 2, 1, 3)).reshape(k, cout * oh, cin * H)


def _pool_selectors(rows, cols):
    """Exact 0/1 matrices that pick even rows / even cols via matmul."""
    rp, cp = rows // 2, cols // 2
    rsel = jnp.zeros((rp, rows - 1), jnp.float32)
    rsel = rsel.at[jnp.arange(rp), 2 * jnp.arange(rp)].set(1.0)
    csel = jnp.zeros((cols - 1, cp), jnp.float32)
    csel = csel.at[2 * jnp.arange(cp), jnp.arange(cp)].set(1.0)
    return rsel, csel


# ----------------------------------------------------------------------------
# Parameter init (deterministic, PyTorch-default-style uniform(+/-1/sqrt(fan_in)))
# ----------------------------------------------------------------------------
def init_params(key):
    def u(key, shape, fan_in):
        bound = 1.0 / jnp.sqrt(jnp.float32(fan_in))
        return jax.random.uniform(key, shape, jnp.float32, -bound, bound)

    ks = jax.random.split(key, 10)
    return {
        "conv1_w": u(ks[0], (6, 1, 5, 5), 1 * 5 * 5),
        "conv1_b": u(ks[1], (6,), 1 * 5 * 5),
        "conv2_w": u(ks[2], (16, 6, 5, 5), 6 * 5 * 5),
        "conv2_b": u(ks[3], (16,), 6 * 5 * 5),
        "fc1_w": u(ks[4], (576, 32), 576),   # stored (in, out)
        "fc1_b": u(ks[5], (32,), 576),
        "fc2_w": u(ks[6], (32, 16), 32),
        "fc2_b": u(ks[7], (16,), 32),
        "fc3_w": u(ks[8], (16, 2), 16),
        "fc3_b": u(ks[9], (2,), 16),
    }


# ----------------------------------------------------------------------------
# Forward pass (mirrors Net.forward); input is NCHW (N, 1, 36, 36)
# ----------------------------------------------------------------------------
K = 5
H1, W1 = 36, 36          # spatial size implied by the 16*6*6 flatten
H2, W2 = 16, 16


@jax.jit
def net_forward(x_nchw, params):
    n = x_nchw.shape[0]
    x = x_nchw.astype(jnp.float32)

    # ---- stage 1: conv1 (1->6, 5x5) + bias + ReLU + 2x2 pool -------------
    band1 = _band_matrices(params["conv1_w"], H1)                  # (5, 192, 36)
    bias1 = jnp.repeat(params["conv1_b"], H1 - K + 1)[:, None]     # (192, 1)
    rsel1, csel1 = _pool_selectors(6 * (H1 - K + 1), W1 - K + 1)
    x = x.reshape(n, 1 * H1, W1)                                   # (N, Cin*H, W)
    x = conv_pool_stage(x, band1, bias1, rsel1, csel1, OW=W1 - K + 1)  # (N,96,16)

    # ---- stage 2: conv2 (6->16, 5x5) + bias + ReLU + 2x2 pool ------------
    band2 = _band_matrices(params["conv2_w"], H2)                  # (5, 192, 96)
    bias2 = jnp.repeat(params["conv2_b"], H2 - K + 1)[:, None]     # (192, 1)
    rsel2, csel2 = _pool_selectors(16 * (H2 - K + 1), W2 - K + 1)
    x = conv_pool_stage(x, band2, bias2, rsel2, csel2, OW=W2 - K + 1)  # (N,96,6)

    # ---- flatten (already in torch (C, H, W) order) + fused FC head ------
    x = x.reshape(n, 16 * 6 * 6)
    return fc_head(x, params["fc1_w"], params["fc1_b"],
                   params["fc2_w"], params["fc2_b"],
                   params["fc3_w"], params["fc3_b"])               # (N, 2)


# ----------------------------------------------------------------------------
# Pure-JAX reference (for a correctness check against the Pallas path)
# ----------------------------------------------------------------------------
def reference_forward(x_nchw, params):
    x = x_nchw.astype(jnp.float32)

    def conv(x, w, b):
        dn = jax.lax.conv_dimension_numbers(x.shape, w.shape,
                                            ("NCHW", "OIHW", "NCHW"))
        y = jax.lax.conv_general_dilated(x, w, (1, 1), "VALID",
                                         dimension_numbers=dn)
        return jax.nn.relu(y + b[None, :, None, None])

    def pool(x):
        return jax.lax.reduce_window(x, -jnp.inf, jax.lax.max,
                                     (1, 1, 2, 2), (1, 1, 2, 2), "VALID")

    x = pool(conv(x, params["conv1_w"], params["conv1_b"]))
    x = pool(conv(x, params["conv2_w"], params["conv2_b"]))
    x = x.reshape(x.shape[0], -1)
    x = jax.nn.relu(x @ params["fc1_w"] + params["fc1_b"])
    x = jax.nn.relu(x @ params["fc2_w"] + params["fc2_b"])
    return x @ params["fc3_w"] + params["fc3_b"]


if __name__ == "__main__":
    key = jax.random.PRNGKey(0)
    k_x, k_p = jax.random.split(key)
    # PyTorch-style NCHW input; 36x36 is implied by the 16*6*6 flatten.
    x = jax.random.normal(k_x, (2, 1, 36, 36), dtype=jnp.float32)
    params = init_params(k_p)

    out = jax.block_until_ready(net_forward(x, params))
    assert out.shape == (2, 2), out.shape
    assert bool(jnp.all(jnp.isfinite(out)))

    ref = jax.block_until_ready(reference_forward(x, params))
    assert bool(jnp.allclose(out, ref, rtol=1e-3, atol=1e-3)), (out, ref)

    print("KERNEL_OK")
</pallas_src>

<mosaic_0001>
module attributes {stable_mosaic.version = 11 : i64} {
  func.func @conv_pool_kernel(%arg0: i32, %arg1: memref<1x36x36xf32, #tpu.memory_space<vmem>>, %arg2: memref<5x192x36xf32, #tpu.memory_space<vmem>>, %arg3: memref<192x1xf32, #tpu.memory_space<vmem>>, %arg4: memref<96x191xf32, #tpu.memory_space<vmem>>, %arg5: memref<31x16xf32, #tpu.memory_space<vmem>>, %arg6: memref<1x96x16xf32, #tpu.memory_space<vmem>>) attributes {dimension_semantics = [#tpu.dimension_semantics<parallel>], iteration_bounds = array<i64: 2>, scalar_prefetch = 0 : i64, scratch_operands = 0 : i64, tpu.core_type = #tpu.core_type<tc>, window_params = [{transform_indices = @transform_0, window_bounds = array<i64: 1, 36, 36>}, {pipeline_mode = #tpu.pipeline_mode<synchronous>, transform_indices = @transform_1, window_bounds = array<i64: 5, 192, 36>}, {pipeline_mode = #tpu.pipeline_mode<synchronous>, transform_indices = @transform_2, window_bounds = array<i64: 192, 1>}, {pipeline_mode = #tpu.pipeline_mode<synchronous>, transform_indices = @transform_3, window_bounds = array<i64: 96, 191>}, {pipeline_mode = #tpu.pipeline_mode<synchronous>, transform_indices = @transform_4, window_bounds = array<i64: 31, 16>}, {transform_indices = @transform_5, window_bounds = array<i64: 1, 96, 16>}]} {
    %c0 = arith.constant 0 : index
    %c0_0 = arith.constant 0 : index
    %c0_1 = arith.constant 0 : index
    %0 = vector.load %arg1[%c0, %c0_0, %c0_1] : memref<1x36x36xf32, #tpu.memory_space<vmem>>, vector<1x36x36xf32>
    %1 = vector.shape_cast %0 : vector<1x36x36xf32> to vector<36x36xf32>
    %c0_2 = arith.constant 0 : index
    %c0_3 = arith.constant 0 : index
    %c0_4 = arith.constant 0 : index
    %2 = vector.load %arg2[%c0_2, %c0_3, %c0_4] : memref<5x192x36xf32, #tpu.memory_space<vmem>>, vector<1x192x36xf32>
    %3 = vector.shape_cast %2 : vector<1x192x36xf32> to vector<192x36xf32>
    %4 = vector.extract_strided_slice %1 {offsets = [0, 0], sizes = [36, 32], strides = [1, 1]} : vector<36x36xf32> to vector<36x32xf32>
    %cst = arith.constant dense<0.000000e+00> : vector<192x32xf32>
    %5 = tpu.matmul %3, %4, %cst {dimension_numbers = #tpu.dot_dimension_numbers<[1], [0], [0], [1], [0, 0, 1, 1], [], []>} : vector<192x36xf32>, vector<36x32xf32>, vector<192x32xf32> -> vector<192x32xf32>
    %c1 = arith.constant 1 : index
    %c0_5 = arith.constant 0 : index
    %c0_6 = arith.constant 0 : index
    %6 = vector.load %arg2[%c1, %c0_5, %c0_6] : memref<5x192x36xf32, #tpu.memory_space<vmem>>, vector<1x192x36xf32>
    %7 = vector.shape_cast %6 : vector<1x192x36xf32> to vector<192x36xf32>
    %8 = vector.extract_strided_slice %1 {offsets = [0, 1], sizes = [36, 32], strides = [1, 1]} : vector<36x36xf32> to vector<36x32xf32>
    %cst_7 = arith.constant dense<0.000000e+00> : vector<192x32xf32>
    %9 = tpu.matmul %7, %8, %cst_7 {dimension_numbers = #tpu.dot_dimension_numbers<[1], [0], [0], [1], [0, 0, 1, 1], [], []>} : vector<192x36xf32>, vector<36x32xf32>, vector<192x32xf32> -> vector<192x32xf32>
    %10 = arith.addf %5, %9 : vector<192x32xf32>
    %c2 = arith.constant 2 : index
    %c0_8 = arith.constant 0 : index
    %c0_9 = arith.constant 0 : index
    %11 = vector.load %arg2[%c2, %c0_8, %c0_9] : memref<5x192x36xf32, #tpu.memory_space<vmem>>, vector<1x192x36xf32>
    %12 = vector.shape_cast %11 : vector<1x192x36xf32> to vector<192x36xf32>
    %13 = vector.extract_strided_slice %1 {offsets = [0, 2], sizes = [36, 32], strides = [1, 1]} : vector<36x36xf32> to vector<36x32xf32>
    %cst_10 = arith.constant dense<0.000000e+00> : vector<192x32xf32>
    %14 = tpu.matmul %12, %13, %cst_10 {dimension_numbers = #tpu.dot_dimension_numbers<[1], [0], [0], [1], [0, 0, 1, 1], [], []>} : vector<192x36xf32>, vector<36x32xf32>, vector<192x32xf32> -> vector<192x32xf32>
    %15 = arith.addf %10, %14 : vector<192x32xf32>
    %c3 = arith.constant 3 : index
    %c0_11 = arith.constant 0 : index
    %c0_12 = arith.constant 0 : index
    %16 = vector.load %arg2[%c3, %c0_11, %c0_12] : memref<5x192x36xf32, #tpu.memory_space<vmem>>, vector<1x192x36xf32>
    %17 = vector.shape_cast %16 : vector<1x192x36xf32> to vector<192x36xf32>
    %18 = vector.extract_strided_slice %1 {offsets = [0, 3], sizes = [36, 32], strides = [1, 1]} : vector<36x36xf32> to vector<36x32xf32>
    %cst_13 = arith.constant dense<0.000000e+00> : vector<192x32xf32>
    %19 = tpu.matmul %17, %18, %cst_13 {dimension_numbers = #tpu.dot_dimension_numbers<[1], [0], [0], [1], [0, 0, 1, 1], [], []>} : vector<192x36xf32>, vector<36x32xf32>, vector<192x32xf32> -> vector<192x32xf32>
    %20 = arith.addf %15, %19 : vector<192x32xf32>
    %c4 = arith.constant 4 : index
    %c0_14 = arith.constant 0 : index
    %c0_15 = arith.constant 0 : index
    %21 = vector.load %arg2[%c4, %c0_14, %c0_15] : memref<5x192x36xf32, #tpu.memory_space<vmem>>, vector<1x192x36xf32>
    %22 = vector.shape_cast %21 : vector<1x192x36xf32> to vector<192x36xf32>
    %23 = vector.extract_strided_slice %1 {offsets = [0, 4], sizes = [36, 32], strides = [1, 1]} : vector<36x36xf32> to vector<36x32xf32>
    %cst_16 = arith.constant dense<0.000000e+00> : vector<192x32xf32>
    %24 = tpu.matmul %22, %23, %cst_16 {dimension_numbers = #tpu.dot_dimension_numbers<[1], [0], [0], [1], [0, 0, 1, 1], [], []>} : vector<192x36xf32>, vector<36x32xf32>, vector<192x32xf32> -> vector<192x32xf32>
    %25 = arith.addf %20, %24 : vector<192x32xf32>
    %c0_17 = arith.constant 0 : index
    %c0_18 = arith.constant 0 : index
    %26 = vector.load %arg3[%c0_17, %c0_18] : memref<192x1xf32, #tpu.memory_space<vmem>>, vector<192x1xf32>
    %27 = vector.broadcast %26 : vector<192x1xf32> to vector<192x32xf32>
    %28 = arith.addf %25, %27 : vector<192x32xf32>
    %cst_19 = arith.constant 0.000000e+00 : f32
    %29 = vector.broadcast %cst_19 : f32 to vector<192x32xf32>
    %30 = arith.maximumf %28, %29 : vector<192x32xf32>
    %31 = vector.extract_strided_slice %30 {offsets = [0, 0], sizes = [191, 32], strides = [1, 1]} : vector<192x32xf32> to vector<191x32xf32>
    %32 = vector.extract_strided_slice %30 {offsets = [1, 0], sizes = [191, 32], strides = [1, 1]} : vector<192x32xf32> to vector<191x32xf32>
    %33 = arith.maximumf %31, %32 : vector<191x32xf32>
    %34 = vector.extract_strided_slice %33 {offsets = [0, 0], sizes = [191, 31], strides = [1, 1]} : vector<191x32xf32> to vector<191x31xf32>
    %35 = vector.extract_strided_slice %33 {offsets = [0, 1], sizes = [191, 31], strides = [1, 1]} : vector<191x32xf32> to vector<191x31xf32>
    %36 = arith.maximumf %34, %35 : vector<191x31xf32>
    %c0_20 = arith.constant 0 : index
    %c0_21 = arith.constant 0 : index
    %37 = vector.load %arg4[%c0_20, %c0_21] : memref<96x191xf32, #tpu.memory_space<vmem>>, vector<96x191xf32>
    %cst_22 = arith.constant dense<0.000000e+00> : vector<96x31xf32>
    %38 = tpu.matmul %37, %36, %cst_22 {dimension_numbers = #tpu.dot_dimension_numbers<[1], [0], [0], [1], [0, 0, 1, 1], [], []>} : vector<96x191xf32>, vector<191x31xf32>, vector<96x31xf32> -> vector<96x31xf32>
    %c0_23 = arith.constant 0 : index
    %c0_24 = arith.constant 0 : index
    %39 = vector.load %arg5[%c0_23, %c0_24] : memref<31x16xf32, #tpu.memory_space<vmem>>, vector<31x16xf32>
    %cst_25 = arith.constant dense<0.000000e+00> : vector<96x16xf32>
    %40 = tpu.matmul %38, %39, %cst_25 {dimension_numbers = #tpu.dot_dimension_numbers<[1], [0], [0], [1], [0, 0, 1, 1], [], []>} : vector<96x31xf32>, vector<31x16xf32>, vector<96x16xf32> -> vector<96x16xf32>
    %c0_26 = arith.constant 0 : index
    %c0_27 = arith.constant 0 : index
    %c0_28 = arith.constant 0 : index
    %41 = vector.load %arg6[%c0_26, %c0_27, %c0_28] : memref<1x96x16xf32, #tpu.memory_space<vmem>>, vector<1x96x16xf32>
    %42 = vector.shape_cast %41 : vector<1x96x16xf32> to vector<96x16xf32>
    %43 = vector.shape_cast %40 : vector<96x16xf32> to vector<1x96x16xf32>
    tpu.vector_store %arg6[%c0_26, %c0_27, %c0_28], %43 {strides = array<i32>} : memref<1x96x16xf32, #tpu.memory_space<vmem>>, vector<1x96x16xf32>,
    return
  }
  func.func @transform_0(%arg0: i32) -> (i32, i32, i32) {
    %c0_i32 = arith.constant 0 : i32
    %c0_i32_0 = arith.constant 0 : i32
    %c0_i32_1 = arith.constant 0 : i32
    return %arg0, %c0_i32, %c0_i32_0 : i32, i32, i32
  }
  func.func @transform_1(%arg0: i32) -> (i32, i32, i32) {
    %c0_i32 = arith.constant 0 : i32
    %c0_i32_0 = arith.constant 0 : i32
    %c0_i32_1 = arith.constant 0 : i32
    %c0_i32_2 = arith.constant 0 : i32
    return %c0_i32, %c0_i32_0, %c0_i32_1 : i32, i32, i32
  }
  func.func @transform_2(%arg0: i32) -> (i32, i32) {
    %c0_i32 = arith.constant 0 : i32
    %c0_i32_0 = arith.constant 0 : i32
    %c0_i32_1 = arith.constant 0 : i32
    return %c0_i32, %c0_i32_0 : i32, i32
  }
  func.func @transform_3(%arg0: i32) -> (i32, i32) {
    %c0_i32 = arith.constant 0 : i32
    %c0_i32_0 = arith.constant 0 : i32
    %c0_i32_1 = arith.constant 0 : i32
    return %c0_i32, %c0_i32_0 : i32, i32
  }
  func.func @transform_4(%arg0: i32) -> (i32, i32) {
    %c0_i32 = arith.constant 0 : i32
    %c0_i32_0 = arith.constant 0 : i32
    %c0_i32_1 = arith.constant 0 : i32
    return %c0_i32, %c0_i32_0 : i32, i32
  }
  func.func @transform_5(%arg0: i32) -> (i32, i32, i32) {
    %c0_i32 = arith.constant 0 : i32
    %c0_i32_0 = arith.constant 0 : i32
    %c0_i32_1 = arith.constant 0 : i32
    return %arg0, %c0_i32, %c0_i32_0 : i32, i32, i32
  }
}

module attributes {stable_mosaic.version = 11 : i64} {
  func.func @conv_pool_kernel(%arg0: i32, %arg1: memref<1x96x16xf32, #tpu.memory_space<vmem>>, %arg2: memref<5x192x96xf32, #tpu.memory_space<vmem>>, %arg3: memref<192x1xf32, #tpu.memory_space<vmem>>, %arg4: memref<96x191xf32, #tpu.memory_space<vmem>>, %arg5: memref<11x6xf32, #tpu.memory_space<vmem>>, %arg6: memref<1x96x6xf32, #tpu.memory_space<vmem>>) attributes {dimension_semantics = [#tpu.dimension_semantics<parallel>], iteration_bounds = array<i64: 2>, scalar_prefetch = 0 : i64, scratch_operands = 0 : i64, tpu.core_type = #tpu.core_type<tc>, window_params = [{transform_indices = @transform_0, window_bounds = array<i64: 1, 96, 16>}, {pipeline_mode = #tpu.pipeline_mode<synchronous>, transform_indices = @transform_1, window_bounds = array<i64: 5, 192, 96>}, {pipeline_mode = #tpu.pipeline_mode<synchronous>, transform_indices = @transform_2, window_bounds = array<i64: 192, 1>}, {pipeline_mode = #tpu.pipeline_mode<synchronous>, transform_indices = @transform_3, window_bounds = array<i64: 96, 191>}, {pipeline_mode = #tpu.pipeline_mode<synchronous>, transform_indices = @transform_4, window_bounds = array<i64: 11, 6>}, {transform_indices = @transform_5, window_bounds = array<i64: 1, 96, 6>}]} {
    %c0 = arith.constant 0 : index
    %c0_0 = arith.constant 0 : index
    %c0_1 = arith.constant 0 : index
    %0 = vector.load %arg1[%c0, %c0_0, %c0_1] : memref<1x96x16xf32, #tpu.memory_space<vmem>>, vector<1x96x16xf32>
    %1 = vector.shape_cast %0 : vector<1x96x16xf32> to vector<96x16xf32>
    %c0_2 = arith.constant 0 : index
    %c0_3 = arith.constant 0 : index
    %c0_4 = arith.constant 0 : index
    %2 = vector.load %arg2[%c0_2, %c0_3, %c0_4] : memref<5x192x96xf32, #tpu.memory_space<vmem>>, vector<1x192x96xf32>
    %3 = vector.shape_cast %2 : vector<1x192x96xf32> to vector<192x96xf32>
    %4 = vector.extract_strided_slice %1 {offsets = [0, 0], sizes = [96, 12], strides = [1, 1]} : vector<96x16xf32> to vector<96x12xf32>
    %cst = arith.constant dense<0.000000e+00> : vector<192x12xf32>
    %5 = tpu.matmul %3, %4, %cst {dimension_numbers = #tpu.dot_dimension_numbers<[1], [0], [0], [1], [0, 0, 1, 1], [], []>} : vector<192x96xf32>, vector<96x12xf32>, vector<192x12xf32> -> vector<192x12xf32>
    %c1 = arith.constant 1 : index
    %c0_5 = arith.constant 0 : index
    %c0_6 = arith.constant 0 : index
    %6 = vector.load %arg2[%c1, %c0_5, %c0_6] : memref<5x192x96xf32, #tpu.memory_space<vmem>>, vector<1x192x96xf32>
    %7 = vector.shape_cast %6 : vector<1x192x96xf32> to vector<192x96xf32>
    %8 = vector.extract_strided_slice %1 {offsets = [0, 1], sizes = [96, 12], strides = [1, 1]} : vector<96x16xf32> to vector<96x12xf32>
    %cst_7 = arith.constant dense<0.000000e+00> : vector<192x12xf32>
    %9 = tpu.matmul %7, %8, %cst_7 {dimension_numbers = #tpu.dot_dimension_numbers<[1], [0], [0], [1], [0, 0, 1, 1], [], []>} : vector<192x96xf32>, vector<96x12xf32>, vector<192x12xf32> -> vector<192x12xf32>
    %10 = arith.addf %5, %9 : vector<192x12xf32>
    %c2 = arith.constant 2 : index
    %c0_8 = arith.constant 0 : index
    %c0_9 = arith.constant 0 : index
    %11 = vector.load %arg2[%c2, %c0_8, %c0_9] : memref<5x192x96xf32, #tpu.memory_space<vmem>>, vector<1x192x96xf32>
    %12 = vector.shape_cast %11 : vector<1x192x96xf32> to vector<192x96xf32>
    %13 = vector.extract_strided_slice %1 {offsets = [0, 2], sizes = [96, 12], strides = [1, 1]} : vector<96x16xf32> to vector<96x12xf32>
    %cst_10 = arith.constant dense<0.000000e+00> : vector<192x12xf32>
    %14 = tpu.matmul %12, %13, %cst_10 {dimension_numbers = #tpu.dot_dimension_numbers<[1], [0], [0], [1], [0, 0, 1, 1], [], []>} : vector<192x96xf32>, vector<96x12xf32>, vector<192x12xf32> -> vector<192x12xf32>
    %15 = arith.addf %10, %14 : vector<192x12xf32>
    %c3 = arith.constant 3 : index
    %c0_11 = arith.constant 0 : index
    %c0_12 = arith.constant 0 : index
    %16 = vector.load %arg2[%c3, %c0_11, %c0_12] : memref<5x192x96xf32, #tpu.memory_space<vmem>>, vector<1x192x96xf32>
    %17 = vector.shape_cast %16 : vector<1x192x96xf32> to vector<192x96xf32>
    %18 = vector.extract_strided_slice %1 {offsets = [0, 3], sizes = [96, 12], strides = [1, 1]} : vector<96x16xf32> to vector<96x12xf32>
    %cst_13 = arith.constant dense<0.000000e+00> : vector<192x12xf32>
    %19 = tpu.matmul %17, %18, %cst_13 {dimension_numbers = #tpu.dot_dimension_numbers<[1], [0], [0], [1], [0, 0, 1, 1], [], []>} : vector<192x96xf32>, vector<96x12xf32>, vector<192x12xf32> -> vector<192x12xf32>
    %20 = arith.addf %15, %19 : vector<192x12xf32>
    %c4 = arith.constant 4 : index
    %c0_14 = arith.constant 0 : index
    %c0_15 = arith.constant 0 : index
    %21 = vector.load %arg2[%c4, %c0_14, %c0_15] : memref<5x192x96xf32, #tpu.memory_space<vmem>>, vector<1x192x96xf32>
    %22 = vector.shape_cast %21 : vector<1x192x96xf32> to vector<192x96xf32>
    %23 = vector.extract_strided_slice %1 {offsets = [0, 4], sizes = [96, 12], strides = [1, 1]} : vector<96x16xf32> to vector<96x12xf32>
    %cst_16 = arith.constant dense<0.000000e+00> : vector<192x12xf32>
    %24 = tpu.matmul %22, %23, %cst_16 {dimension_numbers = #tpu.dot_dimension_numbers<[1], [0], [0], [1], [0, 0, 1, 1], [], []>} : vector<192x96xf32>, vector<96x12xf32>, vector<192x12xf32> -> vector<192x12xf32>
    %25 = arith.addf %20, %24 : vector<192x12xf32>
    %c0_17 = arith.constant 0 : index
    %c0_18 = arith.constant 0 : index
    %26 = vector.load %arg3[%c0_17, %c0_18] : memref<192x1xf32, #tpu.memory_space<vmem>>, vector<192x1xf32>
    %27 = vector.broadcast %26 : vector<192x1xf32> to vector<192x12xf32>
    %28 = arith.addf %25, %27 : vector<192x12xf32>
    %cst_19 = arith.constant 0.000000e+00 : f32
    %29 = vector.broadcast %cst_19 : f32 to vector<192x12xf32>
    %30 = arith.maximumf %28, %29 : vector<192x12xf32>
    %31 = vector.extract_strided_slice %30 {offsets = [0, 0], sizes = [191, 12], strides = [1, 1]} : vector<192x12xf32> to vector<191x12xf32>
    %32 = vector.extract_strided_slice %30 {offsets = [1, 0], sizes = [191, 12], strides = [1, 1]} : vector<192x12xf32> to vector<191x12xf32>
    %33 = arith.maximumf %31, %32 : vector<191x12xf32>
    %34 = vector.extract_strided_slice %33 {offsets = [0, 0], sizes = [191, 11], strides = [1, 1]} : vector<191x12xf32> to vector<191x11xf32>
    %35 = vector.extract_strided_slice %33 {offsets = [0, 1], sizes = [191, 11], strides = [1, 1]} : vector<191x12xf32> to vector<191x11xf32>
    %36 = arith.maximumf %34, %35 : vector<191x11xf32>
    %c0_20 = arith.constant 0 : index
    %c0_21 = arith.constant 0 : index
    %37 = vector.load %arg4[%c0_20, %c0_21] : memref<96x191xf32, #tpu.memory_space<vmem>>, vector<96x191xf32>
    %cst_22 = arith.constant dense<0.000000e+00> : vector<96x11xf32>
    %38 = tpu.matmul %37, %36, %cst_22 {dimension_numbers = #tpu.dot_dimension_numbers<[1], [0], [0], [1], [0, 0, 1, 1], [], []>} : vector<96x191xf32>, vector<191x11xf32>, vector<96x11xf32> -> vector<96x11xf32>
    %c0_23 = arith.constant 0 : index
    %c0_24 = arith.constant 0 : index
    %39 = vector.load %arg5[%c0_23, %c0_24] : memref<11x6xf32, #tpu.memory_space<vmem>>, vector<11x6xf32>
    %cst_25 = arith.constant dense<0.000000e+00> : vector<96x6xf32>
    %40 = tpu.matmul %38, %39, %cst_25 {dimension_numbers = #tpu.dot_dimension_numbers<[1], [0], [0], [1], [0, 0, 1, 1], [], []>} : vector<96x11xf32>, vector<11x6xf32>, vector<96x6xf32> -> vector<96x6xf32>
    %c0_26 = arith.constant 0 : index
    %c0_27 = arith.constant 0 : index
    %c0_28 = arith.constant 0 : index
    %41 = vector.load %arg6[%c0_26, %c0_27, %c0_28] : memref<1x96x6xf32, #tpu.memory_space<vmem>>, vector<1x96x6xf32>
    %42 = vector.shape_cast %41 : vector<1x96x6xf32> to vector<96x6xf32>
    %43 = vector.shape_cast %40 : vector<96x6xf32> to vector<1x96x6xf32>
    tpu.vector_store %arg6[%c0_26, %c0_27, %c0_28], %43 {strides = array<i32>} : memref<1x96x6xf32, #tpu.memory_space<vmem>>, vector<1x96x6xf32>,
    return
  }
  func.func @transform_0(%arg0: i32) -> (i32, i32, i32) {
    %c0_i32 = arith.constant 0 : i32
    %c0_i32_0 = arith.constant 0 : i32
    %c0_i32_1 = arith.constant 0 : i32
    return %arg0, %c0_i32, %c0_i32_0 : i32, i32, i32
  }
  func.func @transform_1(%arg0: i32) -> (i32, i32, i32) {
    %c0_i32 = arith.constant 0 : i32
    %c0_i32_0 = arith.constant 0 : i32
    %c0_i32_1 = arith.constant 0 : i32
    %c0_i32_2 = arith.constant 0 : i32
    return %c0_i32, %c0_i32_0, %c0_i32_1 : i32, i32, i32
  }
  func.func @transform_2(%arg0: i32) -> (i32, i32) {
    %c0_i32 = arith.constant 0 : i32
    %c0_i32_0 = arith.constant 0 : i32
    %c0_i32_1 = arith.constant 0 : i32
    return %c0_i32, %c0_i32_0 : i32, i32
  }
  func.func @transform_3(%arg0: i32) -> (i32, i32) {
    %c0_i32 = arith.constant 0 : i32
    %c0_i32_0 = arith.constant 0 : i32
    %c0_i32_1 = arith.constant 0 : i32
    return %c0_i32, %c0_i32_0 : i32, i32
  }
  func.func @transform_4(%arg0: i32) -> (i32, i32) {
    %c0_i32 = arith.constant 0 : i32
    %c0_i32_0 = arith.constant 0 : i32
    %c0_i32_1 = arith.constant 0 : i32
    return %c0_i32, %c0_i32_0 : i32, i32
  }
  func.func @transform_5(%arg0: i32) -> (i32, i32, i32) {
    %c0_i32 = arith.constant 0 : i32
    %c0_i32_0 = arith.constant 0 : i32
    %c0_i32_1 = arith.constant 0 : i32
    return %arg0, %c0_i32, %c0_i32_0 : i32, i32, i32
  }
}

module attributes {stable_mosaic.version = 11 : i64} {
  func.func @fc_kernel(%arg0: i32, %arg1: memref<2x576xf32, #tpu.memory_space<vmem>>, %arg2: memref<576x32xf32, #tpu.memory_space<vmem>>, %arg3: memref<1x32xf32, #tpu.memory_space<vmem>>, %arg4: memref<32x16xf32, #tpu.memory_space<vmem>>, %arg5: memref<1x16xf32, #tpu.memory_space<vmem>>, %arg6: memref<16x2xf32, #tpu.memory_space<vmem>>, %arg7: memref<1x2xf32, #tpu.memory_space<vmem>>, %arg8: memref<2x2xf32, #tpu.memory_space<vmem>>) attributes {dimension_semantics = [#tpu.dimension_semantics<arbitrary>], iteration_bounds = array<i64: 1>, scalar_prefetch = 0 : i64, scratch_operands = 0 : i64, tpu.core_type = #tpu.core_type<tc>, window_params = [{pipeline_mode = #tpu.pipeline_mode<synchronous>, transform_indices = @transform_0, window_bounds = array<i64: 2, 576>}, {pipeline_mode = #tpu.pipeline_mode<synchronous>, transform_indices = @transform_1, window_bounds = array<i64: 576, 32>}, {pipeline_mode = #tpu.pipeline_mode<synchronous>, transform_indices = @transform_2, window_bounds = array<i64: 1, 32>}, {pipeline_mode = #tpu.pipeline_mode<synchronous>, transform_indices = @transform_3, window_bounds = array<i64: 32, 16>}, {pipeline_mode = #tpu.pipeline_mode<synchronous>, transform_indices = @transform_4, window_bounds = array<i64: 1, 16>}, {pipeline_mode = #tpu.pipeline_mode<synchronous>, transform_indices = @transform_5, window_bounds = array<i64: 16, 2>}, {pipeline_mode = #tpu.pipeline_mode<synchronous>, transform_indices = @transform_6, window_bounds = array<i64: 1, 2>}, {pipeline_mode = #tpu.pipeline_mode<synchronous>, transform_indices = @transform_7, window_bounds = array<i64: 2, 2>}]} {
    %c0 = arith.constant 0 : index
    %c0_0 = arith.constant 0 : index
    %0 = vector.load %arg1[%c0, %c0_0] : memref<2x576xf32, #tpu.memory_space<vmem>>, vector<2x576xf32>
    %c0_1 = arith.constant 0 : index
    %c0_2 = arith.constant 0 : index
    %1 = vector.load %arg2[%c0_1, %c0_2] : memref<576x32xf32, #tpu.memory_space<vmem>>, vector<576x32xf32>
    %cst = arith.constant dense<0.000000e+00> : vector<2x32xf32>
    %2 = tpu.matmul %0, %1, %cst {dimension_numbers = #tpu.dot_dimension_numbers<[1], [0], [0], [1], [0, 0, 1, 1], [], []>} : vector<2x576xf32>, vector<576x32xf32>, vector<2x32xf32> -> vector<2x32xf32>
    %c0_3 = arith.constant 0 : index
    %c0_4 = arith.constant 0 : index
    %3 = vector.load %arg3[%c0_3, %c0_4] : memref<1x32xf32, #tpu.memory_space<vmem>>, vector<1x32xf32>
    %4 = vector.broadcast %3 : vector<1x32xf32> to vector<2x32xf32>
    %5 = arith.addf %2, %4 : vector<2x32xf32>
    %cst_5 = arith.constant 0.000000e+00 : f32
    %6 = vector.broadcast %cst_5 : f32 to vector<2x32xf32>
    %7 = arith.maximumf %5, %6 : vector<2x32xf32>
    %c0_6 = arith.constant 0 : index
    %c0_7 = arith.constant 0 : index
    %8 = vector.load %arg4[%c0_6, %c0_7] : memref<32x16xf32, #tpu.memory_space<vmem>>, vector<32x16xf32>
    %cst_8 = arith.constant dense<0.000000e+00> : vector<2x16xf32>
    %9 = tpu.matmul %7, %8, %cst_8 {dimension_numbers = #tpu.dot_dimension_numbers<[1], [0], [0], [1], [0, 0, 1, 1], [], []>} : vector<2x32xf32>, vector<32x16xf32>, vector<2x16xf32> -> vector<2x16xf32>
    %c0_9 = arith.constant 0 : index
    %c0_10 = arith.constant 0 : index
    %10 = vector.load %arg5[%c0_9, %c0_10] : memref<1x16xf32, #tpu.memory_space<vmem>>, vector<1x16xf32>
    %11 = vector.broadcast %10 : vector<1x16xf32> to vector<2x16xf32>
    %12 = arith.addf %9, %11 : vector<2x16xf32>
    %cst_11 = arith.constant 0.000000e+00 : f32
    %13 = vector.broadcast %cst_11 : f32 to vector<2x16xf32>
    %14 = arith.maximumf %12, %13 : vector<2x16xf32>
    %c0_12 = arith.constant 0 : index
    %c0_13 = arith.constant 0 : index
    %15 = vector.load %arg6[%c0_12, %c0_13] : memref<16x2xf32, #tpu.memory_space<vmem>>, vector<16x2xf32>
    %cst_14 = arith.constant dense<0.000000e+00> : vector<2x2xf32>
    %16 = tpu.matmul %14, %15, %cst_14 {dimension_numbers = #tpu.dot_dimension_numbers<[1], [0], [0], [1], [0, 0, 1, 1], [], []>} : vector<2x16xf32>, vector<16x2xf32>, vector<2x2xf32> -> vector<2x2xf32>
    %c0_15 = arith.constant 0 : index
    %c0_16 = arith.constant 0 : index
    %17 = vector.load %arg7[%c0_15, %c0_16] : memref<1x2xf32, #tpu.memory_space<vmem>>, vector<1x2xf32>
    %18 = vector.broadcast %17 : vector<1x2xf32> to vector<2x2xf32>
    %19 = arith.addf %16, %18 : vector<2x2xf32>
    %c0_17 = arith.constant 0 : index
    %c0_18 = arith.constant 0 : index
    %20 = vector.load %arg8[%c0_17, %c0_18] : memref<2x2xf32, #tpu.memory_space<vmem>>, vector<2x2xf32>
    tpu.vector_store %arg8[%c0_17, %c0_18], %19 {strides = array<i32>} : memref<2x2xf32, #tpu.memory_space<vmem>>, vector<2x2xf32>,
    return
  }
  func.func @transform_0(%arg0: i32) -> (i32, i32) {
    %c0_i32 = arith.constant 0 : i32
    %c0_i32_0 = arith.constant 0 : i32
    %c0_i32_1 = arith.constant 0 : i32
    return %c0_i32, %c0_i32_0 : i32, i32
  }
  func.func @transform_1(%arg0: i32) -> (i32, i32) {
    %c0_i32 = arith.constant 0 : i32
    %c0_i32_0 = arith.constant 0 : i32
    %c0_i32_1 = arith.constant 0 : i32
    return %c0_i32, %c0_i32_0 : i32, i32
  }
  func.func @transform_2(%arg0: i32) -> (i32, i32) {
    %c0_i32 = arith.constant 0 : i32
    %c0_i32_0 = arith.constant 0 : i32
    %c0_i32_1 = arith.constant 0 : i32
    return %c0_i32, %c0_i32_0 : i32, i32
  }
  func.func @transform_3(%arg0: i32) -> (i32, i32) {
    %c0_i32 = arith.constant 0 : i32
    %c0_i32_0 = arith.constant 0 : i32
    %c0_i32_1 = arith.constant 0 : i32
    return %c0_i32, %c0_i32_0 : i32, i32
  }
  func.func @transform_4(%arg0: i32) -> (i32, i32) {
    %c0_i32 = arith.constant 0 : i32
    %c0_i32_0 = arith.constant 0 : i32
    %c0_i32_1 = arith.constant 0 : i32
    return %c0_i32, %c0_i32_0 : i32, i32
  }
  func.func @transform_5(%arg0: i32) -> (i32, i32) {
    %c0_i32 = arith.constant 0 : i32
    %c0_i32_0 = arith.constant 0 : i32
    %c0_i32_1 = arith.constant 0 : i32
    return %c0_i32, %c0_i32_0 : i32, i32
  }
  func.func @transform_6(%arg0: i32) -> (i32, i32) {
    %c0_i32 = arith.constant 0 : i32
    %c0_i32_0 = arith.constant 0 : i32
    %c0_i32_1 = arith.constant 0 : i32
    return %c0_i32, %c0_i32_0 : i32, i32
  }
  func.func @transform_7(%arg0: i32) -> (i32, i32) {
    %c0_i32 = arith.constant 0 : i32
    %c0_i32_0 = arith.constant 0 : i32
    %c0_i32_1 = arith.constant 0 : i32
    return %c0_i32, %c0_i32_0 : i32, i32
  }
}

</mosaic_0001>

<llo_original>
// kernel: net_forward.3
$region0: #{net_forward.3}
  #allocation0 [shape = 'u32[]', space=smem, size = 0x4, offset = 0x4, fixed_abs, tag = 'smem constant byte address 0x4 - core index']
  #allocation1 [shape = 'u32[144,128]{1,0:T(1,128)}', space=vmem, size = 0x12000, scoped, tag = 'internal scratch']
  %s0 = inlined_call_operand.vmem [shape: f32[2,36,36], index: 0, kind: input, shape index: {}]
  %s1 = inlined_call_operand.vmem [shape: f32[5,192,36], index: 1, kind: input, shape index: {}]
  %s2 = inlined_call_operand.vmem [shape: f32[192,1], index: 2, kind: input, shape index: {}]
  %s3 = inlined_call_operand.vmem [shape: f32[96,191], index: 3, kind: input, shape index: {}]
  %s4 = inlined_call_operand.vmem [shape: f32[31,16], index: 4, kind: input, shape index: {}]
  %s5 = inlined_call_operand.vmem [shape: f32[2,96,16], index: 5, kind: output, shape index: {}]
  %s6 = sld [smem:[#allocation0]]
  $region53: #{net_forward.3} parent=0
    _
  %s8 = ssub.s32 1, %s6
  %s9 = scalar_select 0, %s8, %s6
  loop: start=0, step=1, limit=4
  $region2: #{net_forward.3} parent=0 // loop_pre_header
    _
  $region3: #{net_forward.3} parent=0 // loop_header
    %s11 = sphi 0, %s15
    %p12 = scmp.ge.s32.totalorder %s11, 4
    %s21 = sphi 0, %s23
    %s24 = sphi 0, %s21
    %s25 = sphi 0, %s24
    %s41 = sphi 0, %s25
    %s45 = sphi 0, %s45
    %s47 = sphi 0, %s45
    %s48 = sphi 0, %s47
    %s62 = sphi 0, %s48
    %s66 = sphi 0, %s66
    %s68 = sphi 0, %s66
    %s69 = sphi 0, %s68
    %s83 = sphi 0, %s69
    %s87 = sphi 0, %s87
    %s89 = sphi 0, %s87
    %s90 = sphi 0, %s89
    %s104 = sphi 0, %s90
    %s108 = sphi 0, %s108
    %s110 = sphi 0, %s108
    %s111 = sphi 0, %s110
    %s125 = sphi 0, %s111
    %s131 = sphi 0, %s133
    %s134 = sphi 0, %s131
    %s135 = sphi 0, %s134
    %s151 = sphi 0, %s135
  $region4: #{net_forward.3} parent=0 // loop_header_branch
    %14 = sbr.rel (%p12) target = $region8
  $region5: #{net_forward.3} parent=0 // loop_body
    %s16 = ssub.s32 %s11, 1
    %s17 = ssub.s32 %s11, 2
    %s18 = sadd.s32 %s11, 1
    %s19 = ssub.s32 %s11, %s18
    %p20 = scmp.eq.s32.totalorder %s19, 0
    %s22 = sadd.s32 %s21, 1
    %s23 = scalar_select %p20, %s21, %s22
    %p26 = pneg %p20
    %p27 = scmp.eq.s32.totalorder %s11, 1
    %p28 = por %p26, %p27
    %p29 = scmp.ne.s32.totalorder %s21, %s24
    %p30 = scmp.eq.s32.totalorder %s11, 0
    %p31 = por %p29, %p30
    %p32 = scmp.ne.s32.totalorder %s21, %s24
    %p33 = scmp.eq.s32.totalorder %s16, 1
    %p34 = por %p32, %p33
    %p35 = scmp.ne.s32.totalorder %s24, %s25
    %p36 = scmp.eq.s32.totalorder %s16, 0
    %p37 = por %p35, %p36
    %p38 = scmp.ne.s32.totalorder %s24, %s25
    %p39 = scmp.eq.s32.totalorder %s17, 1
    %p40 = por %p38, %p39
    %p42 = scmp.ne.s32.totalorder %s25, %s41
    %p43 = scmp.eq.s32.totalorder %s17, 0
    %p44 = por %p42, %p43
    %s46 = sadd.s32 %s45, 1
    %p49 = scmp.eq.s32.totalorder %s11, 1
    %p50 = scmp.ne.s32.totalorder %s45, %s47
    %p51 = scmp.eq.s32.totalorder %s11, 0
    %p52 = por %p50, %p51
    %p53 = scmp.ne.s32.totalorder %s45, %s47
    %p54 = scmp.eq.s32.totalorder %s16, 1
    %p55 = por %p53, %p54
    %p56 = scmp.ne.s32.totalorder %s47, %s48
    %p57 = scmp.eq.s32.totalorder %s16, 0
    %p58 = por %p56, %p57
    %p59 = scmp.ne.s32.totalorder %s47, %s48
    %p60 = scmp.eq.s32.totalorder %s17, 1
    %p61 = por %p59, %p60
    %p63 = scmp.ne.s32.totalorder %s48, %s62
    %p64 = scmp.eq.s32.totalorder %s17, 0
    %p65 = por %p63, %p64
    %s67 = sadd.s32 %s66, 1
    %p70 = scmp.eq.s32.totalorder %s11, 1
    %p71 = scmp.ne.s32.totalorder %s66, %s68
    %p72 = scmp.eq.s32.totalorder %s11, 0
    %p73 = por %p71, %p72
    %p74 = scmp.ne.s32.totalorder %s66, %s68
    %p75 = scmp.eq.s32.totalorder %s16, 1
    %p76 = por %p74, %p75
    %p77 = scmp.ne.s32.totalorder %s68, %s69
    %p78 = scmp.eq.s32.totalorder %s16, 0
    %p79 = por %p77, %p78
    %p80 = scmp.ne.s32.totalorder %s68, %s69
    %p81 = scmp.eq.s32.totalorder %s17, 1
    %p82 = por %p80, %p81
    %p84 = scmp.ne.s32.totalorder %s69, %s83
    %p85 = scmp.eq.s32.totalorder %s17, 0
    %p86 = por %p84, %p85
    %s88 = sadd.s32 %s87, 1
    %p91 = scmp.eq.s32.totalorder %s11, 1
    %p92 = scmp.ne.s32.totalorder %s87, %s89
    %p93 = scmp.eq.s32.totalorder %s11, 0
    %p94 = por %p92, %p93
    %p95 = scmp.ne.s32.totalorder %s87, %s89
    %p96 = scmp.eq.s32.totalorder %s16, 1
    %p97 = por %p95, %p96
    %p98 = scmp.ne.s32.totalorder %s89, %s90
    %p99 = scmp.eq.s32.totalorder %s16, 0
    %p100 = por %p98, %p99
    %p101 = scmp.ne.s32.totalorder %s89, %s90
    %p102 = scmp.eq.s32.totalorder %s17, 1
    %p103 = por %p101, %p102
    %p105 = scmp.ne.s32.totalorder %s90, %s104
    %p106 = scmp.eq.s32.totalorder %s17, 0
    %p107 = por %p105, %p106
    %s109 = sadd.s32 %s108, 1
    %p112 = scmp.eq.s32.totalorder %s11, 1
    %p113 = scmp.ne.s32.totalorder %s108, %s110
    %p114 = scmp.eq.s32.totalorder %s11, 0
    %p115 = por %p113, %p114
    %p116 = scmp.ne.s32.totalorder %s108, %s110
    %p117 = scmp.eq.s32.totalorder %s16, 1
    %p118 = por %p116, %p117
    %p119 = scmp.ne.s32.totalorder %s110, %s111
    %p120 = scmp.eq.s32.totalorder %s16, 0
    %p121 = por %p119, %p120
    %p122 = scmp.ne.s32.totalorder %s110, %s111
    %p123 = scmp.eq.s32.totalorder %s17, 1
    %p124 = por %p122, %p123
    %p126 = scmp.ne.s32.totalorder %s111, %s125
    %p127 = scmp.eq.s32.totalorder %s17, 0
    %p128 = por %p126, %p127
    %s129 = ssub.s32 %s11, %s18
    %p130 = scmp.eq.s32.totalorder %s129, 0
    %s132 = sadd.s32 %s131, 1
    %s133 = scalar_select %p130, %s131, %s132
    %p136 = pneg %p130
    %p137 = scmp.eq.s32.totalorder %s11, 1
    %p138 = por %p136, %p137
    %p139 = scmp.ne.s32.totalorder %s131, %s134
    %p140 = scmp.eq.s32.totalorder %s11, 0
    %p141 = por %p139, %p140
    %p142 = scmp.ne.s32.totalorder %s131, %s134
    %p143 = scmp.eq.s32.totalorder %s16, 1
    %p144 = por %p142, %p143
    %p145 = scmp.ne.s32.totalorder %s134, %s135
    %p146 = scmp.eq.s32.totalorder %s16, 0
    %p147 = por %p145, %p146
    %p148 = scmp.ne.s32.totalorder %s134, %s135
    %p149 = scmp.eq.s32.totalorder %s17, 1
    %p150 = por %p148, %p149
    %p152 = scmp.ne.s32.totalorder %s135, %s151
    %p153 = scmp.eq.s32.totalorder %s17, 0
    %p154 = por %p152, %p153
    %p155 = scmp.le.s32.totalorder 1, %s11
    %p156 = scmp.lt.s32.totalorder %s11, 3
    %p157 = pnand %p155, %p156
    %p158 = pneg %p157
    // Predicated region
    $region9: #{net_forward.3} parent=5 // pred_check
      _
    $region10: #{net_forward.3} parent=5 // pred_check_branch
      %160 = sbr.rel (%p157) target = $region12
    $region11: #{net_forward.3} parent=5 // pred_region
      %s161 = ssub.s32 %s11, 1
      // Predicated region
      $region13: #{net_forward.3} parent=11 // pred_check
        %p162 = pneg %p58
      $region14: #{net_forward.3} parent=11 // pred_check_branch
        %164 = sbr.rel (%p162) target = $region16
      $region15: #{net_forward.3} parent=11 // pred_region
        _
      $region16: #{net_forward.3} parent=11 // pred_fallthru
        _
      // Predicated region
      $region17: #{net_forward.3} parent=11 // pred_check
        %p165 = pneg %p79
      $region18: #{net_forward.3} parent=11 // pred_check_branch
        %167 = sbr.rel (%p165) target = $region20
      $region19: #{net_forward.3} parent=11 // pred_region
        _
      $region20: #{net_forward.3} parent=11 // pred_fallthru
        _
      // Predicated region
      $region21: #{net_forward.3} parent=11 // pred_check
        %p168 = pneg %p100
      $region22: #{net_forward.3} parent=11 // pred_check_branch
        %170 = sbr.rel (%p168) target = $region24
      $region23: #{net_forward.3} parent=11 // pred_region
        _
      $region24: #{net_forward.3} parent=11 // pred_fallthru
        _
      // Predicated region
      $region25: #{net_forward.3} parent=11 // pred_check
        %p171 = pneg %p121
      $region26: #{net_forward.3} parent=11 // pred_check_branch
        %173 = sbr.rel (%p171) target = $region28
      $region27: #{net_forward.3} parent=11 // pred_region
        _
      $region28: #{net_forward.3} parent=11 // pred_fallthru
        _
    $region12: #{net_forward.3} parent=5 // pred_fallthru
      _
    %p174 = scmp.lt.s32.totalorder %s11, 2
    // Predicated region
    $region29: #{net_forward.3} parent=5 // pred_check
      %p175 = pneg %p174
    $region30: #{net_forward.3} parent=5 // pred_check_branch
      %177 = sbr.rel (%p175) target = $region32
    $region31: #{net_forward.3} parent=5 // pred_region
      // Predicated region
      $region33: #{net_forward.3} parent=31 // pred_check
        %p178 = pneg %p31
      $region34: #{net_forward.3} parent=31 // pred_check_branch
        %180 = sbr.rel (%p178) target = $region36
      $region35: #{net_forward.3} parent=31 // pred_region
        %p181 = scmp.lt.s32.totalorder %s11, 1
        %s182 = scalar_select %p181, %s11, 1
        %s183 = smul.addr %s182, 5
        %s184 = smul.addr %s183, 8
        %s185 = scalar_lea.vmem %s0, %s184
      $region36: #{net_forward.3} parent=31 // pred_fallthru
        _
    $region32: #{net_forward.3} parent=5 // pred_fallthru
      _
    %p186 = scmp.le.s32.totalorder 1, %s11
    %p187 = scmp.lt.s32.totalorder %s11, 3
    %p188 = pnand %p186, %p187
    %p189 = pneg %p188
    // Predicated region
    $region37: #{net_forward.3} parent=5 // pred_check
      _
    $region38: #{net_forward.3} parent=5 // pred_check_branch
      %191 = sbr.rel (%p188) target = $region40
    $region39: #{net_forward.3} parent=5 // pred_region
      %s192 = ssub.s32 %s11, 1
      %p193 = scmp.lt.s32.totalorder %s16, 1
      %s194 = scalar_select %p193, %s16, 1
      %s195 = smul.addr %s194, 5
      %s196 = smul.addr %s195, 8
      %s197 = scalar_lea.vmem %s0, %s196
      %p198 = pneg %p37
      %p199 = pneg %p34
      %p200 = pneg %p58
      %p201 = pneg %p55
      %p202 = pneg %p79
      %p203 = pneg %p76
      %p204 = pneg %p100
      %p205 = pneg %p97
      %p206 = pneg %p121
      %p207 = pneg %p118
      %p208 = pneg %p147
      %p209 = pneg %p144
      %p210 = scmp.lt.s32.totalorder %s16, 1
      %s211 = scalar_select %p210, %s16, 1
      %s212 = smul.addr %s211, 12
      %s213 = smul.addr %s212, 8
      %s214 = scalar_lea.vmem %s5, %s213
      %p215 = scmp.lt.s32.totalorder %s16, 1
      %s216 = scalar_select %p215, %s16, 1
      %s217 = smul.addr %s216, 5
      %s218 = smul.addr %s217, 8
      %s219 = scalar_lea.vmem %s0, %s218
      %p220 = scmp.lt.s32.totalorder %s16, 1
      %s221 = scalar_select %p220, %s16, 1
      %s222 = smul.addr %s221, 12
      %s223 = smul.addr %s222, 8
      %s224 = scalar_lea.vmem %s5, %s223
      %v225 = vld [vmem:[%s219] sm:$0xff]
      %v226 = vld [vmem:[%s219 + $0x8] sm:$0xff]
      %v227 = vld [vmem:[%s219 + $0x10] sm:$0xff]
      %v228 = vld [vmem:[%s219 + $0x18] sm:$0xff]
      %v229 = vld [vmem:[%s219 + $0x20] sm:$0xf]
      %v230 = vld [vmem:[%s1] sm:$0xff]
      %v231 = vld [vmem:[%s1 + $0x8] sm:$0xff]
      %v232 = vld [vmem:[%s1 + $0x10] sm:$0xff]
      %v233 = vld [vmem:[%s1 + $0x18] sm:$0xff]
      %v234 = vld [vmem:[%s1 + $0x20] sm:$0xff]
      %v235 = vld [vmem:[%s1 + $0x28] sm:$0xff]
      %v236 = vld [vmem:[%s1 + $0x30] sm:$0xff]
      %v237 = vld [vmem:[%s1 + $0x38] sm:$0xff]
      %v238 = vld [vmem:[%s1 + $0x40] sm:$0xff]
      %v239 = vld [vmem:[%s1 + $0x48] sm:$0xff]
      %v240 = vld [vmem:[%s1 + $0x50] sm:$0xff]
      %v241 = vld [vmem:[%s1 + $0x58] sm:$0xff]
      %v242 = vld [vmem:[%s1 + $0x60] sm:$0xff]
      %v243 = vld [vmem:[%s1 + $0x68] sm:$0xff]
      %v244 = vld [vmem:[%s1 + $0x70] sm:$0xff]
      %v245 = vld [vmem:[%s1 + $0x78] sm:$0xff]
      %v246 = vld [vmem:[%s1 + $0x80] sm:$0xff]
      %v247 = vld [vmem:[%s1 + $0x88] sm:$0xff]
      %v248 = vld [vmem:[%s1 + $0x90] sm:$0xff]
      %v249 = vld [vmem:[%s1 + $0x98] sm:$0xff]
      %v250 = vld [vmem:[%s1 + $0xa0] sm:$0xff]
      %v251 = vld [vmem:[%s1 + $0xa8] sm:$0xff]
      %v252 = vld [vmem:[%s1 + $0xb0] sm:$0xff]
      %v253 = vld [vmem:[%s1 + $0xb8] sm:$0xff]
      %s254 = scalar_lea.vmem %s1, 192
      %v255 = vld [vmem:[%s254] sm:$0xff]
      %v256 = vld [vmem:[%s254 + $0x8] sm:$0xff]
      %v257 = vld [vmem:[%s254 + $0x10] sm:$0xff]
      %v258 = vld [vmem:[%s254 + $0x18] sm:$0xff]
      %v259 = vld [vmem:[%s254 + $0x20] sm:$0xff]
      %v260 = vld [vmem:[%s254 + $0x28] sm:$0xff]
      %v261 = vld [vmem:[%s254 + $0x30] sm:$0xff]
      %v262 = vld [vmem:[%s254 + $0x38] sm:$0xff]
      %v263 = vld [vmem:[%s254 + $0x40] sm:$0xff]
      %v264 = vld [vmem:[%s254 + $0x48] sm:$0xff]
      %v265 = vld [vmem:[%s254 + $0x50] sm:$0xff]
      %v266 = vld [vmem:[%s254 + $0x58] sm:$0xff]
      %v267 = vld [vmem:[%s254 + $0x60] sm:$0xff]
      %v268 = vld [vmem:[%s254 + $0x68] sm:$0xff]
      %v269 = vld [vmem:[%s254 + $0x70] sm:$0xff]
      %v270 = vld [vmem:[%s254 + $0x78] sm:$0xff]
      %v271 = vld [vmem:[%s254 + $0x80] sm:$0xff]
      %v272 = vld [vmem:[%s254 + $0x88] sm:$0xff]
      %v273 = vld [vmem:[%s254 + $0x90] sm:$0xff]
      %v274 = vld [vmem:[%s254 + $0x98] sm:$0xff]
      %v275 = vld [vmem:[%s254 + $0xa0] sm:$0xff]
      %v276 = vld [vmem:[%s254 + $0xa8] sm:$0xff]
      %v277 = vld [vmem:[%s254 + $0xb0] sm:$0xff]
      %v278 = vld [vmem:[%s254 + $0xb8] sm:$0xff]
      %284 = vrot.lane.b32.xlu0 %v225, 127
      %v285 = vpop.permute.xlu0 %284
      %286 = vrot.lane.b32.xlu0 %v226, 127
      %v287 = vpop.permute.xlu0 %286
      %288 = vrot.lane.b32.xlu0 %v227, 127
      %v289 = vpop.permute.xlu0 %288
      %290 = vrot.lane.b32.xlu0 %v228, 127
      %v291 = vpop.permute.xlu0 %290
      %292 = vrot.lane.b32.xlu0 %v229, 127
      %v293 = vpop.permute.xlu0 %292
      %vm298 = vcmask 293888
      %v300 = vsel %vm298, %v255, 0
      %v303 = vsel %vm298, %v256, 0
      %v306 = vsel %vm298, %v257, 0
      %v309 = vsel %vm298, %v258, 0
      %v312 = vsel %vm298, %v259, 0
      %v315 = vsel %vm298, %v260, 0
      %v318 = vsel %vm298, %v261, 0
      %v321 = vsel %vm298, %v262, 0
      %v324 = vsel %vm298, %v263, 0
      %v327 = vsel %vm298, %v264, 0
      %v330 = vsel %vm298, %v265, 0
      %v333 = vsel %vm298, %v266, 0
      %v336 = vsel %vm298, %v267, 0
      %v339 = vsel %vm298, %v268, 0
      %v342 = vsel %vm298, %v269, 0
      %v345 = vsel %vm298, %v270, 0
      %v348 = vsel %vm298, %v271, 0
      %v351 = vsel %vm298, %v272, 0
      %v354 = vsel %vm298, %v273, 0
      %v357 = vsel %vm298, %v274, 0
      %v360 = vsel %vm298, %v275, 0
      %v363 = vsel %vm298, %v276, 0
      %v366 = vsel %vm298, %v277, 0
      %v369 = vsel %vm298, %v278, 0
      %vm371 = vcmask 1043456
      %v372 = vsel %vm371, %v293, 0
      %374 = vmatprep.subr.mxu0 0.0
      %375 = vmatpush1.msra.mxu0 %v285
      %376 = vmatprep.subr.mxu0 0.0
      %377 = vmatpush1.msra.mxu0 %v287
      %378 = vmatprep.subr.mxu0 0.0
      %379 = vmatpush1.msra.mxu0 %v289
      %380 = vmatprep.subr.mxu0 0.0
      %381 = vmatpush1.msra.mxu0 %v291
      %382 = vmatprep.subr.mxu0 0.0
      %383 = vmatpush1.msra.mxu0 %v372
      %384 = vmatprep.subr.mxu0 0.0
      %385 = vmatpush1.msra.mxu0 0.0
      %386 = vmatprep.subr.mxu0 0.0
      %387 = vmatpush1.msra.mxu0 0.0
      %388 = vmatprep.subr.mxu0 0.0
      %389 = vmatpush1.msra.mxu0 0.0
      %390 = vmatprep.subr.mxu0 0.0
      %391 = vmatpush1.msra.mxu0 0.0
      %392 = vmatprep.subr.mxu0 0.0
      %393 = vmatpush1.msra.mxu0 0.0
      %394 = vmatprep.subr.mxu0 0.0
      %395 = vmatpush1.msra.mxu0 0.0
      %396 = vmatprep.subr.mxu0 0.0
      %397 = vmatpush1.msra.mxu0 0.0
      %398 = vmatprep.subr.mxu0 0.0
      %399 = vmatpush1.msra.mxu0 0.0
      %400 = vmatprep.subr.mxu0 0.0
      %401 = vmatpush1.msra.mxu0 0.0
      %402 = vmatprep.subr.mxu0 0.0
      %403 = vmatpush1.msra.mxu0 0.0
      %404 = vmatprep.subr.mxu0 0.0
      %405 = vmatpush1.msra.mxu0 0.0
      %406 = vmatprep.subr.mxu0 0.0
      %407 = vmatpush1.msra.mxu0 0.0
      %408 = vmatprep.subr.mxu0 0.0
      %409 = vmatpush1.msra.mxu0 0.0
      %410 = vmatprep.subr.mxu0 0.0
      %411 = vmatpush1.msra.mxu0 0.0
      %412 = vmatprep.subr.mxu0 0.0
      %413 = vmatpush1.msra.mxu0 0.0
      %414 = vmatprep.subr.mxu0 0.0
      %415 = vmatpush1.msra.mxu0 0.0
      %416 = vmatprep.subr.mxu0 0.0
      %417 = vmatpush1.msra.mxu0 0.0
      %418 = vmatprep.subr.mxu0 0.0
      %419 = vmatpush1.msra.mxu0 0.0
      %420 = vmatprep.subr.mxu0 0.0
      %421 = vmatpush1.msra.mxu0 0.0
      %422 = vmatprep.subr.mxu0 0.0
      %423 = vmatpush1.msra.mxu0 0.0
      %424 = vmatprep.subr.mxu0 0.0
      %425 = vmatpush1.msra.mxu0 0.0
      %426 = vmatprep.subr.mxu0 0.0
      %427 = vmatpush1.msra.mxu0 0.0
      %428 = vmatprep.subr.mxu0 0.0
      %429 = vmatpush1.msra.mxu0 0.0
      %430 = vmatprep.subr.mxu0 0.0
      %431 = vmatpush1.msra.mxu0 0.0
      %432 = vmatprep.subr.mxu0 0.0
      %433 = vmatpush1.msra.mxu0 0.0
      %434 = vmatprep.subr.mxu0 0.0
      %435 = vmatpush1.msra.mxu0 0.0
      %436 = vmatprep.subr.mxu0 0.0
      %437 = vmatpush1.msra.mxu0 0.0
      %438 = vmatprep.mubr.f32.mxu0 0.0
      %439 = vmatmul.mubr.f32.gmra.mrb[0].mxu0 %v300
      %v440 = vpop.f32.mrb[0].mxu0
      %v441 = vadd.f32 0.0, %v440
      %v442 = vpop.f32.mrb[0].mxu0
      %443 = vmatprep.mubr.f32.mxu0 0.0
      %444 = vmatmul.mubr.f32.gmra.mrb[0].mxu0 %v303
      %v445 = vpop.f32.mrb[0].mxu0
      %v446 = vadd.f32 0.0, %v445
      %v447 = vpop.f32.mrb[0].mxu0
      %448 = vmatprep.mubr.f32.mxu0 0.0
      %449 = vmatmul.mubr.f32.gmra.mrb[0].mxu0 %v306
      %v450 = vpop.f32.mrb[0].mxu0
      %v451 = vadd.f32 0.0, %v450
      %v452 = vpop.f32.mrb[0].mxu0
      %453 = vmatprep.mubr.f32.mxu0 0.0
      %454 = vmatmul.mubr.f32.gmra.mrb[0].mxu0 %v309
      %v455 = vpop.f32.mrb[0].mxu0
      %v456 = vadd.f32 0.0, %v455
      %v457 = vpop.f32.mrb[0].mxu0
      %458 = vmatprep.mubr.f32.mxu0 0.0
      %459 = vmatmul.mubr.f32.gmra.mrb[0].mxu0 %v312
      %v460 = vpop.f32.mrb[0].mxu0
      %v461 = vadd.f32 0.0, %v460
      %v462 = vpop.f32.mrb[0].mxu0
      %463 = vmatprep.mubr.f32.mxu0 0.0
      %464 = vmatmul.mubr.f32.gmra.mrb[0].mxu0 %v315
      %v465 = vpop.f32.mrb[0].mxu0
      %v466 = vadd.f32 0.0, %v465
      %v467 = vpop.f32.mrb[0].mxu0
      %468 = vmatprep.mubr.f32.mxu0 0.0
      %469 = vmatmul.mubr.f32.gmra.mrb[0].mxu0 %v318
      %v470 = vpop.f32.mrb[0].mxu0
      %v471 = vadd.f32 0.0, %v470
      %v472 = vpop.f32.mrb[0].mxu0
      %473 = vmatprep.mubr.f32.mxu0 0.0
      %474 = vmatmul.mubr.f32.gmra.mrb[0].mxu0 %v321
      %v475 = vpop.f32.mrb[0].mxu0
      %v476 = vadd.f32 0.0, %v475
      %v477 = vpop.f32.mrb[0].mxu0
      %478 = vmatprep.mubr.f32.mxu0 0.0
      %479 = vmatmul.mubr.f32.gmra.mrb[0].mxu0 %v324
      %v480 = vpop.f32.mrb[0].mxu0
      %v481 = vadd.f32 0.0, %v480
      %v482 = vpop.f32.mrb[0].mxu0
      %483 = vmatprep.mubr.f32.mxu0 0.0
      %484 = vmatmul.mubr.f32.gmra.mrb[0].mxu0 %v327
      %v485 = vpop.f32.mrb[0].mxu0
      %v486 = vadd.f32 0.0, %v485
      %v487 = vpop.f32.mrb[0].mxu0
      %488 = vmatprep.mubr.f32.mxu0 0.0
      %489 = vmatmul.mubr.f32.gmra.mrb[0].mxu0 %v330
      %v490 = vpop.f32.mrb[0].mxu0
      %v491 = vadd.f32 0.0, %v490
      %v492 = vpop.f32.mrb[0].mxu0
      %493 = vmatprep.mubr.f32.mxu0 0.0
      %494 = vmatmul.mubr.f32.gmra.mrb[0].mxu0 %v333
      %v495 = vpop.f32.mrb[0].mxu0
      %v496 = vadd.f32 0.0, %v495
      %v497 = vpop.f32.mrb[0].mxu0
      %498 = vmatprep.mubr.f32.mxu0 0.0
      %499 = vmatmul.mubr.f32.gmra.mrb[0].mxu0 %v336
      %v500 = vpop.f32.mrb[0].mxu0
      %v501 = vadd.f32 0.0, %v500
      %v502 = vpop.f32.mrb[0].mxu0
      %503 = vmatprep.mubr.f32.mxu0 0.0
      %504 = vmatmul.mubr.f32.gmra.mrb[0].mxu0 %v339
      %v505 = vpop.f32.mrb[0].mxu0
      %v506 = vadd.f32 0.0, %v505
      %v507 = vpop.f32.mrb[0].mxu0
      %508 = vmatprep.mubr.f32.mxu0 0.0
      %509 = vmatmul.mubr.f32.gmra.mrb[0].mxu0 %v342
      %v510 = vpop.f32.mrb[0].mxu0
      %v511 = vadd.f32 0.0, %v510
      %v512 = vpop.f32.mrb[0].mxu0
      %513 = vmatprep.mubr.f32.mxu0 0.0
      %514 = vmatmul.mubr.f32.gmra.mrb[0].mxu0 %v345
      %v515 = vpop.f32.mrb[0].mxu0
      %v516 = vadd.f32 0.0, %v515
      %v517 = vpop.f32.mrb[0].mxu0
      %518 = vmatprep.mubr.f32.mxu0 0.0
      %519 = vmatmul.mubr.f32.gmra.mrb[0].mxu0 %v348
      %v520 = vpop.f32.mrb[0].mxu0
      %v521 = vadd.f32 0.0, %v520
      %v522 = vpop.f32.mrb[0].mxu0
      %523 = vmatprep.mubr.f32.mxu0 0.0
      %524 = vmatmul.mubr.f32.gmra.mrb[0].mxu0 %v351
      %v525 = vpop.f32.mrb[0].mxu0
      %v526 = vadd.f32 0.0, %v525
      %v527 = vpop.f32.mrb[0].mxu0
      %528 = vmatprep.mubr.f32.mxu0 0.0
      %529 = vmatmul.mubr.f32.gmra.mrb[0].mxu0 %v354
      %v530 = vpop.f32.mrb[0].mxu0
      %v531 = vadd.f32 0.0, %v530
      %v532 = vpop.f32.mrb[0].mxu0
      %533 = vmatprep.mubr.f32.mxu0 0.0
      %534 = vmatmul.mubr.f32.gmra.mrb[0].mxu0 %v357
      %v535 = vpop.f32.mrb[0].mxu0
      %v536 = vadd.f32 0.0, %v535
      %v537 = vpop.f32.mrb[0].mxu0
      %538 = vmatprep.mubr.f32.mxu0 0.0
      %539 = vmatmul.mubr.f32.gmra.mrb[0].mxu0 %v360
      %v540 = vpop.f32.mrb[0].mxu0
      %v541 = vadd.f32 0.0, %v540
      %v542 = vpop.f32.mrb[0].mxu0
      %543 = vmatprep.mubr.f32.mxu0 0.0
      %544 = vmatmul.mubr.f32.gmra.mrb[0].mxu0 %v363
      %v545 = vpop.f32.mrb[0].mxu0
      %v546 = vadd.f32 0.0, %v545
      %v547 = vpop.f32.mrb[0].mxu0
      %548 = vmatprep.mubr.f32.mxu0 0.0
      %549 = vmatmul.mubr.f32.gmra.mrb[0].mxu0 %v366
      %v550 = vpop.f32.mrb[0].mxu0
      %v551 = vadd.f32 0.0, %v550
      %v552 = vpop.f32.mrb[0].mxu0
      %553 = vmatprep.mubr.f32.mxu0 0.0
      %554 = vmatmul.mubr.f32.gmra.mrb[0].mxu0 %v369
      %v555 = vpop.f32.mrb[0].mxu0
      %v556 = vadd.f32 0.0, %v555
      %v557 = vpop.f32.mrb[0].mxu0
      %558 = vdwg.mxu0
      %v560 = vsel %vm298, %v230, 0
      %v563 = vsel %vm298, %v231, 0
      %v566 = vsel %vm298, %v232, 0
      %v569 = vsel %vm298, %v233, 0
      %v572 = vsel %vm298, %v234, 0
      %v575 = vsel %vm298, %v235, 0
      %v578 = vsel %vm298, %v236, 0
      %v581 = vsel %vm298, %v237, 0
      %v584 = vsel %vm298, %v238, 0
      %v587 = vsel %vm298, %v239, 0
      %v590 = vsel %vm298, %v240, 0
      %v593 = vsel %vm298, %v241, 0
      %v596 = vsel %vm298, %v242, 0
      %v599 = vsel %vm298, %v243, 0
      %v602 = vsel %vm298, %v244, 0
      %v605 = vsel %vm298, %v245, 0
      %v608 = vsel %vm298, %v246, 0
      %v611 = vsel %vm298, %v247, 0
      %v614 = vsel %vm298, %v248, 0
      %v617 = vsel %vm298, %v249, 0
      %v620 = vsel %vm298, %v250, 0
      %v623 = vsel %vm298, %v251, 0
      %v626 = vsel %vm298, %v252, 0
      %v629 = vsel %vm298, %v253, 0
      %v631 = vsel %vm371, %v229, 0
      %633 = vmatprep.subr.mxu0 0.0
      %634 = vmatpush1.msra.mxu0 %v225
      %635 = vmatprep.subr.mxu0 0.0
      %636 = vmatpush1.msra.mxu0 %v226
      %637 = vmatprep.subr.mxu0 0.0
      %638 = vmatpush1.msra.mxu0 %v227
      %639 = vmatprep.subr.mxu0 0.0
      %640 = vmatpush1.msra.mxu0 %v228
      %641 = vmatprep.subr.mxu0 0.0
      %642 = vmatpush1.msra.mxu0 %v631
      %643 = vmatprep.subr.mxu0 0.0
      %644 = vmatpush1.msra.mxu0 0.0
      %645 = vmatprep.subr.mxu0 0.0
      %646 = vmatpush1.msra.mxu0 0.0
      %647 = vmatprep.subr.mxu0 0.0
      %648 = vmatpush1.msra.mxu0 0.0
      %649 = vmatprep.subr.mxu0 0.0
      %650 = vmatpush1.msra.mxu0 0.0
      %651 = vmatprep.subr.mxu0 0.0
      %652 = vmatpush1.msra.mxu0 0.0
      %653 = vmatprep.subr.mxu0 0.0
      %654 = vmatpush1.msra.mxu0 0.0
      %655 = vmatprep.subr.mxu0 0.0
      %656 = vmatpush1.msra.mxu0 0.0
      %657 = vmatprep.subr.mxu0 0.0
      %658 = vmatpush1.msra.mxu0 0.0
      %659 = vmatprep.subr.mxu0 0.0
      %660 = vmatpush1.msra.mxu0 0.0
      %661 = vmatprep.subr.mxu0 0.0
      %662 = vmatpush1.msra.mxu0 0.0
      %663 = vmatprep.subr.mxu0 0.0
      %664 = vmatpush1.msra.mxu0 0.0
      %665 = vmatprep.subr.mxu0 0.0
      %666 = vmatpush1.msra.mxu0 0.0
      %667 = vmatprep.subr.mxu0 0.0
      %668 = vmatpush1.msra.mxu0 0.0
      %669 = vmatprep.subr.mxu0 0.0
      %670 = vmatpush1.msra.mxu0 0.0
      %671 = vmatprep.subr.mxu0 0.0
      %672 = vmatpush1.msra.mxu0 0.0
      %673 = vmatprep.subr.mxu0 0.0
      %674 = vmatpush1.msra.mxu0 0.0
      %675 = vmatprep.subr.mxu0 0.0
      %676 = vmatpush1.msra.mxu0 0.0
      %677 = vmatprep.subr.mxu0 0.0
      %678 = vmatpush1.msra.mxu0 0.0
      %679 = vmatprep.subr.mxu0 0.0
      %680 = vmatpush1.msra.mxu0 0.0
      %681 = vmatprep.subr.mxu0 0.0
      %682 = vmatpush1.msra.mxu0 0.0
      %683 = vmatprep.subr.mxu0 0.0
      %684 = vmatpush1.msra.mxu0 0.0
      %685 = vmatprep.subr.mxu0 0.0
      %686 = vmatpush1.msra.mxu0 0.0
      %687 = vmatprep.subr.mxu0 0.0
      %688 = vmatpush1.msra.mxu0 0.0
      %689 = vmatprep.subr.mxu0 0.0
      %690 = vmatpush1.msra.mxu0 0.0
      %691 = vmatprep.subr.mxu0 0.0
      %692 = vmatpush1.msra.mxu0 0.0
      %693 = vmatprep.subr.mxu0 0.0
      %694 = vmatpush1.msra.mxu0 0.0
      %695 = vmatprep.subr.mxu0 0.0
      %696 = vmatpush1.msra.mxu0 0.0
      %697 = vmatprep.mubr.f32.mxu0 0.0
      %698 = vmatmul.mubr.f32.gmra.mrb[0].mxu0 %v560
      %v699 = vpop.f32.mrb[0].mxu0
      %v700 = vadd.f32 %v441, %v699
      %v701 = vpop.f32.mrb[0].mxu0
      %702 = vmatprep.mubr.f32.mxu0 0.0
      %703 = vmatmul.mubr.f32.gmra.mrb[0].mxu0 %v563
      %v704 = vpop.f32.mrb[0].mxu0
      %v705 = vadd.f32 %v446, %v704
      %v706 = vpop.f32.mrb[0].mxu0
      %707 = vmatprep.mubr.f32.mxu0 0.0
      %708 = vmatmul.mubr.f32.gmra.mrb[0].mxu0 %v566
      %v709 = vpop.f32.mrb[0].mxu0
      %v710 = vadd.f32 %v451, %v709
      %v711 = vpop.f32.mrb[0].mxu0
      %712 = vmatprep.mubr.f32.mxu0 0.0
      %713 = vmatmul.mubr.f32.gmra.mrb[0].mxu0 %v569
      %v714 = vpop.f32.mrb[0].mxu0
      %v715 = vadd.f32 %v456, %v714
      %v716 = vpop.f32.mrb[0].mxu0
      %717 = vmatprep.mubr.f32.mxu0 0.0
      %718 = vmatmul.mubr.f32.gmra.mrb[0].mxu0 %v572
      %v719 = vpop.f32.mrb[0].mxu0
      %v720 = vadd.f32 %v461, %v719
      %v721 = vpop.f32.mrb[0].mxu0
      %722 = vmatprep.mubr.f32.mxu0 0.0
      %723 = vmatmul.mubr.f32.gmra.mrb[0].mxu0 %v575
      %v724 = vpop.f32.mrb[0].mxu0
      %v725 = vadd.f32 %v466, %v724
      %v726 = vpop.f32.mrb[0].mxu0
      %727 = vmatprep.mubr.f32.mxu0 0.0
      %728 = vmatmul.mubr.f32.gmra.mrb[0].mxu0 %v578
      %v729 = vpop.f32.mrb[0].mxu0
      %v730 = vadd.f32 %v471, %v729
      %v731 = vpop.f32.mrb[0].mxu0
      %732 = vmatprep.mubr.f32.mxu0 0.0
      %733 = vmatmul.mubr.f32.gmra.mrb[0].mxu0 %v581
      %v734 = vpop.f32.mrb[0].mxu0
      %v735 = vadd.f32 %v476, %v734
      %v736 = vpop.f32.mrb[0].mxu0
      %737 = vmatprep.mubr.f32.mxu0 0.0
      %738 = vmatmul.mubr.f32.gmra.mrb[0].mxu0 %v584
      %v739 = vpop.f32.mrb[0].mxu0
      %v740 = vadd.f32 %v481, %v739
      %v741 = vpop.f32.mrb[0].mxu0
      %742 = vmatprep.mubr.f32.mxu0 0.0
      %743 = vmatmul.mubr.f32.gmra.mrb[0].mxu0 %v587
      %v744 = vpop.f32.mrb[0].mxu0
      %v745 = vadd.f32 %v486, %v744
      %v746 = vpop.f32.mrb[0].mxu0
      %747 = vmatprep.mubr.f32.mxu0 0.0
      %748 = vmatmul.mubr.f32.gmra.mrb[0].mxu0 %v590
      %v749 = vpop.f32.mrb[0].mxu0
      %v750 = vadd.f32 %v491, %v749
      %v751 = vpop.f32.mrb[0].mxu0
      %752 = vmatprep.mubr.f32.mxu0 0.0
      %753 = vmatmul.mubr.f32.gmra.mrb[0].mxu0 %v593
      %v754 = vpop.f32.mrb[0].mxu0
      %v755 = vadd.f32 %v496, %v754
      %v756 = vpop.f32.mrb[0].mxu0
      %757 = vmatprep.mubr.f32.mxu0 0.0
      %758 = vmatmul.mubr.f32.gmra.mrb[0].mxu0 %v596
      %v759 = vpop.f32.mrb[0].mxu0
      %v760 = vadd.f32 %v501, %v759
      %v761 = vpop.f32.mrb[0].mxu0
      %762 = vmatprep.mubr.f32.mxu0 0.0
      %763 = vmatmul.mubr.f32.gmra.mrb[0].mxu0 %v599
      %v764 = vpop.f32.mrb[0].mxu0
      %v765 = vadd.f32 %v506, %v764
      %v766 = vpop.f32.mrb[0].mxu0
      %767 = vmatprep.mubr.f32.mxu0 0.0
      %768 = vmatmul.mubr.f32.gmra.mrb[0].mxu0 %v602
      %v769 = vpop.f32.mrb[0].mxu0
      %v770 = vadd.f32 %v511, %v769
      %v771 = vpop.f32.mrb[0].mxu0
      %772 = vmatprep.mubr.f32.mxu0 0.0
      %773 = vmatmul.mubr.f32.gmra.mrb[0].mxu0 %v605
      %v774 = vpop.f32.mrb[0].mxu0
      %v775 = vadd.f32 %v516, %v774
      %v776 = vpop.f32.mrb[0].mxu0
      %777 = vmatprep.mubr.f32.mxu0 0.0
      %778 = vmatmul.mubr.f32.gmra.mrb[0].mxu0 %v608
      %v779 = vpop.f32.mrb[0].mxu0
      %v780 = vadd.f32 %v521, %v779
      %v781 = vpop.f32.mrb[0].mxu0
      %782 = vmatprep.mubr.f32.mxu0 0.0
      %783 = vmatmul.mubr.f32.gmra.mrb[0].mxu0 %v611
      %v784 = vpop.f32.mrb[0].mxu0
      %v785 = vadd.f32 %v526, %v784
      %v786 = vpop.f32.mrb[0].mxu0
      %787 = vmatprep.mubr.f32.mxu0 0.0
      %788 = vmatmul.mubr.f32.gmra.mrb[0].mxu0 %v614
      %v789 = vpop.f32.mrb[0].mxu0
      %v790 = vadd.f32 %v531, %v789
      %v791 = vpop.f32.mrb[0].mxu0
      %792 = vmatprep.mubr.f32.mxu0 0.0
      %793 = vmatmul.mubr.f32.gmra.mrb[0].mxu0 %v617
      %v794 = vpop.f32.mrb[0].mxu0
      %v795 = vadd.f32 %v536, %v794
      %v796 = vpop.f32.mrb[0].mxu0
      %797 = vmatprep.mubr.f32.mxu0 0.0
      %798 = vmatmul.mubr.f32.gmra.mrb[0].mxu0 %v620
      %v799 = vpop.f32.mrb[0].mxu0
      %v800 = vadd.f32 %v541, %v799
      %v801 = vpop.f32.mrb[0].mxu0
      %802 = vmatprep.mubr.f32.mxu0 0.0
      %803 = vmatmul.mubr.f32.gmra.mrb[0].mxu0 %v623
      %v804 = vpop.f32.mrb[0].mxu0
      %v805 = vadd.f32 %v546, %v804
      %v806 = vpop.f32.mrb[0].mxu0
      %807 = vmatprep.mubr.f32.mxu0 0.0
      %808 = vmatmul.mubr.f32.gmra.mrb[0].mxu0 %v626
      %v809 = vpop.f32.mrb[0].mxu0
      %v810 = vadd.f32 %v551, %v809
      %v811 = vpop.f32.mrb[0].mxu0
      %812 = vmatprep.mubr.f32.mxu0 0.0
      %813 = vmatmul.mubr.f32.gmra.mrb[0].mxu0 %v629
      %v814 = vpop.f32.mrb[0].mxu0
      %v815 = vadd.f32 %v556, %v814
      %v816 = vpop.f32.mrb[0].mxu0
      %817 = vdwg.mxu0
      %s818 = scalar_lea.vmem %s1, 384
      %v819 = vld [vmem:[%s818] sm:$0xff]
      %v820 = vld [vmem:[%s818 + $0x8] sm:$0xff]
      %v821 = vld [vmem:[%s818 + $0x10] sm:$0xff]
      %v822 = vld [vmem:[%s818 + $0x18] sm:$0xff]
      %v823 = vld [vmem:[%s818 + $0x20] sm:$0xff]
      %v824 = vld [vmem:[%s818 + $0x28] sm:$0xff]
      %v825 = vld [vmem:[%s818 + $0x30] sm:$0xff]
      %v826 = vld [vmem:[%s818 + $0x38] sm:$0xff]
      %v827 = vld [vmem:[%s818 + $0x40] sm:$0xff]
      %v828 = vld [vmem:[%s818 + $0x48] sm:$0xff]
      %v829 = vld [vmem:[%s818 + $0x50] sm:$0xff]
      %v830 = vld [vmem:[%s818 + $0x58] sm:$0xff]
      %v831 = vld [vmem:[%s818 + $0x60] sm:$0xff]
      %v832 = vld [vmem:[%s818 + $0x68] sm:$0xff]
      %v833 = vld [vmem:[%s818 + $0x70] sm:$0xff]
      %v834 = vld [vmem:[%s818 + $0x78] sm:$0xff]
      %v835 = vld [vmem:[%s818 + $0x80] sm:$0xff]
      %v836 = vld [vmem:[%s818 + $0x88] sm:$0xff]
      %v837 = vld [vmem:[%s818 + $0x90] sm:$0xff]
      %v838 = vld [vmem:[%s818 + $0x98] sm:$0xff]
      %v839 = vld [vmem:[%s818 + $0xa0] sm:$0xff]
      %v840 = vld [vmem:[%s818 + $0xa8] sm:$0xff]
      %v841 = vld [vmem:[%s818 + $0xb0] sm:$0xff]
      %v842 = vld [vmem:[%s818 + $0xb8] sm:$0xff]
      %843 = vrot.lane.b32.xlu0 %v225, 126
      %v844 = vpop.permute.xlu0 %843
      %845 = vrot.lane.b32.xlu0 %v226, 126
      %v846 = vpop.permute.xlu0 %845
      %847 = vrot.lane.b32.xlu0 %v227, 126
      %v848 = vpop.permute.xlu0 %847
      %849 = vrot.lane.b32.xlu0 %v228, 126
      %v850 = vpop.permute.xlu0 %849
      %851 = vrot.lane.b32.xlu0 %v229, 126
      %v852 = vpop.permute.xlu0 %851
      %v858 = vsel %vm298, %v819, 0
      %v861 = vsel %vm298, %v820, 0
      %v864 = vsel %vm298, %v821, 0
      %v867 = vsel %vm298, %v822, 0
      %v870 = vsel %vm298, %v823, 0
      %v873 = vsel %vm298, %v824, 0
      %v876 = vsel %vm298, %v825, 0
      %v879 = vsel %vm298, %v826, 0
      %v882 = vsel %vm298, %v827, 0
      %v885 = vsel %vm298, %v828, 0
      %v888 = vsel %vm298, %v829, 0
      %v891 = vsel %vm298, %v830, 0
      %v894 = vsel %vm298, %v831, 0
      %v897 = vsel %vm298, %v832, 0
      %v900 = vsel %vm298, %v833, 0
      %v903 = vsel %vm298, %v834, 0
      %v906 = vsel %vm298, %v835, 0
      %v909 = vsel %vm298, %v836, 0
      %v912 = vsel %vm298, %v837, 0
      %v915 = vsel %vm298, %v838, 0
      %v918 = vsel %vm298, %v839, 0
      %v921 = vsel %vm298, %v840, 0
      %v924 = vsel %vm298, %v841, 0
      %v927 = vsel %vm298, %v842, 0
      %v929 = vsel %vm371, %v852, 0
      %931 = vmatprep.subr.mxu0 0.0
      %932 = vmatpush1.msra.mxu0 %v844
      %933 = vmatprep.subr.mxu0 0.0
      %934 = vmatpush1.msra.mxu0 %v846
      %935 = vmatprep.subr.mxu0 0.0
      %936 = vmatpush1.msra.mxu0 %v848
      %937 = vmatprep.subr.mxu0 0.0
      %938 = vmatpush1.msra.mxu0 %v850
      %939 = vmatprep.subr.mxu0 0.0
      %940 = vmatpush1.msra.mxu0 %v929
      %941 = vmatprep.subr.mxu0 0.0
      %942 = vmatpush1.msra.mxu0 0.0
      %943 = vmatprep.subr.mxu0 0.0
      %944 = vmatpush1.msra.mxu0 0.0
      %945 = vmatprep.subr.mxu0 0.0
      %946 = vmatpush1.msra.mxu0 0.0
      %947 = vmatprep.subr.mxu0 0.0
      %948 = vmatpush1.msra.mxu0 0.0
      %949 = vmatprep.subr.mxu0 0.0
      %950 = vmatpush1.msra.mxu0 0.0
      %951 = vmatprep.subr.mxu0 0.0
      %952 = vmatpush1.msra.mxu0 0.0
      %953 = vmatprep.subr.mxu0 0.0
      %954 = vmatpush1.msra.mxu0 0.0
      %955 = vmatprep.subr.mxu0 0.0
      %956 = vmatpush1.msra.mxu0 0.0
      %957 = vmatprep.subr.mxu0 0.0
      %958 = vmatpush1.msra.mxu0 0.0
      %959 = vmatprep.subr.mxu0 0.0
      %960 = vmatpush1.msra.mxu0 0.0
      %961 = vmatprep.subr.mxu0 0.0
      %962 = vmatpush1.msra.mxu0 0.0
      %963 = vmatprep.subr.mxu0 0.0
      %964 = vmatpush1.msra.mxu0 0.0
      %965 = vmatprep.subr.mxu0 0.0
      %966 = vmatpush1.msra.mxu0 0.0
      %967 = vmatprep.subr.mxu0 0.0
      %968 = vmatpush1.msra.mxu0 0.0
      %969 = vmatprep.subr.mxu0 0.0
      %970 = vmatpush1.msra.mxu0 0.0
      %971 = vmatprep.subr.mxu0 0.0
      %972 = vmatpush1.msra.mxu0 0.0
      %973 = vmatprep.subr.mxu0 0.0
      %974 = vmatpush1.msra.mxu0 0.0
      %975 = vmatprep.subr.mxu0 0.0
      %976 = vmatpush1.msra.mxu0 0.0
      %977 = vmatprep.subr.mxu0 0.0
      %978 = vmatpush1.msra.mxu0 0.0
      %979 = vmatprep.subr.mxu0 0.0
      %980 = vmatpush1.msra.mxu0 0.0
      %981 = vmatprep.subr.mxu0 0.0
      %982 = vmatpush1.msra.mxu0 0.0
      %983 = vmatprep.subr.mxu0 0.0
      %984 = vmatpush1.msra.mxu0 0.0
      %985 = vmatprep.subr.mxu0 0.0
      %986 = vmatpush1.msra.mxu0 0.0
      %987 = vmatprep.subr.mxu0 0.0
      %988 = vmatpush1.msra.mxu0 0.0
      %989 = vmatprep.subr.mxu0 0.0
      %990 = vmatpush1.msra.mxu0 0.0
      %991 = vmatprep.subr.mxu0 0.0
      %992 = vmatpush1.msra.mxu0 0.0
      %993 = vmatprep.subr.mxu0 0.0
      %994 = vmatpush1.msra.mxu0 0.0
      %995 = vmatprep.mubr.f32.mxu0 0.0
      %996 = vmatmul.mubr.f32.gmra.mrb[0].mxu0 %v858
      %v997 = vpop.f32.mrb[0].mxu0
      %v998 = vadd.f32 0.0, %v997
      %v999 = vpop.f32.mrb[0].mxu0
      %1000 = vmatprep.mubr.f32.mxu0 0.0
      %1001 = vmatmul.mubr.f32.gmra.mrb[0].mxu0 %v861
      %v1002 = vpop.f32.mrb[0].mxu0
      %v1003 = vadd.f32 0.0, %v1002
      %v1004 = vpop.f32.mrb[0].mxu0
      %1005 = vmatprep.mubr.f32.mxu0 0.0
      %1006 = vmatmul.mubr.f32.gmra.mrb[0].mxu0 %v864
      %v1007 = vpop.f32.mrb[0].mxu0
      %v1008 = vadd.f32 0.0, %v1007
      %v1009 = vpop.f32.mrb[0].mxu0
      %1010 = vmatprep.mubr.f32.mxu0 0.0
      %1011 = vmatmul.mubr.f32.gmra.mrb[0].mxu0 %v867
      %v1012 = vpop.f32.mrb[0].mxu0
      %v1013 = vadd.f32 0.0, %v1012
      %v1014 = vpop.f32.mrb[0].mxu0
      %1015 = vmatprep.mubr.f32.mxu0 0.0
      %1016 = vmatmul.mubr.f32.gmra.mrb[0].mxu0 %v870
      %v1017 = vpop.f32.mrb[0].mxu0
      %v1018 = vadd.f32 0.0, %v1017
      %v1019 = vpop.f32.mrb[0].mxu0
      %1020 = vmatprep.mubr.f32.mxu0 0.0
      %1021 = vmatmul.mubr.f32.gmra.mrb[0].mxu0 %v873
      %v1022 = vpop.f32.mrb[0].mxu0
      %v1023 = vadd.f32 0.0, %v1022
      %v1024 = vpop.f32.mrb[0].mxu0
      %1025 = vmatprep.mubr.f32.mxu0 0.0
      %1026 = vmatmul.mubr.f32.gmra.mrb[0].mxu0 %v876
      %v1027 = vpop.f32.mrb[0].mxu0
      %v1028 = vadd.f32 0.0, %v1027
      %v1029 = vpop.f32.mrb[0].mxu0
      %1030 = vmatprep.mubr.f32.mxu0 0.0
      %1031 = vmatmul.mubr.f32.gmra.mrb[0].mxu0 %v879
      %v1032 = vpop.f32.mrb[0].mxu0
      %v1033 = vadd.f32 0.0, %v1032
      %v1034 = vpop.f32.mrb[0].mxu0
      %1035 = vmatprep.mubr.f32.mxu0 0.0
      %1036 = vmatmul.mubr.f32.gmra.mrb[0].mxu0 %v882
      %v1037 = vpop.f32.mrb[0].mxu0
      %v1038 = vadd.f32 0.0, %v1037
      %v1039 = vpop.f32.mrb[0].mxu0
      %1040 = vmatprep.mubr.f32.mxu0 0.0
      %1041 = vmatmul.mubr.f32.gmra.mrb[0].mxu0 %v885
      %v1042 = vpop.f32.mrb[0].mxu0
      %v1043 = vadd.f32 0.0, %v1042
      %v1044 = vpop.f32.mrb[0].mxu0
      %1045 = vmatprep.mubr.f32.mxu0 0.0
      %1046 = vmatmul.mubr.f32.gmra.mrb[0].mxu0 %v888
      %v1047 = vpop.f32.mrb[0].mxu0
      %v1048 = vadd.f32 0.0, %v1047
      %v1049 = vpop.f32.mrb[0].mxu0
      %1050 = vmatprep.mubr.f32.mxu0 0.0
      %1051 = vmatmul.mubr.f32.gmra.mrb[0].mxu0 %v891
      %v1052 = vpop.f32.mrb[0].mxu0
      %v1053 = vadd.f32 0.0, %v1052
      %v1054 = vpop.f32.mrb[0].mxu0
      %1055 = vmatprep.mubr.f32.mxu0 0.0
      %1056 = vmatmul.mubr.f32.gmra.mrb[0].mxu0 %v894
      %v1057 = vpop.f32.mrb[0].mxu0
      %v1058 = vadd.f32 0.0, %v1057
      %v1059 = vpop.f32.mrb[0].mxu0
      %1060 = vmatprep.mubr.f32.mxu0 0.0
      %1061 = vmatmul.mubr.f32.gmra.mrb[0].mxu0 %v897
      %v1062 = vpop.f32.mrb[0].mxu0
      %v1063 = vadd.f32 0.0, %v1062
      %v1064 = vpop.f32.mrb[0].mxu0
      %1065 = vmatprep.mubr.f32.mxu0 0.0
      %1066 = vmatmul.mubr.f32.gmra.mrb[0].mxu0 %v900
      %v1067 = vpop.f32.mrb[0].mxu0
      %v1068 = vadd.f32 0.0, %v1067
      %v1069 = vpop.f32.mrb[0].mxu0
      %1070 = vmatprep.mubr.f32.mxu0 0.0
      %1071 = vmatmul.mubr.f32.gmra.mrb[0].mxu0 %v903
      %v1072 = vpop.f32.mrb[0].mxu0
      %v1073 = vadd.f32 0.0, %v1072
      %v1074 = vpop.f32.mrb[0].mxu0
      %1075 = vmatprep.mubr.f32.mxu0 0.0
      %1076 = vmatmul.mubr.f32.gmra.mrb[0].mxu0 %v906
      %v1077 = vpop.f32.mrb[0].mxu0
      %v1078 = vadd.f32 0.0, %v1077
      %v1079 = vpop.f32.mrb[0].mxu0
      %1080 = vmatprep.mubr.f32.mxu0 0.0
      %1081 = vmatmul.mubr.f32.gmra.mrb[0].mxu0 %v909
      %v1082 = vpop.f32.mrb[0].mxu0
      %v1083 = vadd.f32 0.0, %v1082
      %v1084 = vpop.f32.mrb[0].mxu0
      %1085 = vmatprep.mubr.f32.mxu0 0.0
      %1086 = vmatmul.mubr.f32.gmra.mrb[0].mxu0 %v912
      %v1087 = vpop.f32.mrb[0].mxu0
      %v1088 = vadd.f32 0.0, %v1087
      %v1089 = vpop.f32.mrb[0].mxu0
      %1090 = vmatprep.mubr.f32.mxu0 0.0
      %1091 = vmatmul.mubr.f32.gmra.mrb[0].mxu0 %v915
      %v1092 = vpop.f32.mrb[0].mxu0
      %v1093 = vadd.f32 0.0, %v1092
      %v1094 = vpop.f32.mrb[0].mxu0
      %1095 = vmatprep.mubr.f32.mxu0 0.0
      %1096 = vmatmul.mubr.f32.gmra.mrb[0].mxu0 %v918
      %v1097 = vpop.f32.mrb[0].mxu0
      %v1098 = vadd.f32 0.0, %v1097
      %v1099 = vpop.f32.mrb[0].mxu0
      %1100 = vmatprep.mubr.f32.mxu0 0.0
      %1101 = vmatmul.mubr.f32.gmra.mrb[0].mxu0 %v921
      %v1102 = vpop.f32.mrb[0].mxu0
      %v1103 = vadd.f32 0.0, %v1102
      %v1104 = vpop.f32.mrb[0].mxu0
      %1105 = vmatprep.mubr.f32.mxu0 0.0
      %1106 = vmatmul.mubr.f32.gmra.mrb[0].mxu0 %v924
      %v1107 = vpop.f32.mrb[0].mxu0
      %v1108 = vadd.f32 0.0, %v1107
      %v1109 = vpop.f32.mrb[0].mxu0
      %1110 = vmatprep.mubr.f32.mxu0 0.0
      %1111 = vmatmul.mubr.f32.gmra.mrb[0].mxu0 %v927
      %v1112 = vpop.f32.mrb[0].mxu0
      %v1113 = vadd.f32 0.0, %v1112
      %v1114 = vpop.f32.mrb[0].mxu0
      %1115 = vdwg.mxu0
      %v1116 = vadd.f32 %v700, %v998
      %v1117 = vadd.f32 %v705, %v1003
      %v1118 = vadd.f32 %v710, %v1008
      %v1119 = vadd.f32 %v715, %v1013
      %v1120 = vadd.f32 %v720, %v1018
      %v1121 = vadd.f32 %v725, %v1023
      %v1122 = vadd.f32 %v730, %v1028
      %v1123 = vadd.f32 %v735, %v1033
      %v1124 = vadd.f32 %v740, %v1038
      %v1125 = vadd.f32 %v745, %v1043
      %v1126 = vadd.f32 %v750, %v1048
      %v1127 = vadd.f32 %v755, %v1053
      %v1128 = vadd.f32 %v760, %v1058
      %v1129 = vadd.f32 %v765, %v1063
      %v1130 = vadd.f32 %v770, %v1068
      %v1131 = vadd.f32 %v775, %v1073
      %v1132 = vadd.f32 %v780, %v1078
      %v1133 = vadd.f32 %v785, %v1083
      %v1134 = vadd.f32 %v790, %v1088
      %v1135 = vadd.f32 %v795, %v1093
      %v1136 = vadd.f32 %v800, %v1098
      %v1137 = vadd.f32 %v805, %v1103
      %v1138 = vadd.f32 %v810, %v1108
      %v1139 = vadd.f32 %v815, %v1113
      %s1140 = scalar_lea.vmem %s1, 576
      %v1141 = vld [vmem:[%s1140] sm:$0xff]
      %v1142 = vld [vmem:[%s1140 + $0x8] sm:$0xff]
      %v1143 = vld [vmem:[%s1140 + $0x10] sm:$0xff]
      %v1144 = vld [vmem:[%s1140 + $0x18] sm:$0xff]
      %v1145 = vld [vmem:[%s1140 + $0x20] sm:$0xff]
      %v1146 = vld [vmem:[%s1140 + $0x28] sm:$0xff]
      %v1147 = vld [vmem:[%s1140 + $0x30] sm:$0xff]
      %v1148 = vld [vmem:[%s1140 + $0x38] sm:$0xff]
      %v1149 = vld [vmem:[%s1140 + $0x40] sm:$0xff]
      %v1150 = vld [vmem:[%s1140 + $0x48] sm:$0xff]
      %v1151 = vld [vmem:[%s1140 + $0x50] sm:$0xff]
      %v1152 = vld [vmem:[%s1140 + $0x58] sm:$0xff]
      %v1153 = vld [vmem:[%s1140 + $0x60] sm:$0xff]
      %v1154 = vld [vmem:[%s1140 + $0x68] sm:$0xff]
      %v1155 = vld [vmem:[%s1140 + $0x70] sm:$0xff]
      %v1156 = vld [vmem:[%s1140 + $0x78] sm:$0xff]
      %v1157 = vld [vmem:[%s1140 + $0x80] sm:$0xff]
      %v1158 = vld [vmem:[%s1140 + $0x88] sm:$0xff]
      %v1159 = vld [vmem:[%s1140 + $0x90] sm:$0xff]
      %v1160 = vld [vmem:[%s1140 + $0x98] sm:$0xff]
      %v1161 = vld [vmem:[%s1140 + $0xa0] sm:$0xff]
      %v1162 = vld [vmem:[%s1140 + $0xa8] sm:$0xff]
      %v1163 = vld [vmem:[%s1140 + $0xb0] sm:$0xff]
      %v1164 = vld [vmem:[%s1140 + $0xb8] sm:$0xff]
      %1165 = vrot.lane.b32.xlu0 %v225, 125
      %v1166 = vpop.permute.xlu0 %1165
      %1167 = vrot.lane.b32.xlu0 %v226, 125
      %v1168 = vpop.permute.xlu0 %1167
      %1169 = vrot.lane.b32.xlu0 %v227, 125
      %v1170 = vpop.permute.xlu0 %1169
      %1171 = vrot.lane.b32.xlu0 %v228, 125
      %v1172 = vpop.permute.xlu0 %1171
      %1173 = vrot.lane.b32.xlu0 %v229, 125
      %v1174 = vpop.permute.xlu0 %1173
      %v1180 = vsel %vm298, %v1141, 0
      %v1183 = vsel %vm298, %v1142, 0
      %v1186 = vsel %vm298, %v1143, 0
      %v1189 = vsel %vm298, %v1144, 0
      %v1192 = vsel %vm298, %v1145, 0
      %v1195 = vsel %vm298, %v1146, 0
      %v1198 = vsel %vm298, %v1147, 0
      %v1201 = vsel %vm298, %v1148, 0
      %v1204 = vsel %vm298, %v1149, 0
      %v1207 = vsel %vm298, %v1150, 0
      %v1210 = vsel %vm298, %v1151, 0
      %v1213 = vsel %vm298, %v1152, 0
      %v1216 = vsel %vm298, %v1153, 0
      %v1219 = vsel %vm298, %v1154, 0
      %v1222 = vsel %vm298, %v1155, 0
      %v1225 = vsel %vm298, %v1156, 0
      %v1228 = vsel %vm298, %v1157, 0
      %v1231 = vsel %vm298, %v1158, 0
      %v1234 = vsel %vm298, %v1159, 0
      %v1237 = vsel %vm298, %v1160, 0
      %v1240 = vsel %vm298, %v1161, 0
      %v1243 = vsel %vm298, %v1162, 0
      %v1246 = vsel %vm298, %v1163, 0
      %v1249 = vsel %vm298, %v1164, 0
      %v1251 = vsel %vm371, %v1174, 0
      %1253 = vmatprep.subr.mxu0 0.0
      %1254 = vmatpush1.msra.mxu0 %v1166
      %1255 = vmatprep.subr.mxu0 0.0
      %1256 = vmatpush1.msra.mxu0 %v1168
      %1257 = vmatprep.subr.mxu0 0.0
      %1258 = vmatpush1.msra.mxu0 %v1170
      %1259 = vmatprep.subr.mxu0 0.0
      %1260 = vmatpush1.msra.mxu0 %v1172
      %1261 = vmatprep.subr.mxu0 0.0
      %1262 = vmatpush1.msra.mxu0 %v1251
      %1263 = vmatprep.subr.mxu0 0.0
      %1264 = vmatpush1.msra.mxu0 0.0
      %1265 = vmatprep.subr.mxu0 0.0
      %1266 = vmatpush1.msra.mxu0 0.0
      %1267 = vmatprep.subr.mxu0 0.0
      %1268 = vmatpush1.msra.mxu0 0.0
      %1269 = vmatprep.subr.mxu0 0.0
      %1270 = vmatpush1.msra.mxu0 0.0
      %1271 = vmatprep.subr.mxu0 0.0
      %1272 = vmatpush1.msra.mxu0 0.0
      %1273 = vmatprep.subr.mxu0 0.0
      %1274 = vmatpush1.msra.mxu0 0.0
      %1275 = vmatprep.subr.mxu0 0.0
      %1276 = vmatpush1.msra.mxu0 0.0
      %1277 = vmatprep.subr.mxu0 0.0
      %1278 = vmatpush1.msra.mxu0 0.0
      %1279 = vmatprep.subr.mxu0 0.0
      %1280 = vmatpush1.msra.mxu0 0.0
      %1281 = vmatprep.subr.mxu0 0.0
      %1282 = vmatpush1.msra.mxu0 0.0
      %1283 = vmatprep.subr.mxu0 0.0
      %1284 = vmatpush1.msra.mxu0 0.0
      %1285 = vmatprep.subr.mxu0 0.0
      %1286 = vmatpush1.msra.mxu0 0.0
      %1287 = vmatprep.subr.mxu0 0.0
      %1288 = vmatpush1.msra.mxu0 0.0
      %1289 = vmatprep.subr.mxu0 0.0
      %1290 = vmatpush1.msra.mxu0 0.0
      %1291 = vmatprep.subr.mxu0 0.0
      %1292 = vmatpush1.msra.mxu0 0.0
      %1293 = vmatprep.subr.mxu0 0.0
      %1294 = vmatpush1.msra.mxu0 0.0
      %1295 = vmatprep.subr.mxu0 0.0
      %1296 = vmatpush1.msra.mxu0 0.0
      %1297 = vmatprep.subr.mxu0 0.0
      %1298 = vmatpush1.msra.mxu0 0.0
      %1299 = vmatprep.subr.mxu0 0.0
      %1300 = vmatpush1.msra.mxu0 0.0
      %1301 = vmatprep.subr.mxu0 0.0
      %1302 = vmatpush1.msra.mxu0 0.0
      %1303 = vmatprep.subr.mxu0 0.0
      %1304 = vmatpush1.msra.mxu0 0.0
      %1305 = vmatprep.subr.mxu0 0.0
      %1306 = vmatpush1.msra.mxu0 0.0
      %1307 = vmatprep.subr.mxu0 0.0
      %1308 = vmatpush1.msra.mxu0 0.0
      %1309 = vmatprep.subr.mxu0 0.0
      %1310 = vmatpush1.msra.mxu0 0.0
      %1311 = vmatprep.subr.mxu0 0.0
      %1312 = vmatpush1.msra.mxu0 0.0
      %1313 = vmatprep.subr.mxu0 0.0
      %1314 = vmatpush1.msra.mxu0 0.0
      %1315 = vmatprep.subr.mxu0 0.0
      %1316 = vmatpush1.msra.mxu0 0.0
      %1317 = vmatprep.mubr.f32.mxu0 0.0
      %1318 = vmatmul.mubr.f32.gmra.mrb[0].mxu0 %v1180
      %v1319 = vpop.f32.mrb[0].mxu0
      %v1320 = vadd.f32 0.0, %v1319
      %v1321 = vpop.f32.mrb[0].mxu0
      %1322 = vmatprep.mubr.f32.mxu0 0.0
      %1323 = vmatmul.mubr.f32.gmra.mrb[0].mxu0 %v1183
      %v1324 = vpop.f32.mrb[0].mxu0
      %v1325 = vadd.f32 0.0, %v1324
      %v1326 = vpop.f32.mrb[0].mxu0
      %1327 = vmatprep.mubr.f32.mxu0 0.0
      %1328 = vmatmul.mubr.f32.gmra.mrb[0].mxu0 %v1186
      %v1329 = vpop.f32.mrb[0].mxu0
      %v1330 = vadd.f32 0.0, %v1329
      %v1331 = vpop.f32.mrb[0].mxu0
      %1332 = vmatprep.mubr.f32.mxu0 0.0
      %1333 = vmatmul.mubr.f32.gmra.mrb[0].mxu0 %v1189
      %v1334 = vpop.f32.mrb[0].mxu0
      %v1335 = vadd.f32 0.0, %v1334
      %v1336 = vpop.f32.mrb[0].mxu0
      %1337 = vmatprep.mubr.f32.mxu0 0.0
      %1338 = vmatmul.mubr.f32.gmra.mrb[0].mxu0 %v1192
      %v1339 = vpop.f32.mrb[0].mxu0
      %v1340 = vadd.f32 0.0, %v1339
      %v1341 = vpop.f32.mrb[0].mxu0
      %1342 = vmatprep.mubr.f32.mxu0 0.0
      %1343 = vmatmul.mubr.f32.gmra.mrb[0].mxu0 %v1195
      %v1344 = vpop.f32.mrb[0].mxu0
      %v1345 = vadd.f32 0.0, %v1344
      %v1346 = vpop.f32.mrb[0].mxu0
      %1347 = vmatprep.mubr.f32.mxu0 0.0
      %1348 = vmatmul.mubr.f32.gmra.mrb[0].mxu0 %v1198
      %v1349 = vpop.f32.mrb[0].mxu0
      %v1350 = vadd.f32 0.0, %v1349
      %v1351 = vpop.f32.mrb[0].mxu0
      %1352 = vmatprep.mubr.f32.mxu0 0.0
      %1353 = vmatmul.mubr.f32.gmra.mrb[0].mxu0 %v1201
      %v1354 = vpop.f32.mrb[0].mxu0
      %v1355 = vadd.f32 0.0, %v1354
      %v1356 = vpop.f32.mrb[0].mxu0
      %1357 = vmatprep.mubr.f32.mxu0 0.0
      %1358 = vmatmul.mubr.f32.gmra.mrb[0].mxu0 %v1204
      %v1359 = vpop.f32.mrb[0].mxu0
      %v1360 = vadd.f32 0.0, %v1359
      %v1361 = vpop.f32.mrb[0].mxu0
      %1362 = vmatprep.mubr.f32.mxu0 0.0
      %1363 = vmatmul.mubr.f32.gmra.mrb[0].mxu0 %v1207
      %v1364 = vpop.f32.mrb[0].mxu0
      %v1365 = vadd.f32 0.0, %v1364
      %v1366 = vpop.f32.mrb[0].mxu0
      %1367 = vmatprep.mubr.f32.mxu0 0.0
      %1368 = vmatmul.mubr.f32.gmra.mrb[0].mxu0 %v1210
      %v1369 = vpop.f32.mrb[0].mxu0
      %v1370 = vadd.f32 0.0, %v1369
      %v1371 = vpop.f32.mrb[0].mxu0
      %1372 = vmatprep.mubr.f32.mxu0 0.0
      %1373 = vmatmul.mubr.f32.gmra.mrb[0].mxu0 %v1213
      %v1374 = vpop.f32.mrb[0].mxu0
      %v1375 = vadd.f32 0.0, %v1374
      %v1376 = vpop.f32.mrb[0].mxu0
      %1377 = vmatprep.mubr.f32.mxu0 0.0
      %1378 = vmatmul.mubr.f32.gmra.mrb[0].mxu0 %v1216
      %v1379 = vpop.f32.mrb[0].mxu0
      %v1380 = vadd.f32 0.0, %v1379
      %v1381 = vpop.f32.mrb[0].mxu0
      %1382 = vmatprep.mubr.f32.mxu0 0.0
      %1383 = vmatmul.mubr.f32.gmra.mrb[0].mxu0 %v1219
      %v1384 = vpop.f32.mrb[0].mxu0
      %v1385 = vadd.f32 0.0, %v1384
      %v1386 = vpop.f32.mrb[0].mxu0
      %1387 = vmatprep.mubr.f32.mxu0 0.0
      %1388 = vmatmul.mubr.f32.gmra.mrb[0].mxu0 %v1222
      %v1389 = vpop.f32.mrb[0].mxu0
      %v1390 = vadd.f32 0.0, %v1389
      %v1391 = vpop.f32.mrb[0].mxu0
      %1392 = vmatprep.mubr.f32.mxu0 0.0
      %1393 = vmatmul.mubr.f32.gmra.mrb[0].mxu0 %v1225
      %v1394 = vpop.f32.mrb[0].mxu0
      %v1395 = vadd.f32 0.0, %v1394
      %v1396 = vpop.f32.mrb[0].mxu0
      %1397 = vmatprep.mubr.f32.mxu0 0.0
      %1398 = vmatmul.mubr.f32.gmra.mrb[0].mxu0 %v1228
      %v1399 = vpop.f32.mrb[0].mxu0
      %v1400 = vadd.f32 0.0, %v1399
      %v1401 = vpop.f32.mrb[0].mxu0
      %1402 = vmatprep.mubr.f32.mxu0 0.0
      %1403 = vmatmul.mubr.f32.gmra.mrb[0].mxu0 %v1231
      %v1404 = vpop.f32.mrb[0].mxu0
      %v1405 = vadd.f32 0.0, %v1404
      %v1406 = vpop.f32.mrb[0].mxu0
      %1407 = vmatprep.mubr.f32.mxu0 0.0
      %1408 = vmatmul.mubr.f32.gmra.mrb[0].mxu0 %v1234
      %v1409 = vpop.f32.mrb[0].mxu0
      %v1410 = vadd.f32 0.0, %v1409
      %v1411 = vpop.f32.mrb[0].mxu0
      %1412 = vmatprep.mubr.f32.mxu0 0.0
      %1413 = vmatmul.mubr.f32.gmra.mrb[0].mxu0 %v1237
      %v1414 = vpop.f32.mrb[0].mxu0
      %v1415 = vadd.f32 0.0, %v1414
      %v1416 = vpop.f32.mrb[0].mxu0
      %1417 = vmatprep.mubr.f32.mxu0 0.0
      %1418 = vmatmul.mubr.f32.gmra.mrb[0].mxu0 %v1240
      %v1419 = vpop.f32.mrb[0].mxu0
      %v1420 = vadd.f32 0.0, %v1419
      %v1421 = vpop.f32.mrb[0].mxu0
      %1422 = vmatprep.mubr.f32.mxu0 0.0
      %1423 = vmatmul.mubr.f32.gmra.mrb[0].mxu0 %v1243
      %v1424 = vpop.f32.mrb[0].mxu0
      %v1425 = vadd.f32 0.0, %v1424
      %v1426 = vpop.f32.mrb[0].mxu0
      %1427 = vmatprep.mubr.f32.mxu0 0.0
      %1428 = vmatmul.mubr.f32.gmra.mrb[0].mxu0 %v1246
      %v1429 = vpop.f32.mrb[0].mxu0
      %v1430 = vadd.f32 0.0, %v1429
      %v1431 = vpop.f32.mrb[0].mxu0
      %1432 = vmatprep.mubr.f32.mxu0 0.0
      %1433 = vmatmul.mubr.f32.gmra.mrb[0].mxu0 %v1249
      %v1434 = vpop.f32.mrb[0].mxu0
      %v1435 = vadd.f32 0.0, %v1434
      %v1436 = vpop.f32.mrb[0].mxu0
      %1437 = vdwg.mxu0
      %v1438 = vadd.f32 %v1116, %v1320
      %v1439 = vadd.f32 %v1117, %v1325
      %v1440 = vadd.f32 %v1118, %v1330
      %v1441 = vadd.f32 %v1119, %v1335
      %v1442 = vadd.f32 %v1120, %v1340
      %v1443 = vadd.f32 %v1121, %v1345
      %v1444 = vadd.f32 %v1122, %v1350
      %v1445 = vadd.f32 %v1123, %v1355
      %v1446 = vadd.f32 %v1124, %v1360
      %v1447 = vadd.f32 %v1125, %v1365
      %v1448 = vadd.f32 %v1126, %v1370
      %v1449 = vadd.f32 %v1127, %v1375
      %v1450 = vadd.f32 %v1128, %v1380
      %v1451 = vadd.f32 %v1129, %v1385
      %v1452 = vadd.f32 %v1130, %v1390
      %v1453 = vadd.f32 %v1131, %v1395
      %v1454 = vadd.f32 %v1132, %v1400
      %v1455 = vadd.f32 %v1133, %v1405
      %v1456 = vadd.f32 %v1134, %v1410
      %v1457 = vadd.f32 %v1135, %v1415
      %v1458 = vadd.f32 %v1136, %v1420
      %v1459 = vadd.f32 %v1137, %v1425
      %v1460 = vadd.f32 %v1138, %v1430
      %v1461 = vadd.f32 %v1139, %v1435
      %s1462 = scalar_lea.vmem %s1, 768
      %v1463 = vld [vmem:[%s1462] sm:$0xff]
      %v1464 = vld [vmem:[%s1462 + $0x8] sm:$0xff]
      %v1465 = vld [vmem:[%s1462 + $0x10] sm:$0xff]
      %v1466 = vld [vmem:[%s1462 + $0x18] sm:$0xff]
      %v1467 = vld [vmem:[%s1462 + $0x20] sm:$0xff]
      %v1468 = vld [vmem:[%s1462 + $0x28] sm:$0xff]
      %v1469 = vld [vmem:[%s1462 + $0x30] sm:$0xff]
      %v1470 = vld [vmem:[%s1462 + $0x38] sm:$0xff]
      %v1471 = vld [vmem:[%s1462 + $0x40] sm:$0xff]
      %v1472 = vld [vmem:[%s1462 + $0x48] sm:$0xff]
      %v1473 = vld [vmem:[%s1462 + $0x50] sm:$0xff]
      %v1474 = vld [vmem:[%s1462 + $0x58] sm:$0xff]
      %v1475 = vld [vmem:[%s1462 + $0x60] sm:$0xff]
      %v1476 = vld [vmem:[%s1462 + $0x68] sm:$0xff]
      %v1477 = vld [vmem:[%s1462 + $0x70] sm:$0xff]
      %v1478 = vld [vmem:[%s1462 + $0x78] sm:$0xff]
      %v1479 = vld [vmem:[%s1462 + $0x80] sm:$0xff]
      %v1480 = vld [vmem:[%s1462 + $0x88] sm:$0xff]
      %v1481 = vld [vmem:[%s1462 + $0x90] sm:$0xff]
      %v1482 = vld [vmem:[%s1462 + $0x98] sm:$0xff]
      %v1483 = vld [vmem:[%s1462 + $0xa0] sm:$0xff]
      %v1484 = vld [vmem:[%s1462 + $0xa8] sm:$0xff]
      %v1485 = vld [vmem:[%s1462 + $0xb0] sm:$0xff]
      %v1486 = vld [vmem:[%s1462 + $0xb8] sm:$0xff]
      %1487 = vrot.lane.b32.xlu0 %v225, 124
      %v1488 = vpop.permute.xlu0 %1487
      %1489 = vrot.lane.b32.xlu0 %v226, 124
      %v1490 = vpop.permute.xlu0 %1489
      %1491 = vrot.lane.b32.xlu0 %v227, 124
      %v1492 = vpop.permute.xlu0 %1491
      %1493 = vrot.lane.b32.xlu0 %v228, 124
      %v1494 = vpop.permute.xlu0 %1493
      %1495 = vrot.lane.b32.xlu0 %v229, 124
      %v1496 = vpop.permute.xlu0 %1495
      %v1502 = vsel %vm298, %v1463, 0
      %v1505 = vsel %vm298, %v1464, 0
      %v1508 = vsel %vm298, %v1465, 0
      %v1511 = vsel %vm298, %v1466, 0
      %v1514 = vsel %vm298, %v1467, 0
      %v1517 = vsel %vm298, %v1468, 0
      %v1520 = vsel %vm298, %v1469, 0
      %v1523 = vsel %vm298, %v1470, 0
      %v1526 = vsel %vm298, %v1471, 0
      %v1529 = vsel %vm298, %v1472, 0
      %v1532 = vsel %vm298, %v1473, 0
      %v1535 = vsel %vm298, %v1474, 0
      %v1538 = vsel %vm298, %v1475, 0
      %v1541 = vsel %vm298, %v1476, 0
      %v1544 = vsel %vm298, %v1477, 0
      %v1547 = vsel %vm298, %v1478, 0
      %v1550 = vsel %vm298, %v1479, 0
      %v1553 = vsel %vm298, %v1480, 0
      %v1556 = vsel %vm298, %v1481, 0
      %v1559 = vsel %vm298, %v1482, 0
      %v1562 = vsel %vm298, %v1483, 0
      %v1565 = vsel %vm298, %v1484, 0
      %v1568 = vsel %vm298, %v1485, 0
      %v1571 = vsel %vm298, %v1486, 0
      %v1573 = vsel %vm371, %v1496, 0
      %1575 = vmatprep.subr.mxu0 0.0
      %1576 = vmatpush1.msra.mxu0 %v1488
      %1577 = vmatprep.subr.mxu0 0.0
      %1578 = vmatpush1.msra.mxu0 %v1490
      %1579 = vmatprep.subr.mxu0 0.0
      %1580 = vmatpush1.msra.mxu0 %v1492
      %1581 = vmatprep.subr.mxu0 0.0
      %1582 = vmatpush1.msra.mxu0 %v1494
      %1583 = vmatprep.subr.mxu0 0.0
      %1584 = vmatpush1.msra.mxu0 %v1573
      %1585 = vmatprep.subr.mxu0 0.0
      %1586 = vmatpush1.msra.mxu0 0.0
      %1587 = vmatprep.subr.mxu0 0.0
      %1588 = vmatpush1.msra.mxu0 0.0
      %1589 = vmatprep.subr.mxu0 0.0
      %1590 = vmatpush1.msra.mxu0 0.0
      %1591 = vmatprep.subr.mxu0 0.0
      %1592 = vmatpush1.msra.mxu0 0.0
      %1593 = vmatprep.subr.mxu0 0.0
      %1594 = vmatpush1.msra.mxu0 0.0
      %1595 = vmatprep.subr.mxu0 0.0
      %1596 = vmatpush1.msra.mxu0 0.0
      %1597 = vmatprep.subr.mxu0 0.0
      %1598 = vmatpush1.msra.mxu0 0.0
      %1599 = vmatprep.subr.mxu0 0.0
      %1600 = vmatpush1.msra.mxu0 0.0
      %1601 = vmatprep.subr.mxu0 0.0
      %1602 = vmatpush1.msra.mxu0 0.0
      %1603 = vmatprep.subr.mxu0 0.0
      %1604 = vmatpush1.msra.mxu0 0.0
      %1605 = vmatprep.subr.mxu0 0.0
      %1606 = vmatpush1.msra.mxu0 0.0
      %1607 = vmatprep.subr.mxu0 0.0
      %1608 = vmatpush1.msra.mxu0 0.0
      %1609 = vmatprep.subr.mxu0 0.0
      %1610 = vmatpush1.msra.mxu0 0.0
      %1611 = vmatprep.subr.mxu0 0.0
      %1612 = vmatpush1.msra.mxu0 0.0
      %1613 = vmatprep.subr.mxu0 0.0
      %1614 = vmatpush1.msra.mxu0 0.0
      %1615 = vmatprep.subr.mxu0 0.0
      %1616 = vmatpush1.msra.mxu0 0.0
      %1617 = vmatprep.subr.mxu0 0.0
      %1618 = vmatpush1.msra.mxu0 0.0
      %1619 = vmatprep.subr.mxu0 0.0
      %1620 = vmatpush1.msra.mxu0 0.0
      %1621 = vmatprep.subr.mxu0 0.0
      %1622 = vmatpush1.msra.mxu0 0.0
      %1623 = vmatprep.subr.mxu0 0.0
      %1624 = vmatpush1.msra.mxu0 0.0
      %1625 = vmatprep.subr.mxu0 0.0
      %1626 = vmatpush1.msra.mxu0 0.0
      %1627 = vmatprep.subr.mxu0 0.0
      %1628 = vmatpush1.msra.mxu0 0.0
      %1629 = vmatprep.subr.mxu0 0.0
      %1630 = vmatpush1.msra.mxu0 0.0
      %1631 = vmatprep.subr.mxu0 0.0
      %1632 = vmatpush1.msra.mxu0 0.0
      %1633 = vmatprep.subr.mxu0 0.0
      %1634 = vmatpush1.msra.mxu0 0.0
      %1635 = vmatprep.subr.mxu0 0.0
      %1636 = vmatpush1.msra.mxu0 0.0
      %1637 = vmatprep.subr.mxu0 0.0
      %1638 = vmatpush1.msra.mxu0 0.0
      %1639 = vmatprep.mubr.f32.mxu0 0.0
      %1640 = vmatmul.mubr.f32.gmra.mrb[0].mxu0 %v1502
      %v1641 = vpop.f32.mrb[0].mxu0
      %v1642 = vadd.f32 0.0, %v1641
      %v1643 = vpop.f32.mrb[0].mxu0
      %1644 = vmatprep.mubr.f32.mxu0 0.0
      %1645 = vmatmul.mubr.f32.gmra.mrb[0].mxu0 %v1505
      %v1646 = vpop.f32.mrb[0].mxu0
      %v1647 = vadd.f32 0.0, %v1646
      %v1648 = vpop.f32.mrb[0].mxu0
      %1649 = vmatprep.mubr.f32.mxu0 0.0
      %1650 = vmatmul.mubr.f32.gmra.mrb[0].mxu0 %v1508
      %v1651 = vpop.f32.mrb[0].mxu0
      %v1652 = vadd.f32 0.0, %v1651
      %v1653 = vpop.f32.mrb[0].mxu0
      %1654 = vmatprep.mubr.f32.mxu0 0.0
      %1655 = vmatmul.mubr.f32.gmra.mrb[0].mxu0 %v1511
      %v1656 = vpop.f32.mrb[0].mxu0
      %v1657 = vadd.f32 0.0, %v1656
      %v1658 = vpop.f32.mrb[0].mxu0
      %1659 = vmatprep.mubr.f32.mxu0 0.0
      %1660 = vmatmul.mubr.f32.gmra.mrb[0].mxu0 %v1514
      %v1661 = vpop.f32.mrb[0].mxu0
      %v1662 = vadd.f32 0.0, %v1661
      %v1663 = vpop.f32.mrb[0].mxu0
      %1664 = vmatprep.mubr.f32.mxu0 0.0
      %1665 = vmatmul.mubr.f32.gmra.mrb[0].mxu0 %v1517
      %v1666 = vpop.f32.mrb[0].mxu0
      %v1667 = vadd.f32 0.0, %v1666
      %v1668 = vpop.f32.mrb[0].mxu0
      %1669 = vmatprep.mubr.f32.mxu0 0.0
      %1670 = vmatmul.mubr.f32.gmra.mrb[0].mxu0 %v1520
      %v1671 = vpop.f32.mrb[0].mxu0
      %v1672 = vadd.f32 0.0, %v1671
      %v1673 = vpop.f32.mrb[0].mxu0
      %1674 = vmatprep.mubr.f32.mxu0 0.0
      %1675 = vmatmul.mubr.f32.gmra.mrb[0].mxu0 %v1523
      %v1676 = vpop.f32.mrb[0].mxu0
      %v1677 = vadd.f32 0.0, %v1676
      %v1678 = vpop.f32.mrb[0].mxu0
      %1679 = vmatprep.mubr.f32.mxu0 0.0
      %1680 = vmatmul.mubr.f32.gmra.mrb[0].mxu0 %v1526
      %v1681 = vpop.f32.mrb[0].mxu0
      %v1682 = vadd.f32 0.0, %v1681
      %v1683 = vpop.f32.mrb[0].mxu0
      %1684 = vmatprep.mubr.f32.mxu0 0.0
      %1685 = vmatmul.mubr.f32.gmra.mrb[0].mxu0 %v1529
      %v1686 = vpop.f32.mrb[0].mxu0
      %v1687 = vadd.f32 0.0, %v1686
      %v1688 = vpop.f32.mrb[0].mxu0
      %1689 = vmatprep.mubr.f32.mxu0 0.0
      %1690 = vmatmul.mubr.f32.gmra.mrb[0].mxu0 %v1532
      %v1691 = vpop.f32.mrb[0].mxu0
      %v1692 = vadd.f32 0.0, %v1691
      %v1693 = vpop.f32.mrb[0].mxu0
      %1694 = vmatprep.mubr.f32.mxu0 0.0
      %1695 = vmatmul.mubr.f32.gmra.mrb[0].mxu0 %v1535
      %v1696 = vpop.f32.mrb[0].mxu0
      %v1697 = vadd.f32 0.0, %v1696
      %v1698 = vpop.f32.mrb[0].mxu0
      %1699 = vmatprep.mubr.f32.mxu0 0.0
      %1700 = vmatmul.mubr.f32.gmra.mrb[0].mxu0 %v1538
      %v1701 = vpop.f32.mrb[0].mxu0
      %v1702 = vadd.f32 0.0, %v1701
      %v1703 = vpop.f32.mrb[0].mxu0
      %1704 = vmatprep.mubr.f32.mxu0 0.0
      %1705 = vmatmul.mubr.f32.gmra.mrb[0].mxu0 %v1541
      %v1706 = vpop.f32.mrb[0].mxu0
      %v1707 = vadd.f32 0.0, %v1706
      %v1708 = vpop.f32.mrb[0].mxu0
      %1709 = vmatprep.mubr.f32.mxu0 0.0
      %1710 = vmatmul.mubr.f32.gmra.mrb[0].mxu0 %v1544
      %v1711 = vpop.f32.mrb[0].mxu0
      %v1712 = vadd.f32 0.0, %v1711
      %v1713 = vpop.f32.mrb[0].mxu0
      %1714 = vmatprep.mubr.f32.mxu0 0.0
      %1715 = vmatmul.mubr.f32.gmra.mrb[0].mxu0 %v1547
      %v1716 = vpop.f32.mrb[0].mxu0
      %v1717 = vadd.f32 0.0, %v1716
      %v1718 = vpop.f32.mrb[0].mxu0
      %1719 = vmatprep.mubr.f32.mxu0 0.0
      %1720 = vmatmul.mubr.f32.gmra.mrb[0].mxu0 %v1550
      %v1721 = vpop.f32.mrb[0].mxu0
      %v1722 = vadd.f32 0.0, %v1721
      %v1723 = vpop.f32.mrb[0].mxu0
      %1724 = vmatprep.mubr.f32.mxu0 0.0
      %1725 = vmatmul.mubr.f32.gmra.mrb[0].mxu0 %v1553
      %v1726 = vpop.f32.mrb[0].mxu0
      %v1727 = vadd.f32 0.0, %v1726
      %v1728 = vpop.f32.mrb[0].mxu0
      %1729 = vmatprep.mubr.f32.mxu0 0.0
      %1730 = vmatmul.mubr.f32.gmra.mrb[0].mxu0 %v1556
      %v1731 = vpop.f32.mrb[0].mxu0
      %v1732 = vadd.f32 0.0, %v1731
      %v1733 = vpop.f32.mrb[0].mxu0
      %1734 = vmatprep.mubr.f32.mxu0 0.0
      %1735 = vmatmul.mubr.f32.gmra.mrb[0].mxu0 %v1559
      %v1736 = vpop.f32.mrb[0].mxu0
      %v1737 = vadd.f32 0.0, %v1736
      %v1738 = vpop.f32.mrb[0].mxu0
      %1739 = vmatprep.mubr.f32.mxu0 0.0
      %1740 = vmatmul.mubr.f32.gmra.mrb[0].mxu0 %v1562
      %v1741 = vpop.f32.mrb[0].mxu0
      %v1742 = vadd.f32 0.0, %v1741
      %v1743 = vpop.f32.mrb[0].mxu0
      %1744 = vmatprep.mubr.f32.mxu0 0.0
      %1745 = vmatmul.mubr.f32.gmra.mrb[0].mxu0 %v1565
      %v1746 = vpop.f32.mrb[0].mxu0
      %v1747 = vadd.f32 0.0, %v1746
      %v1748 = vpop.f32.mrb[0].mxu0
      %1749 = vmatprep.mubr.f32.mxu0 0.0
      %1750 = vmatmul.mubr.f32.gmra.mrb[0].mxu0 %v1568
      %v1751 = vpop.f32.mrb[0].mxu0
      %v1752 = vadd.f32 0.0, %v1751
      %v1753 = vpop.f32.mrb[0].mxu0
      %1754 = vmatprep.mubr.f32.mxu0 0.0
      %1755 = vmatmul.mubr.f32.gmra.mrb[0].mxu0 %v1571
      %v1756 = vpop.f32.mrb[0].mxu0
      %v1757 = vadd.f32 0.0, %v1756
      %v1758 = vpop.f32.mrb[0].mxu0
      %1759 = vdwg.mxu0
      %v1760 = vadd.f32 %v1438, %v1642
      %v1761 = vadd.f32 %v1439, %v1647
      %v1762 = vadd.f32 %v1440, %v1652
      %v1763 = vadd.f32 %v1441, %v1657
      %v1764 = vadd.f32 %v1442, %v1662
      %v1765 = vadd.f32 %v1443, %v1667
      %v1766 = vadd.f32 %v1444, %v1672
      %v1767 = vadd.f32 %v1445, %v1677
      %v1768 = vadd.f32 %v1446, %v1682
      %v1769 = vadd.f32 %v1447, %v1687
      %v1770 = vadd.f32 %v1448, %v1692
      %v1771 = vadd.f32 %v1449, %v1697
      %v1772 = vadd.f32 %v1450, %v1702
      %v1773 = vadd.f32 %v1451, %v1707
      %v1774 = vadd.f32 %v1452, %v1712
      %v1775 = vadd.f32 %v1453, %v1717
      %v1776 = vadd.f32 %v1454, %v1722
      %v1777 = vadd.f32 %v1455, %v1727
      %v1778 = vadd.f32 %v1456, %v1732
      %v1779 = vadd.f32 %v1457, %v1737
      %v1780 = vadd.f32 %v1458, %v1742
      %v1781 = vadd.f32 %v1459, %v1747
      %v1782 = vadd.f32 %v1460, %v1752
      %v1783 = vadd.f32 %v1461, %v1757
      %v1784 = vld [vmem:[%s2] sm:$0xff]
      %v1785 = vld [vmem:[%s2 + $0x8] sm:$0xff]
      %v1786 = vld [vmem:[%s2 + $0x10] sm:$0xff]
      %v1787 = vld [vmem:[%s2 + $0x18] sm:$0xff]
      %v1788 = vld [vmem:[%s2 + $0x20] sm:$0xff]
      %v1789 = vld [vmem:[%s2 + $0x28] sm:$0xff]
      %v1790 = vld [vmem:[%s2 + $0x30] sm:$0xff]
      %v1791 = vld [vmem:[%s2 + $0x38] sm:$0xff]
      %v1792 = vld [vmem:[%s2 + $0x40] sm:$0xff]
      %v1793 = vld [vmem:[%s2 + $0x48] sm:$0xff]
      %v1794 = vld [vmem:[%s2 + $0x50] sm:$0xff]
      %v1795 = vld [vmem:[%s2 + $0x58] sm:$0xff]
      %v1796 = vld [vmem:[%s2 + $0x60] sm:$0xff]
      %v1797 = vld [vmem:[%s2 + $0x68] sm:$0xff]
      %v1798 = vld [vmem:[%s2 + $0x70] sm:$0xff]
      %v1799 = vld [vmem:[%s2 + $0x78] sm:$0xff]
      %v1800 = vld [vmem:[%s2 + $0x80] sm:$0xff]
      %v1801 = vld [vmem:[%s2 + $0x88] sm:$0xff]
      %v1802 = vld [vmem:[%s2 + $0x90] sm:$0xff]
      %v1803 = vld [vmem:[%s2 + $0x98] sm:$0xff]
      %v1804 = vld [vmem:[%s2 + $0xa0] sm:$0xff]
      %v1805 = vld [vmem:[%s2 + $0xa8] sm:$0xff]
      %v1806 = vld [vmem:[%s2 + $0xb0] sm:$0xff]
      %v1807 = vld [vmem:[%s2 + $0xb8] sm:$0xff]
      %1809 = vset.pattern.permute.xlu0 0
      %1810 = vperm.xlu0 %1809, %v1784
      %v1811 = vpop.permute.xlu0 %1810
      %1814 = vset.pattern.permute.xlu0 0
      %1815 = vperm.xlu0 %1814, %v1785
      %v1816 = vpop.permute.xlu0 %1815
      %1819 = vset.pattern.permute.xlu0 0
      %1820 = vperm.xlu0 %1819, %v1786
      %v1821 = vpop.permute.xlu0 %1820
      %1824 = vset.pattern.permute.xlu0 0
      %1825 = vperm.xlu0 %1824, %v1787
      %v1826 = vpop.permute.xlu0 %1825
      %1829 = vset.pattern.permute.xlu0 0
      %1830 = vperm.xlu0 %1829, %v1788
      %v1831 = vpop.permute.xlu0 %1830
      %1834 = vset.pattern.permute.xlu0 0
      %1835 = vperm.xlu0 %1834, %v1789
      %v1836 = vpop.permute.xlu0 %1835
      %1839 = vset.pattern.permute.xlu0 0
      %1840 = vperm.xlu0 %1839, %v1790
      %v1841 = vpop.permute.xlu0 %1840
      %1844 = vset.pattern.permute.xlu0 0
      %1845 = vperm.xlu0 %1844, %v1791
      %v1846 = vpop.permute.xlu0 %1845
      %1849 = vset.pattern.permute.xlu0 0
      %1850 = vperm.xlu0 %1849, %v1792
      %v1851 = vpop.permute.xlu0 %1850
      %1854 = vset.pattern.permute.xlu0 0
      %1855 = vperm.xlu0 %1854, %v1793
      %v1856 = vpop.permute.xlu0 %1855
      %1859 = vset.pattern.permute.xlu0 0
      %1860 = vperm.xlu0 %1859, %v1794
      %v1861 = vpop.permute.xlu0 %1860
      %1864 = vset.pattern.permute.xlu0 0
      %1865 = vperm.xlu0 %1864, %v1795
      %v1866 = vpop.permute.xlu0 %1865
      %1869 = vset.pattern.permute.xlu0 0
      %1870 = vperm.xlu0 %1869, %v1796
      %v1871 = vpop.permute.xlu0 %1870
      %1874 = vset.pattern.permute.xlu0 0
      %1875 = vperm.xlu0 %1874, %v1797
      %v1876 = vpop.permute.xlu0 %1875
      %1879 = vset.pattern.permute.xlu0 0
      %1880 = vperm.xlu0 %1879, %v1798
      %v1881 = vpop.permute.xlu0 %1880
      %1884 = vset.pattern.permute.xlu0 0
      %1885 = vperm.xlu0 %1884, %v1799
      %v1886 = vpop.permute.xlu0 %1885
      %1889 = vset.pattern.permute.xlu0 0
      %1890 = vperm.xlu0 %1889, %v1800
      %v1891 = vpop.permute.xlu0 %1890
      %1894 = vset.pattern.permute.xlu0 0
      %1895 = vperm.xlu0 %1894, %v1801
      %v1896 = vpop.permute.xlu0 %1895
      %1899 = vset.pattern.permute.xlu0 0
      %1900 = vperm.xlu0 %1899, %v1802
      %v1901 = vpop.permute.xlu0 %1900
      %1904 = vset.pattern.permute.xlu0 0
      %1905 = vperm.xlu0 %1904, %v1803
      %v1906 = vpop.permute.xlu0 %1905
      %1909 = vset.pattern.permute.xlu0 0
      %1910 = vperm.xlu0 %1909, %v1804
      %v1911 = vpop.permute.xlu0 %1910
      %1914 = vset.pattern.permute.xlu0 0
      %1915 = vperm.xlu0 %1914, %v1805
      %v1916 = vpop.permute.xlu0 %1915
      %1919 = vset.pattern.permute.xlu0 0
      %1920 = vperm.xlu0 %1919, %v1806
      %v1921 = vpop.permute.xlu0 %1920
      %1924 = vset.pattern.permute.xlu0 0
      %1925 = vperm.xlu0 %1924, %v1807
      %v1926 = vpop.permute.xlu0 %1925
      %v1928 = vadd.f32 %v1760, %v1811
      %v1929 = vadd.f32 %v1761, %v1816
      %v1930 = vadd.f32 %v1762, %v1821
      %v1931 = vadd.f32 %v1763, %v1826
      %v1932 = vadd.f32 %v1764, %v1831
      %v1933 = vadd.f32 %v1765, %v1836
      %v1934 = vadd.f32 %v1766, %v1841
      %v1935 = vadd.f32 %v1767, %v1846
      %v1936 = vadd.f32 %v1768, %v1851
      %v1937 = vadd.f32 %v1769, %v1856
      %v1938 = vadd.f32 %v1770, %v1861
      %v1939 = vadd.f32 %v1771, %v1866
      %v1940 = vadd.f32 %v1772, %v1871
      %v1941 = vadd.f32 %v1773, %v1876
      %v1942 = vadd.f32 %v1774, %v1881
      %v1943 = vadd.f32 %v1775, %v1886
      %v1944 = vadd.f32 %v1776, %v1891
      %v1945 = vadd.f32 %v1777, %v1896
      %v1946 = vadd.f32 %v1778, %v1901
      %v1947 = vadd.f32 %v1779, %v1906
      %v1948 = vadd.f32 %v1780, %v1911
      %v1949 = vadd.f32 %v1781, %v1916
      %v1950 = vadd.f32 %v1782, %v1921
      %v1951 = vadd.f32 %v1783, %v1926
      %v1952 = vmax.f32 %v1928, 0.0
      %v1953 = vmax.f32 %v1929, 0.0
      %v1954 = vmax.f32 %v1930, 0.0
      %v1955 = vmax.f32 %v1931, 0.0
      %v1956 = vmax.f32 %v1932, 0.0
      %v1957 = vmax.f32 %v1933, 0.0
      %v1958 = vmax.f32 %v1934, 0.0
      %v1959 = vmax.f32 %v1935, 0.0
      %v1960 = vmax.f32 %v1936, 0.0
      %v1961 = vmax.f32 %v1937, 0.0
      %v1962 = vmax.f32 %v1938, 0.0
      %v1963 = vmax.f32 %v1939, 0.0
      %v1964 = vmax.f32 %v1940, 0.0
      %v1965 = vmax.f32 %v1941, 0.0
      %v1966 = vmax.f32 %v1942, 0.0
      %v1967 = vmax.f32 %v1943, 0.0
      %v1968 = vmax.f32 %v1944, 0.0
      %v1969 = vmax.f32 %v1945, 0.0
      %v1970 = vmax.f32 %v1946, 0.0
      %v1971 = vmax.f32 %v1947, 0.0
      %v1972 = vmax.f32 %v1948, 0.0
      %v1973 = vmax.f32 %v1949, 0.0
      %v1974 = vmax.f32 %v1950, 0.0
      %v1975 = vmax.f32 %v1951, 0.0
      %vm2000 = vcmask 1046528
      %v2001 = vrot.slane %v1952, 1
      %v2002 = vrot.slane %v1953, 1
      %v2003 = vsel %vm2000, %v2001, %v2002
      %v2004 = vrot.slane %v1954, 1
      %v2005 = vsel %vm2000, %v2002, %v2004
      %v2006 = vrot.slane %v1955, 1
      %v2007 = vsel %vm2000, %v2004, %v2006
      %v2008 = vrot.slane %v1956, 1
      %v2009 = vsel %vm2000, %v2006, %v2008
      %v2010 = vrot.slane %v1957, 1
      %v2011 = vsel %vm2000, %v2008, %v2010
      %v2012 = vrot.slane %v1958, 1
      %v2013 = vsel %vm2000, %v2010, %v2012
      %v2014 = vrot.slane %v1959, 1
      %v2015 = vsel %vm2000, %v2012, %v2014
      %v2016 = vrot.slane %v1960, 1
      %v2017 = vsel %vm2000, %v2014, %v2016
      %v2018 = vrot.slane %v1961, 1
      %v2019 = vsel %vm2000, %v2016, %v2018
      %v2020 = vrot.slane %v1962, 1
      %v2021 = vsel %vm2000, %v2018, %v2020
      %v2022 = vrot.slane %v1963, 1
      %v2023 = vsel %vm2000, %v2020, %v2022
      %v2024 = vrot.slane %v1964, 1
      %v2025 = vsel %vm2000, %v2022, %v2024
      %v2026 = vrot.slane %v1965, 1
      %v2027 = vsel %vm2000, %v2024, %v2026
      %v2028 = vrot.slane %v1966, 1
      %v2029 = vsel %vm2000, %v2026, %v2028
      %v2030 = vrot.slane %v1967, 1
      %v2031 = vsel %vm2000, %v2028, %v2030
      %v2032 = vrot.slane %v1968, 1
      %v2033 = vsel %vm2000, %v2030, %v2032
      %v2034 = vrot.slane %v1969, 1
      %v2035 = vsel %vm2000, %v2032, %v2034
      %v2036 = vrot.slane %v1970, 1
      %v2037 = vsel %vm2000, %v2034, %v2036
      %v2038 = vrot.slane %v1971, 1
      %v2039 = vsel %vm2000, %v2036, %v2038
      %v2040 = vrot.slane %v1972, 1
      %v2041 = vsel %vm2000, %v2038, %v2040
      %v2042 = vrot.slane %v1973, 1
      %v2043 = vsel %vm2000, %v2040, %v2042
      %v2044 = vrot.slane %v1974, 1
      %v2045 = vsel %vm2000, %v2042, %v2044
      %v2046 = vrot.slane %v1975, 1
      %v2047 = vsel %vm2000, %v2044, %v2046
      %v2072 = vmax.f32 %v1952, %v2003
      %v2073 = vmax.f32 %v1953, %v2005
      %v2074 = vmax.f32 %v1954, %v2007
      %v2075 = vmax.f32 %v1955, %v2009
      %v2076 = vmax.f32 %v1956, %v2011
      %v2077 = vmax.f32 %v1957, %v2013
      %v2078 = vmax.f32 %v1958, %v2015
      %v2079 = vmax.f32 %v1959, %v2017
      %v2080 = vmax.f32 %v1960, %v2019
      %v2081 = vmax.f32 %v1961, %v2021
      %v2082 = vmax.f32 %v1962, %v2023
      %v2083 = vmax.f32 %v1963, %v2025
      %v2084 = vmax.f32 %v1964, %v2027
      %v2085 = vmax.f32 %v1965, %v2029
      %v2086 = vmax.f32 %v1966, %v2031
      %v2087 = vmax.f32 %v1967, %v2033
      %v2088 = vmax.f32 %v1968, %v2035
      %v2089 = vmax.f32 %v1969, %v2037
      %v2090 = vmax.f32 %v1970, %v2039
      %v2091 = vmax.f32 %v1971, %v2041
      %v2092 = vmax.f32 %v1972, %v2043
      %v2093 = vmax.f32 %v1973, %v2045
      %v2094 = vmax.f32 %v1974, %v2047
      %v2095 = vmax.f32 %v1975, %v2046
      %2120 = vrot.lane.b32.xlu0 %v2072, 127
      %v2121 = vpop.permute.xlu0 %2120
      %2122 = vrot.lane.b32.xlu0 %v2073, 127
      %v2123 = vpop.permute.xlu0 %2122
      %2124 = vrot.lane.b32.xlu0 %v2074, 127
      %v2125 = vpop.permute.xlu0 %2124
      %2126 = vrot.lane.b32.xlu0 %v2075, 127
      %v2127 = vpop.permute.xlu0 %2126
      %2128 = vrot.lane.b32.xlu0 %v2076, 127
      %v2129 = vpop.permute.xlu0 %2128
      %2130 = vrot.lane.b32.xlu0 %v2077, 127
      %v2131 = vpop.permute.xlu0 %2130
      %2132 = vrot.lane.b32.xlu0 %v2078, 127
      %v2133 = vpop.permute.xlu0 %2132
      %2134 = vrot.lane.b32.xlu0 %v2079, 127
      %v2135 = vpop.permute.xlu0 %2134
      %2136 = vrot.lane.b32.xlu0 %v2080, 127
      %v2137 = vpop.permute.xlu0 %2136
      %2138 = vrot.lane.b32.xlu0 %v2081, 127
      %v2139 = vpop.permute.xlu0 %2138
      %2140 = vrot.lane.b32.xlu0 %v2082, 127
      %v2141 = vpop.permute.xlu0 %2140
      %2142 = vrot.lane.b32.xlu0 %v2083, 127
      %v2143 = vpop.permute.xlu0 %2142
      %2144 = vrot.lane.b32.xlu0 %v2084, 127
      %v2145 = vpop.permute.xlu0 %2144
      %2146 = vrot.lane.b32.xlu0 %v2085, 127
      %v2147 = vpop.permute.xlu0 %2146
      %2148 = vrot.lane.b32.xlu0 %v2086, 127
      %v2149 = vpop.permute.xlu0 %2148
      %2150 = vrot.lane.b32.xlu0 %v2087, 127
      %v2151 = vpop.permute.xlu0 %2150
      %2152 = vrot.lane.b32.xlu0 %v2088, 127
      %v2153 = vpop.permute.xlu0 %2152
      %2154 = vrot.lane.b32.xlu0 %v2089, 127
      %v2155 = vpop.permute.xlu0 %2154
      %2156 = vrot.lane.b32.xlu0 %v2090, 127
      %v2157 = vpop.permute.xlu0 %2156
      %2158 = vrot.lane.b32.xlu0 %v2091, 127
      %v2159 = vpop.permute.xlu0 %2158
      %2160 = vrot.lane.b32.xlu0 %v2092, 127
      %v2161 = vpop.permute.xlu0 %2160
      %2162 = vrot.lane.b32.xlu0 %v2093, 127
      %v2163 = vpop.permute.xlu0 %2162
      %2164 = vrot.lane.b32.xlu0 %v2094, 127
      %v2165 = vpop.permute.xlu0 %2164
      %2166 = vrot.lane.b32.xlu0 %v2095, 127
      %v2167 = vpop.permute.xlu0 %2166
      %v2192 = vmax.f32 %v2072, %v2121
      %v2193 = vmax.f32 %v2073, %v2123
      %v2194 = vmax.f32 %v2074, %v2125
      %v2195 = vmax.f32 %v2075, %v2127
      %v2196 = vmax.f32 %v2076, %v2129
      %v2197 = vmax.f32 %v2077, %v2131
      %v2198 = vmax.f32 %v2078, %v2133
      %v2199 = vmax.f32 %v2079, %v2135
      %v2200 = vmax.f32 %v2080, %v2137
      %v2201 = vmax.f32 %v2081, %v2139
      %v2202 = vmax.f32 %v2082, %v2141
      %v2203 = vmax.f32 %v2083, %v2143
      %v2204 = vmax.f32 %v2084, %v2145
      %v2205 = vmax.f32 %v2085, %v2147
      %v2206 = vmax.f32 %v2086, %v2149
      %v2207 = vmax.f32 %v2087, %v2151
      %v2208 = vmax.f32 %v2088, %v2153
      %v2209 = vmax.f32 %v2089, %v2155
      %v2210 = vmax.f32 %v2090, %v2157
      %v2211 = vmax.f32 %v2091, %v2159
      %v2212 = vmax.f32 %v2092, %v2161
      %v2213 = vmax.f32 %v2093, %v2163
      %v2214 = vmax.f32 %v2094, %v2165
      %v2215 = vmax.f32 %v2095, %v2167
      %v2216 = vld [vmem:[%s3] sm:$0xff]
      %v2217 = vld [vmem:[%s3 + $0x8] sm:$0xff]
      %v2218 = vld [vmem:[%s3 + $0x10] sm:$0xff]
      %v2219 = vld [vmem:[%s3 + $0x18] sm:$0xff]
      %v2220 = vld [vmem:[%s3 + $0x20] sm:$0xff]
      %v2221 = vld [vmem:[%s3 + $0x28] sm:$0xff]
      %v2222 = vld [vmem:[%s3 + $0x30] sm:$0xff]
      %v2223 = vld [vmem:[%s3 + $0x38] sm:$0xff]
      %v2224 = vld [vmem:[%s3 + $0x40] sm:$0xff]
      %v2225 = vld [vmem:[%s3 + $0x48] sm:$0xff]
      %v2226 = vld [vmem:[%s3 + $0x50] sm:$0xff]
      %v2227 = vld [vmem:[%s3 + $0x58] sm:$0xff]
      %v2228 = vld [vmem:[%s3 + $0x60] sm:$0xff]
      %v2229 = vld [vmem:[%s3 + $0x68] sm:$0xff]
      %v2230 = vld [vmem:[%s3 + $0x70] sm:$0xff]
      %v2231 = vld [vmem:[%s3 + $0x78] sm:$0xff]
      %v2232 = vld [vmem:[%s3 + $0x80] sm:$0xff]
      %v2233 = vld [vmem:[%s3 + $0x88] sm:$0xff]
      %v2234 = vld [vmem:[%s3 + $0x90] sm:$0xff]
      %v2235 = vld [vmem:[%s3 + $0x98] sm:$0xff]
      %v2236 = vld [vmem:[%s3 + $0xa0] sm:$0xff]
      %v2237 = vld [vmem:[%s3 + $0xa8] sm:$0xff]
      %v2238 = vld [vmem:[%s3 + $0xb0] sm:$0xff]
      %v2239 = vld [vmem:[%s3 + $0xb8] sm:$0xff]
      %vm2240 = vcmask 515072
      %v2242 = vsel %vm2240, %v2217, 0
      %v2245 = vsel %vm2240, %v2219, 0
      %v2248 = vsel %vm2240, %v2221, 0
      %v2251 = vsel %vm2240, %v2223, 0
      %v2254 = vsel %vm2240, %v2225, 0
      %v2257 = vsel %vm2240, %v2227, 0
      %v2260 = vsel %vm2240, %v2229, 0
      %v2263 = vsel %vm2240, %v2231, 0
      %v2266 = vsel %vm2240, %v2233, 0
      %v2269 = vsel %vm2240, %v2235, 0
      %v2272 = vsel %vm2240, %v2237, 0
      %v2275 = vsel %vm2240, %v2239, 0
      %v2278 = vsel %vm2000, %v2215, 0
      %2280 = vmatprep.subr.mxu0 0.0
      %2281 = vmatpush1.msra.mxu0 %v2192
      %2282 = vmatprep.subr.mxu0 0.0
      %2283 = vmatpush1.msra.mxu0 %v2193
      %2284 = vmatprep.subr.mxu0 0.0
      %2285 = vmatpush1.msra.mxu0 %v2194
      %2286 = vmatprep.subr.mxu0 0.0
      %2287 = vmatpush1.msra.mxu0 %v2195
      %2288 = vmatprep.subr.mxu0 0.0
      %2289 = vmatpush1.msra.mxu0 %v2196
      %2290 = vmatprep.subr.mxu0 0.0
      %2291 = vmatpush1.msra.mxu0 %v2197
      %2292 = vmatprep.subr.mxu0 0.0
      %2293 = vmatpush1.msra.mxu0 %v2198
      %2294 = vmatprep.subr.mxu0 0.0
      %2295 = vmatpush1.msra.mxu0 %v2199
      %2296 = vmatprep.subr.mxu0 0.0
      %2297 = vmatpush1.msra.mxu0 %v2200
      %2298 = vmatprep.subr.mxu0 0.0
      %2299 = vmatpush1.msra.mxu0 %v2201
      %2300 = vmatprep.subr.mxu0 0.0
      %2301 = vmatpush1.msra.mxu0 %v2202
      %2302 = vmatprep.subr.mxu0 0.0
      %2303 = vmatpush1.msra.mxu0 %v2203
      %2304 = vmatprep.subr.mxu0 0.0
      %2305 = vmatpush1.msra.mxu0 %v2204
      %2306 = vmatprep.subr.mxu0 0.0
      %2307 = vmatpush1.msra.mxu0 %v2205
      %2308 = vmatprep.subr.mxu0 0.0
      %2309 = vmatpush1.msra.mxu0 %v2206
      %2310 = vmatprep.subr.mxu0 0.0
      %2311 = vmatpush1.msra.mxu0 %v2207
      %2312 = vmatprep.subr.mxu0 0.0
      %2313 = vmatpush1.msra.mxu0 %v2208
      %2314 = vmatprep.subr.mxu0 0.0
      %2315 = vmatpush1.msra.mxu0 %v2209
      %2316 = vmatprep.subr.mxu0 0.0
      %2317 = vmatpush1.msra.mxu0 %v2210
      %2318 = vmatprep.subr.mxu0 0.0
      %2319 = vmatpush1.msra.mxu0 %v2211
      %2320 = vmatprep.subr.mxu0 0.0
      %2321 = vmatpush1.msra.mxu0 %v2212
      %2322 = vmatprep.subr.mxu0 0.0
      %2323 = vmatpush1.msra.mxu0 %v2213
      %2324 = vmatprep.subr.mxu0 0.0
      %2325 = vmatpush1.msra.mxu0 %v2214
      %2326 = vmatprep.subr.mxu0 0.0
      %2327 = vmatpush1.msra.mxu0 %v2278
      %2328 = vmatprep.subr.mxu0 0.0
      %2329 = vmatpush1.msra.mxu0 0.0
      %2330 = vmatprep.subr.mxu0 0.0
      %2331 = vmatpush1.msra.mxu0 0.0
      %2332 = vmatprep.subr.mxu0 0.0
      %2333 = vmatpush1.msra.mxu0 0.0
      %2334 = vmatprep.subr.mxu0 0.0
      %2335 = vmatpush1.msra.mxu0 0.0
      %2336 = vmatprep.subr.mxu0 0.0
      %2337 = vmatpush1.msra.mxu0 0.0
      %2338 = vmatprep.subr.mxu0 0.0
      %2339 = vmatpush1.msra.mxu0 0.0
      %2340 = vmatprep.subr.mxu0 0.0
      %2341 = vmatpush1.msra.mxu0 0.0
      %2342 = vmatprep.subr.mxu0 0.0
      %2343 = vmatpush1.msra.mxu0 0.0
      %2344 = vmatprep.mubr.f32.mxu0 %v2242
      %2345 = vmatmul.mubr.f32.gmra.mrb[0].mxu0 %v2216
      %v2346 = vpop.f32.mrb[0].mxu0
      %v2347 = vadd.f32 0.0, %v2346
      %v2348 = vpop.f32.mrb[0].mxu0
      %2349 = vmatprep.mubr.f32.mxu0 %v2245
      %2350 = vmatmul.mubr.f32.gmra.mrb[0].mxu0 %v2218
      %v2351 = vpop.f32.mrb[0].mxu0
      %v2352 = vadd.f32 0.0, %v2351
      %v2353 = vpop.f32.mrb[0].mxu0
      %2354 = vmatprep.mubr.f32.mxu0 %v2248
      %2355 = vmatmul.mubr.f32.gmra.mrb[0].mxu0 %v2220
      %v2356 = vpop.f32.mrb[0].mxu0
      %v2357 = vadd.f32 0.0, %v2356
      %v2358 = vpop.f32.mrb[0].mxu0
      %2359 = vmatprep.mubr.f32.mxu0 %v2251
      %2360 = vmatmul.mubr.f32.gmra.mrb[0].mxu0 %v2222
      %v2361 = vpop.f32.mrb[0].mxu0
      %v2362 = vadd.f32 0.0, %v2361
      %v2363 = vpop.f32.mrb[0].mxu0
      %2364 = vmatprep.mubr.f32.mxu0 %v2254
      %2365 = vmatmul.mubr.f32.gmra.mrb[0].mxu0 %v2224
      %v2366 = vpop.f32.mrb[0].mxu0
      %v2367 = vadd.f32 0.0, %v2366
      %v2368 = vpop.f32.mrb[0].mxu0
      %2369 = vmatprep.mubr.f32.mxu0 %v2257
      %2370 = vmatmul.mubr.f32.gmra.mrb[0].mxu0 %v2226
      %v2371 = vpop.f32.mrb[0].mxu0
      %v2372 = vadd.f32 0.0, %v2371
      %v2373 = vpop.f32.mrb[0].mxu0
      %2374 = vmatprep.mubr.f32.mxu0 %v2260
      %2375 = vmatmul.mubr.f32.gmra.mrb[0].mxu0 %v2228
      %v2376 = vpop.f32.mrb[0].mxu0
      %v2377 = vadd.f32 0.0, %v2376
      %v2378 = vpop.f32.mrb[0].mxu0
      %2379 = vmatprep.mubr.f32.mxu0 %v2263
      %2380 = vmatmul.mubr.f32.gmra.mrb[0].mxu0 %v2230
      %v2381 = vpop.f32.mrb[0].mxu0
      %v2382 = vadd.f32 0.0, %v2381
      %v2383 = vpop.f32.mrb[0].mxu0
      %2384 = vmatprep.mubr.f32.mxu0 %v2266
      %2385 = vmatmul.mubr.f32.gmra.mrb[0].mxu0 %v2232
      %v2386 = vpop.f32.mrb[0].mxu0
      %v2387 = vadd.f32 0.0, %v2386
      %v2388 = vpop.f32.mrb[0].mxu0
      %2389 = vmatprep.mubr.f32.mxu0 %v2269
      %2390 = vmatmul.mubr.f32.gmra.mrb[0].mxu0 %v2234
      %v2391 = vpop.f32.mrb[0].mxu0
      %v2392 = vadd.f32 0.0, %v2391
      %v2393 = vpop.f32.mrb[0].mxu0
      %2394 = vmatprep.mubr.f32.mxu0 %v2272
      %2395 = vmatmul.mubr.f32.gmra.mrb[0].mxu0 %v2236
      %v2396 = vpop.f32.mrb[0].mxu0
      %v2397 = vadd.f32 0.0, %v2396
      %v2398 = vpop.f32.mrb[0].mxu0
      %2399 = vmatprep.mubr.f32.mxu0 %v2275
      %2400 = vmatmul.mubr.f32.gmra.mrb[0].mxu0 %v2238
      %v2401 = vpop.f32.mrb[0].mxu0
      %v2402 = vadd.f32 0.0, %v2401
      %v2403 = vpop.f32.mrb[0].mxu0
      %2404 = vdwg.mxu0
      %v2405 = vld [vmem:[%s4] sm:$0xff]
      %v2406 = vld [vmem:[%s4 + $0x8] sm:$0xff]
      %v2407 = vld [vmem:[%s4 + $0x10] sm:$0xff]
      %v2408 = vld [vmem:[%s4 + $0x18] sm:$0x7f]
      %vm2409 = vcmask 252928
      %v2411 = vsel %vm2409, %v2347, 0
      %v2414 = vsel %vm2409, %v2352, 0
      %v2417 = vsel %vm2409, %v2357, 0
      %v2420 = vsel %vm2409, %v2362, 0
      %v2423 = vsel %vm2409, %v2367, 0
      %v2426 = vsel %vm2409, %v2372, 0
      %v2429 = vsel %vm2409, %v2377, 0
      %v2432 = vsel %vm2409, %v2382, 0
      %v2435 = vsel %vm2409, %v2387, 0
      %v2438 = vsel %vm2409, %v2392, 0
      %v2441 = vsel %vm2409, %v2397, 0
      %v2444 = vsel %vm2409, %v2402, 0
      %v2447 = vsel %vm2000, %v2408, 0
      %2449 = vmatprep.subr.mxu0 0.0
      %2450 = vmatpush1.msra.mxu0 %v2405
      %2451 = vmatprep.subr.mxu0 0.0
      %2452 = vmatpush1.msra.mxu0 %v2406
      %2453 = vmatprep.subr.mxu0 0.0
      %2454 = vmatpush1.msra.mxu0 %v2407
      %2455 = vmatprep.subr.mxu0 0.0
      %2456 = vmatpush1.msra.mxu0 %v2447
      %2457 = vmatprep.subr.mxu0 0.0
      %2458 = vmatpush1.msra.mxu0 0.0
      %2459 = vmatprep.subr.mxu0 0.0
      %2460 = vmatpush1.msra.mxu0 0.0
      %2461 = vmatprep.subr.mxu0 0.0
      %2462 = vmatpush1.msra.mxu0 0.0
      %2463 = vmatprep.subr.mxu0 0.0
      %2464 = vmatpush1.msra.mxu0 0.0
      %2465 = vmatprep.subr.mxu0 0.0
      %2466 = vmatpush1.msra.mxu0 0.0
      %2467 = vmatprep.subr.mxu0 0.0
      %2468 = vmatpush1.msra.mxu0 0.0
      %2469 = vmatprep.subr.mxu0 0.0
      %2470 = vmatpush1.msra.mxu0 0.0
      %2471 = vmatprep.subr.mxu0 0.0
      %2472 = vmatpush1.msra.mxu0 0.0
      %2473 = vmatprep.subr.mxu0 0.0
      %2474 = vmatpush1.msra.mxu0 0.0
      %2475 = vmatprep.subr.mxu0 0.0
      %2476 = vmatpush1.msra.mxu0 0.0
      %2477 = vmatprep.subr.mxu0 0.0
      %2478 = vmatpush1.msra.mxu0 0.0
      %2479 = vmatprep.subr.mxu0 0.0
      %2480 = vmatpush1.msra.mxu0 0.0
      %2481 = vmatprep.subr.mxu0 0.0
      %2482 = vmatpush1.msra.mxu0 0.0
      %2483 = vmatprep.subr.mxu0 0.0
      %2484 = vmatpush1.msra.mxu0 0.0
      %2485 = vmatprep.subr.mxu0 0.0
      %2486 = vmatpush1.msra.mxu0 0.0
      %2487 = vmatprep.subr.mxu0 0.0
      %2488 = vmatpush1.msra.mxu0 0.0
      %2489 = vmatprep.subr.mxu0 0.0
      %2490 = vmatpush1.msra.mxu0 0.0
      %2491 = vmatprep.subr.mxu0 0.0
      %2492 = vmatpush1.msra.mxu0 0.0
      %2493 = vmatprep.subr.mxu0 0.0
      %2494 = vmatpush1.msra.mxu0 0.0
      %2495 = vmatprep.subr.mxu0 0.0
      %2496 = vmatpush1.msra.mxu0 0.0
      %2497 = vmatprep.subr.mxu0 0.0
      %2498 = vmatpush1.msra.mxu0 0.0
      %2499 = vmatprep.subr.mxu0 0.0
      %2500 = vmatpush1.msra.mxu0 0.0
      %2501 = vmatprep.subr.mxu0 0.0
      %2502 = vmatpush1.msra.mxu0 0.0
      %2503 = vmatprep.subr.mxu0 0.0
      %2504 = vmatpush1.msra.mxu0 0.0
      %2505 = vmatprep.subr.mxu0 0.0
      %2506 = vmatpush1.msra.mxu0 0.0
      %2507 = vmatprep.subr.mxu0 0.0
      %2508 = vmatpush1.msra.mxu0 0.0
      %2509 = vmatprep.subr.mxu0 0.0
      %2510 = vmatpush1.msra.mxu0 0.0
      %2511 = vmatprep.subr.mxu0 0.0
      %2512 = vmatpush1.msra.mxu0 0.0
      %2513 = vmatprep.mubr.f32.mxu0 0.0
      %2514 = vmatmul.mubr.f32.gmra.mrb[0].mxu0 %v2411
      %v2515 = vpop.f32.mrb[0].mxu0
      %v2516 = vadd.f32 0.0, %v2515
      %v2517 = vpop.f32.mrb[0].mxu0
      %2518 = vmatprep.mubr.f32.mxu0 0.0
      %2519 = vmatmul.mubr.f32.gmra.mrb[0].mxu0 %v2414
      %v2520 = vpop.f32.mrb[0].mxu0
      %v2521 = vadd.f32 0.0, %v2520
      %v2522 = vpop.f32.mrb[0].mxu0
      %2523 = vmatprep.mubr.f32.mxu0 0.0
      %2524 = vmatmul.mubr.f32.gmra.mrb[0].mxu0 %v2417
      %v2525 = vpop.f32.mrb[0].mxu0
      %v2526 = vadd.f32 0.0, %v2525
      %v2527 = vpop.f32.mrb[0].mxu0
      %2528 = vmatprep.mubr.f32.mxu0 0.0
      %2529 = vmatmul.mubr.f32.gmra.mrb[0].mxu0 %v2420
      %v2530 = vpop.f32.mrb[0].mxu0
      %v2531 = vadd.f32 0.0, %v2530
      %v2532 = vpop.f32.mrb[0].mxu0
      %2533 = vmatprep.mubr.f32.mxu0 0.0
      %2534 = vmatmul.mubr.f32.gmra.mrb[0].mxu0 %v2423
      %v2535 = vpop.f32.mrb[0].mxu0
      %v2536 = vadd.f32 0.0, %v2535
      %v2537 = vpop.f32.mrb[0].mxu0
      %2538 = vmatprep.mubr.f32.mxu0 0.0
      %2539 = vmatmul.mubr.f32.gmra.mrb[0].mxu0 %v2426
      %v2540 = vpop.f32.mrb[0].mxu0
      %v2541 = vadd.f32 0.0, %v2540
      %v2542 = vpop.f32.mrb[0].mxu0
      %2543 = vmatprep.mubr.f32.mxu0 0.0
      %2544 = vmatmul.mubr.f32.gmra.mrb[0].mxu0 %v2429
      %v2545 = vpop.f32.mrb[0].mxu0
      %v2546 = vadd.f32 0.0, %v2545
      %v2547 = vpop.f32.mrb[0].mxu0
      %2548 = vmatprep.mubr.f32.mxu0 0.0
      %2549 = vmatmul.mubr.f32.gmra.mrb[0].mxu0 %v2432
      %v2550 = vpop.f32.mrb[0].mxu0
      %v2551 = vadd.f32 0.0, %v2550
      %v2552 = vpop.f32.mrb[0].mxu0
      %2553 = vmatprep.mubr.f32.mxu0 0.0
      %2554 = vmatmul.mubr.f32.gmra.mrb[0].mxu0 %v2435
      %v2555 = vpop.f32.mrb[0].mxu0
      %v2556 = vadd.f32 0.0, %v2555
      %v2557 = vpop.f32.mrb[0].mxu0
      %2558 = vmatprep.mubr.f32.mxu0 0.0
      %2559 = vmatmul.mubr.f32.gmra.mrb[0].mxu0 %v2438
      %v2560 = vpop.f32.mrb[0].mxu0
      %v2561 = vadd.f32 0.0, %v2560
      %v2562 = vpop.f32.mrb[0].mxu0
      %2563 = vmatprep.mubr.f32.mxu0 0.0
      %2564 = vmatmul.mubr.f32.gmra.mrb[0].mxu0 %v2441
      %v2565 = vpop.f32.mrb[0].mxu0
      %v2566 = vadd.f32 0.0, %v2565
      %v2567 = vpop.f32.mrb[0].mxu0
      %2568 = vmatprep.mubr.f32.mxu0 0.0
      %2569 = vmatmul.mubr.f32.gmra.mrb[0].mxu0 %v2444
      %v2570 = vpop.f32.mrb[0].mxu0
      %v2571 = vadd.f32 0.0, %v2570
      %v2572 = vpop.f32.mrb[0].mxu0
      %2573 = vdwg.mxu0
      %vm2574 = vcmask 130048
      %2575 = vst.msk [vmem:[%s224] sm:$0xff] %vm2574, %v2516
      %2576 = vst.msk [vmem:[%s224 + $0x8] sm:$0xff] %vm2574, %v2521
      %2577 = vst.msk [vmem:[%s224 + $0x10] sm:$0xff] %vm2574, %v2526
      %2578 = vst.msk [vmem:[%s224 + $0x18] sm:$0xff] %vm2574, %v2531
      %2579 = vst.msk [vmem:[%s224 + $0x20] sm:$0xff] %vm2574, %v2536
      %2580 = vst.msk [vmem:[%s224 + $0x28] sm:$0xff] %vm2574, %v2541
      %2581 = vst.msk [vmem:[%s224 + $0x30] sm:$0xff] %vm2574, %v2546
      %2582 = vst.msk [vmem:[%s224 + $0x38] sm:$0xff] %vm2574, %v2551
      %2583 = vst.msk [vmem:[%s224 + $0x40] sm:$0xff] %vm2574, %v2556
      %2584 = vst.msk [vmem:[%s224 + $0x48] sm:$0xff] %vm2574, %v2561
      %2585 = vst.msk [vmem:[%s224 + $0x50] sm:$0xff] %vm2574, %v2566
      %2586 = vst.msk [vmem:[%s224 + $0x58] sm:$0xff] %vm2574, %v2571
      %p2587 = scmp.lt.s32.totalorder %s16, 1
      %s2588 = scalar_select %p2587, %s16, 1
      %s2589 = smul.addr %s2588, 12
      %s2590 = smul.addr %s2589, 8
      %s2591 = scalar_lea.vmem %s5, %s2590
      // Predicated region
      $region41: #{net_forward.3} parent=39 // pred_check
        %p2592 = pneg %p144
      $region42: #{net_forward.3} parent=39 // pred_check_branch
        %2594 = sbr.rel (%p2592) target = $region44
      $region43: #{net_forward.3} parent=39 // pred_region
        _
      $region44: #{net_forward.3} parent=39 // pred_fallthru
        _
    $region40: #{net_forward.3} parent=5 // pred_fallthru
      _
    %p2595 = scmp.le.s32.totalorder 2, %s11
    // Predicated region
    $region45: #{net_forward.3} parent=5 // pred_check
      %p2596 = pneg %p2595
    $region46: #{net_forward.3} parent=5 // pred_check_branch
      %2598 = sbr.rel (%p2596) target = $region48
    $region47: #{net_forward.3} parent=5 // pred_region
      %s2599 = ssub.s32 %s11, 2
      // Predicated region
      $region49: #{net_forward.3} parent=47 // pred_check
        %p2600 = pneg %p150
      $region50: #{net_forward.3} parent=47 // pred_check_branch
        %2602 = sbr.rel (%p2600) target = $region52
      $region51: #{net_forward.3} parent=47 // pred_region
        %p2603 = scmp.lt.s32.totalorder %s17, 1
        %s2604 = scalar_select %p2603, %s17, 1
        %s2605 = smul.addr %s2604, 12
        %s2606 = smul.addr %s2605, 8
        %s2607 = scalar_lea.vmem %s5, %s2606
      $region52: #{net_forward.3} parent=47 // pred_fallthru
        _
    $region48: #{net_forward.3} parent=5 // pred_fallthru
      _
  $region6: #{net_forward.3} parent=0 // loop_footer
    %s15 = sadd.s32 1, %s11
  $region7: #{net_forward.3} parent=0 // loop_footer_branch
    %10 = sbr.rel target = $region3
  $region8: #{net_forward.3} parent=0 // loop_exit
    _

// kernel: net_forward.4
$region0: #{net_forward.4}
  #allocation0 [shape = 'u32[]', space=smem, size = 0x4, offset = 0x4, fixed_abs, tag = 'smem constant byte address 0x4 - core index']
  #allocation1 [shape = 'u32[144,128]{1,0:T(1,128)}', space=vmem, size = 0x12000, scoped, tag = 'internal scratch']
  %s0 = inlined_call_operand.vmem [shape: f32[2,96,16], index: 0, kind: input, shape index: {}]
  %s1 = inlined_call_operand.vmem [shape: f32[5,192,96], index: 1, kind: input, shape index: {}]
  %s2 = inlined_call_operand.vmem [shape: f32[192,1], index: 2, kind: input, shape index: {}]
  %s3 = inlined_call_operand.vmem [shape: f32[96,191], index: 3, kind: input, shape index: {}]
  %s4 = inlined_call_operand.vmem [shape: f32[11,6], index: 4, kind: input, shape index: {}]
  %s5 = inlined_call_operand.vmem [shape: f32[2,96,6], index: 5, kind: output, shape index: {}]
  %s6 = sld [smem:[#allocation0]]
  $region53: #{net_forward.4} parent=0
    _
  %s8 = ssub.s32 1, %s6
  %s9 = scalar_select 0, %s8, %s6
  loop: start=0, step=1, limit=4
  $region2: #{net_forward.4} parent=0 // loop_pre_header
    _
  $region3: #{net_forward.4} parent=0 // loop_header
    %s11 = sphi 0, %s15
    %p12 = scmp.ge.s32.totalorder %s11, 4
    %s21 = sphi 0, %s23
    %s24 = sphi 0, %s21
    %s25 = sphi 0, %s24
    %s41 = sphi 0, %s25
    %s45 = sphi 0, %s45
    %s47 = sphi 0, %s45
    %s48 = sphi 0, %s47
    %s62 = sphi 0, %s48
    %s66 = sphi 0, %s66
    %s68 = sphi 0, %s66
    %s69 = sphi 0, %s68
    %s83 = sphi 0, %s69
    %s87 = sphi 0, %s87
    %s89 = sphi 0, %s87
    %s90 = sphi 0, %s89
    %s104 = sphi 0, %s90
    %s108 = sphi 0, %s108
    %s110 = sphi 0, %s108
    %s111 = sphi 0, %s110
    %s125 = sphi 0, %s111
    %s131 = sphi 0, %s133
    %s134 = sphi 0, %s131
    %s135 = sphi 0, %s134
    %s151 = sphi 0, %s135
  $region4: #{net_forward.4} parent=0 // loop_header_branch
    %14 = sbr.rel (%p12) target = $region8
  $region5: #{net_forward.4} parent=0 // loop_body
    %s16 = ssub.s32 %s11, 1
    %s17 = ssub.s32 %s11, 2
    %s18 = sadd.s32 %s11, 1
    %s19 = ssub.s32 %s11, %s18
    %p20 = scmp.eq.s32.totalorder %s19, 0
    %s22 = sadd.s32 %s21, 1
    %s23 = scalar_select %p20, %s21, %s22
    %p26 = pneg %p20
    %p27 = scmp.eq.s32.totalorder %s11, 1
    %p28 = por %p26, %p27
    %p29 = scmp.ne.s32.totalorder %s21, %s24
    %p30 = scmp.eq.s32.totalorder %s11, 0
    %p31 = por %p29, %p30
    %p32 = scmp.ne.s32.totalorder %s21, %s24
    %p33 = scmp.eq.s32.totalorder %s16, 1
    %p34 = por %p32, %p33
    %p35 = scmp.ne.s32.totalorder %s24, %s25
    %p36 = scmp.eq.s32.totalorder %s16, 0
    %p37 = por %p35, %p36
    %p38 = scmp.ne.s32.totalorder %s24, %s25
    %p39 = scmp.eq.s32.totalorder %s17, 1
    %p40 = por %p38, %p39
    %p42 = scmp.ne.s32.totalorder %s25, %s41
    %p43 = scmp.eq.s32.totalorder %s17, 0
    %p44 = por %p42, %p43
    %s46 = sadd.s32 %s45, 1
    %p49 = scmp.eq.s32.totalorder %s11, 1
    %p50 = scmp.ne.s32.totalorder %s45, %s47
    %p51 = scmp.eq.s32.totalorder %s11, 0
    %p52 = por %p50, %p51
    %p53 = scmp.ne.s32.totalorder %s45, %s47
    %p54 = scmp.eq.s32.totalorder %s16, 1
    %p55 = por %p53, %p54
    %p56 = scmp.ne.s32.totalorder %s47, %s48
    %p57 = scmp.eq.s32.totalorder %s16, 0
    %p58 = por %p56, %p57
    %p59 = scmp.ne.s32.totalorder %s47, %s48
    %p60 = scmp.eq.s32.totalorder %s17, 1
    %p61 = por %p59, %p60
    %p63 = scmp.ne.s32.totalorder %s48, %s62
    %p64 = scmp.eq.s32.totalorder %s17, 0
    %p65 = por %p63, %p64
    %s67 = sadd.s32 %s66, 1
    %p70 = scmp.eq.s32.totalorder %s11, 1
    %p71 = scmp.ne.s32.totalorder %s66, %s68
    %p72 = scmp.eq.s32.totalorder %s11, 0
    %p73 = por %p71, %p72
    %p74 = scmp.ne.s32.totalorder %s66, %s68
    %p75 = scmp.eq.s32.totalorder %s16, 1
    %p76 = por %p74, %p75
    %p77 = scmp.ne.s32.totalorder %s68, %s69
    %p78 = scmp.eq.s32.totalorder %s16, 0
    %p79 = por %p77, %p78
    %p80 = scmp.ne.s32.totalorder %s68, %s69
    %p81 = scmp.eq.s32.totalorder %s17, 1
    %p82 = por %p80, %p81
    %p84 = scmp.ne.s32.totalorder %s69, %s83
    %p85 = scmp.eq.s32.totalorder %s17, 0
    %p86 = por %p84, %p85
    %s88 = sadd.s32 %s87, 1
    %p91 = scmp.eq.s32.totalorder %s11, 1
    %p92 = scmp.ne.s32.totalorder %s87, %s89
    %p93 = scmp.eq.s32.totalorder %s11, 0
    %p94 = por %p92, %p93
    %p95 = scmp.ne.s32.totalorder %s87, %s89
    %p96 = scmp.eq.s32.totalorder %s16, 1
    %p97 = por %p95, %p96
    %p98 = scmp.ne.s32.totalorder %s89, %s90
    %p99 = scmp.eq.s32.totalorder %s16, 0
    %p100 = por %p98, %p99
    %p101 = scmp.ne.s32.totalorder %s89, %s90
    %p102 = scmp.eq.s32.totalorder %s17, 1
    %p103 = por %p101, %p102
    %p105 = scmp.ne.s32.totalorder %s90, %s104
    %p106 = scmp.eq.s32.totalorder %s17, 0
    %p107 = por %p105, %p106
    %s109 = sadd.s32 %s108, 1
    %p112 = scmp.eq.s32.totalorder %s11, 1
    %p113 = scmp.ne.s32.totalorder %s108, %s110
    %p114 = scmp.eq.s32.totalorder %s11, 0
    %p115 = por %p113, %p114
    %p116 = scmp.ne.s32.totalorder %s108, %s110
    %p117 = scmp.eq.s32.totalorder %s16, 1
    %p118 = por %p116, %p117
    %p119 = scmp.ne.s32.totalorder %s110, %s111
    %p120 = scmp.eq.s32.totalorder %s16, 0
    %p121 = por %p119, %p120
    %p122 = scmp.ne.s32.totalorder %s110, %s111
    %p123 = scmp.eq.s32.totalorder %s17, 1
    %p124 = por %p122, %p123
    %p126 = scmp.ne.s32.totalorder %s111, %s125
    %p127 = scmp.eq.s32.totalorder %s17, 0
    %p128 = por %p126, %p127
    %s129 = ssub.s32 %s11, %s18
    %p130 = scmp.eq.s32.totalorder %s129, 0
    %s132 = sadd.s32 %s131, 1
    %s133 = scalar_select %p130, %s131, %s132
    %p136 = pneg %p130
    %p137 = scmp.eq.s32.totalorder %s11, 1
    %p138 = por %p136, %p137
    %p139 = scmp.ne.s32.totalorder %s131, %s134
    %p140 = scmp.eq.s32.totalorder %s11, 0
    %p141 = por %p139, %p140
    %p142 = scmp.ne.s32.totalorder %s131, %s134
    %p143 = scmp.eq.s32.totalorder %s16, 1
    %p144 = por %p142, %p143
    %p145 = scmp.ne.s32.totalorder %s134, %s135
    %p146 = scmp.eq.s32.totalorder %s16, 0
    %p147 = por %p145, %p146
    %p148 = scmp.ne.s32.totalorder %s134, %s135
    %p149 = scmp.eq.s32.totalorder %s17, 1
    %p150 = por %p148, %p149
    %p152 = scmp.ne.s32.totalorder %s135, %s151
    %p153 = scmp.eq.s32.totalorder %s17, 0
    %p154 = por %p152, %p153
    %p155 = scmp.le.s32.totalorder 1, %s11
    %p156 = scmp.lt.s32.totalorder %s11, 3
    %p157 = pnand %p155, %p156
    %p158 = pneg %p157
    // Predicated region
    $region9: #{net_forward.4} parent=5 // pred_check
      _
    $region10: #{net_forward.4} parent=5 // pred_check_branch
      %160 = sbr.rel (%p157) target = $region12
    $region11: #{net_forward.4} parent=5 // pred_region
      %s161 = ssub.s32 %s11, 1
      // Predicated region
      $region13: #{net_forward.4} parent=11 // pred_check
        %p162 = pneg %p58
      $region14: #{net_forward.4} parent=11 // pred_check_branch
        %164 = sbr.rel (%p162) target = $region16
      $region15: #{net_forward.4} parent=11 // pred_region
        _
      $region16: #{net_forward.4} parent=11 // pred_fallthru
        _
      // Predicated region
      $region17: #{net_forward.4} parent=11 // pred_check
        %p165 = pneg %p79
      $region18: #{net_forward.4} parent=11 // pred_check_branch
        %167 = sbr.rel (%p165) target = $region20
      $region19: #{net_forward.4} parent=11 // pred_region
        _
      $region20: #{net_forward.4} parent=11 // pred_fallthru
        _
      // Predicated region
      $region21: #{net_forward.4} parent=11 // pred_check
        %p168 = pneg %p100
      $region22: #{net_forward.4} parent=11 // pred_check_branch
        %170 = sbr.rel (%p168) target = $region24
      $region23: #{net_forward.4} parent=11 // pred_region
        _
      $region24: #{net_forward.4} parent=11 // pred_fallthru
        _
      // Predicated region
      $region25: #{net_forward.4} parent=11 // pred_check
        %p171 = pneg %p121
      $region26: #{net_forward.4} parent=11 // pred_check_branch
        %173 = sbr.rel (%p171) target = $region28
      $region27: #{net_forward.4} parent=11 // pred_region
        _
      $region28: #{net_forward.4} parent=11 // pred_fallthru
        _
    $region12: #{net_forward.4} parent=5 // pred_fallthru
      _
    %p174 = scmp.lt.s32.totalorder %s11, 2
    // Predicated region
    $region29: #{net_forward.4} parent=5 // pred_check
      %p175 = pneg %p174
    $region30: #{net_forward.4} parent=5 // pred_check_branch
      %177 = sbr.rel (%p175) target = $region32
    $region31: #{net_forward.4} parent=5 // pred_region
      // Predicated region
      $region33: #{net_forward.4} parent=31 // pred_check
        %p178 = pneg %p31
      $region34: #{net_forward.4} parent=31 // pred_check_branch
        %180 = sbr.rel (%p178) target = $region36
      $region35: #{net_forward.4} parent=31 // pred_region
        %p181 = scmp.lt.s32.totalorder %s11, 1
        %s182 = scalar_select %p181, %s11, 1
        %s183 = smul.addr %s182, 12
        %s184 = smul.addr %s183, 8
        %s185 = scalar_lea.vmem %s0, %s184
      $region36: #{net_forward.4} parent=31 // pred_fallthru
        _
    $region32: #{net_forward.4} parent=5 // pred_fallthru
      _
    %p186 = scmp.le.s32.totalorder 1, %s11
    %p187 = scmp.lt.s32.totalorder %s11, 3
    %p188 = pnand %p186, %p187
    %p189 = pneg %p188
    // Predicated region
    $region37: #{net_forward.4} parent=5 // pred_check
      _
    $region38: #{net_forward.4} parent=5 // pred_check_branch
      %191 = sbr.rel (%p188) target = $region40
    $region39: #{net_forward.4} parent=5 // pred_region
      %s192 = ssub.s32 %s11, 1
      %p193 = scmp.lt.s32.totalorder %s16, 1
      %s194 = scalar_select %p193, %s16, 1
      %s195 = smul.addr %s194, 12
      %s196 = smul.addr %s195, 8
      %s197 = scalar_lea.vmem %s0, %s196
      %p198 = pneg %p37
      %p199 = pneg %p34
      %p200 = pneg %p58
      %p201 = pneg %p55
      %p202 = pneg %p79
      %p203 = pneg %p76
      %p204 = pneg %p100
      %p205 = pneg %p97
      %p206 = pneg %p121
      %p207 = pneg %p118
      %p208 = pneg %p147
      %p209 = pneg %p144
      %p210 = scmp.lt.s32.totalorder %s16, 1
      %s211 = scalar_select %p210, %s16, 1
      %s212 = smul.addr %s211, 12
      %s213 = smul.addr %s212, 8
      %s214 = scalar_lea.vmem %s5, %s213
      %p215 = scmp.lt.s32.totalorder %s16, 1
      %s216 = scalar_select %p215, %s16, 1
      %s217 = smul.addr %s216, 12
      %s218 = smul.addr %s217, 8
      %s219 = scalar_lea.vmem %s0, %s218
      %p220 = scmp.lt.s32.totalorder %s16, 1
      %s221 = scalar_select %p220, %s16, 1
      %s222 = smul.addr %s221, 12
      %s223 = smul.addr %s222, 8
      %s224 = scalar_lea.vmem %s5, %s223
      %v225 = vld [vmem:[%s219] sm:$0xff]
      %v226 = vld [vmem:[%s219 + $0x8] sm:$0xff]
      %v227 = vld [vmem:[%s219 + $0x10] sm:$0xff]
      %v228 = vld [vmem:[%s219 + $0x18] sm:$0xff]
      %v229 = vld [vmem:[%s219 + $0x20] sm:$0xff]
      %v230 = vld [vmem:[%s219 + $0x28] sm:$0xff]
      %v231 = vld [vmem:[%s219 + $0x30] sm:$0xff]
      %v232 = vld [vmem:[%s219 + $0x38] sm:$0xff]
      %v233 = vld [vmem:[%s219 + $0x40] sm:$0xff]
      %v234 = vld [vmem:[%s219 + $0x48] sm:$0xff]
      %v235 = vld [vmem:[%s219 + $0x50] sm:$0xff]
      %v236 = vld [vmem:[%s219 + $0x58] sm:$0xff]
      %v237 = vld [vmem:[%s1] sm:$0xff]
      %v238 = vld [vmem:[%s1 + $0x8] sm:$0xff]
      %v239 = vld [vmem:[%s1 + $0x10] sm:$0xff]
      %v240 = vld [vmem:[%s1 + $0x18] sm:$0xff]
      %v241 = vld [vmem:[%s1 + $0x20] sm:$0xff]
      %v242 = vld [vmem:[%s1 + $0x28] sm:$0xff]
      %v243 = vld [vmem:[%s1 + $0x30] sm:$0xff]
      %v244 = vld [vmem:[%s1 + $0x38] sm:$0xff]
      %v245 = vld [vmem:[%s1 + $0x40] sm:$0xff]
      %v246 = vld [vmem:[%s1 + $0x48] sm:$0xff]
      %v247 = vld [vmem:[%s1 + $0x50] sm:$0xff]
      %v248 = vld [vmem:[%s1 + $0x58] sm:$0xff]
      %v249 = vld [vmem:[%s1 + $0x60] sm:$0xff]
      %v250 = vld [vmem:[%s1 + $0x68] sm:$0xff]
      %v251 = vld [vmem:[%s1 + $0x70] sm:$0xff]
      %v252 = vld [vmem:[%s1 + $0x78] sm:$0xff]
      %v253 = vld [vmem:[%s1 + $0x80] sm:$0xff]
      %v254 = vld [vmem:[%s1 + $0x88] sm:$0xff]
      %v255 = vld [vmem:[%s1 + $0x90] sm:$0xff]
      %v256 = vld [vmem:[%s1 + $0x98] sm:$0xff]
      %v257 = vld [vmem:[%s1 + $0xa0] sm:$0xff]
      %v258 = vld [vmem:[%s1 + $0xa8] sm:$0xff]
      %v259 = vld [vmem:[%s1 + $0xb0] sm:$0xff]
      %v260 = vld [vmem:[%s1 + $0xb8] sm:$0xff]
      %s261 = scalar_lea.vmem %s1, 192
      %v262 = vld [vmem:[%s261] sm:$0xff]
      %v263 = vld [vmem:[%s261 + $0x8] sm:$0xff]
      %v264 = vld [vmem:[%s261 + $0x10] sm:$0xff]
      %v265 = vld [vmem:[%s261 + $0x18] sm:$0xff]
      %v266 = vld [vmem:[%s261 + $0x20] sm:$0xff]
      %v267 = vld [vmem:[%s261 + $0x28] sm:$0xff]
      %v268 = vld [vmem:[%s261 + $0x30] sm:$0xff]
      %v269 = vld [vmem:[%s261 + $0x38] sm:$0xff]
      %v270 = vld [vmem:[%s261 + $0x40] sm:$0xff]
      %v271 = vld [vmem:[%s261 + $0x48] sm:$0xff]
      %v272 = vld [vmem:[%s261 + $0x50] sm:$0xff]
      %v273 = vld [vmem:[%s261 + $0x58] sm:$0xff]
      %v274 = vld [vmem:[%s261 + $0x60] sm:$0xff]
      %v275 = vld [vmem:[%s261 + $0x68] sm:$0xff]
      %v276 = vld [vmem:[%s261 + $0x70] sm:$0xff]
      %v277 = vld [vmem:[%s261 + $0x78] sm:$0xff]
      %v278 = vld [vmem:[%s261 + $0x80] sm:$0xff]
      %v279 = vld [vmem:[%s261 + $0x88] sm:$0xff]
      %v280 = vld [vmem:[%s261 + $0x90] sm:$0xff]
      %v281 = vld [vmem:[%s261 + $0x98] sm:$0xff]
      %v282 = vld [vmem:[%s261 + $0xa0] sm:$0xff]
      %v283 = vld [vmem:[%s261 + $0xa8] sm:$0xff]
      %v284 = vld [vmem:[%s261 + $0xb0] sm:$0xff]
      %v285 = vld [vmem:[%s261 + $0xb8] sm:$0xff]
      %298 = vrot.lane.b32.xlu0 %v225, 127
      %v299 = vpop.permute.xlu0 %298
      %300 = vrot.lane.b32.xlu0 %v226, 127
      %v301 = vpop.permute.xlu0 %300
      %302 = vrot.lane.b32.xlu0 %v227, 127
      %v303 = vpop.permute.xlu0 %302
      %304 = vrot.lane.b32.xlu0 %v228, 127
      %v305 = vpop.permute.xlu0 %304
      %306 = vrot.lane.b32.xlu0 %v229, 127
      %v307 = vpop.permute.xlu0 %306
      %308 = vrot.lane.b32.xlu0 %v230, 127
      %v309 = vpop.permute.xlu0 %308
      %310 = vrot.lane.b32.xlu0 %v231, 127
      %v311 = vpop.permute.xlu0 %310
      %312 = vrot.lane.b32.xlu0 %v232, 127
      %v313 = vpop.permute.xlu0 %312
      %314 = vrot.lane.b32.xlu0 %v233, 127
      %v315 = vpop.permute.xlu0 %314
      %316 = vrot.lane.b32.xlu0 %v234, 127
      %v317 = vpop.permute.xlu0 %316
      %318 = vrot.lane.b32.xlu0 %v235, 127
      %v319 = vpop.permute.xlu0 %318
      %320 = vrot.lane.b32.xlu0 %v236, 127
      %v321 = vpop.permute.xlu0 %320
      %vm334 = vcmask 785408
      %v336 = vsel %vm334, %v262, 0
      %v339 = vsel %vm334, %v263, 0
      %v342 = vsel %vm334, %v264, 0
      %v345 = vsel %vm334, %v265, 0
      %v348 = vsel %vm334, %v266, 0
      %v351 = vsel %vm334, %v267, 0
      %v354 = vsel %vm334, %v268, 0
      %v357 = vsel %vm334, %v269, 0
      %v360 = vsel %vm334, %v270, 0
      %v363 = vsel %vm334, %v271, 0
      %v366 = vsel %vm334, %v272, 0
      %v369 = vsel %vm334, %v273, 0
      %v372 = vsel %vm334, %v274, 0
      %v375 = vsel %vm334, %v275, 0
      %v378 = vsel %vm334, %v276, 0
      %v381 = vsel %vm334, %v277, 0
      %v384 = vsel %vm334, %v278, 0
      %v387 = vsel %vm334, %v279, 0
      %v390 = vsel %vm334, %v280, 0
      %v393 = vsel %vm334, %v281, 0
      %v396 = vsel %vm334, %v282, 0
      %v399 = vsel %vm334, %v283, 0
      %v402 = vsel %vm334, %v284, 0
      %v405 = vsel %vm334, %v285, 0
      %407 = vmatprep.subr.mxu0 0.0
      %408 = vmatpush1.msra.mxu0 %v299
      %409 = vmatprep.subr.mxu0 0.0
      %410 = vmatpush1.msra.mxu0 %v301
      %411 = vmatprep.subr.mxu0 0.0
      %412 = vmatpush1.msra.mxu0 %v303
      %413 = vmatprep.subr.mxu0 0.0
      %414 = vmatpush1.msra.mxu0 %v305
      %415 = vmatprep.subr.mxu0 0.0
      %416 = vmatpush1.msra.mxu0 %v307
      %417 = vmatprep.subr.mxu0 0.0
      %418 = vmatpush1.msra.mxu0 %v309
      %419 = vmatprep.subr.mxu0 0.0
      %420 = vmatpush1.msra.mxu0 %v311
      %421 = vmatprep.subr.mxu0 0.0
      %422 = vmatpush1.msra.mxu0 %v313
      %423 = vmatprep.subr.mxu0 0.0
      %424 = vmatpush1.msra.mxu0 %v315
      %425 = vmatprep.subr.mxu0 0.0
      %426 = vmatpush1.msra.mxu0 %v317
      %427 = vmatprep.subr.mxu0 0.0
      %428 = vmatpush1.msra.mxu0 %v319
      %429 = vmatprep.subr.mxu0 0.0
      %430 = vmatpush1.msra.mxu0 %v321
      %431 = vmatprep.subr.mxu0 0.0
      %432 = vmatpush1.msra.mxu0 0.0
      %433 = vmatprep.subr.mxu0 0.0
      %434 = vmatpush1.msra.mxu0 0.0
      %435 = vmatprep.subr.mxu0 0.0
      %436 = vmatpush1.msra.mxu0 0.0
      %437 = vmatprep.subr.mxu0 0.0
      %438 = vmatpush1.msra.mxu0 0.0
      %439 = vmatprep.subr.mxu0 0.0
      %440 = vmatpush1.msra.mxu0 0.0
      %441 = vmatprep.subr.mxu0 0.0
      %442 = vmatpush1.msra.mxu0 0.0
      %443 = vmatprep.subr.mxu0 0.0
      %444 = vmatpush1.msra.mxu0 0.0
      %445 = vmatprep.subr.mxu0 0.0
      %446 = vmatpush1.msra.mxu0 0.0
      %447 = vmatprep.subr.mxu0 0.0
      %448 = vmatpush1.msra.mxu0 0.0
      %449 = vmatprep.subr.mxu0 0.0
      %450 = vmatpush1.msra.mxu0 0.0
      %451 = vmatprep.subr.mxu0 0.0
      %452 = vmatpush1.msra.mxu0 0.0
      %453 = vmatprep.subr.mxu0 0.0
      %454 = vmatpush1.msra.mxu0 0.0
      %455 = vmatprep.subr.mxu0 0.0
      %456 = vmatpush1.msra.mxu0 0.0
      %457 = vmatprep.subr.mxu0 0.0
      %458 = vmatpush1.msra.mxu0 0.0
      %459 = vmatprep.subr.mxu0 0.0
      %460 = vmatpush1.msra.mxu0 0.0
      %461 = vmatprep.subr.mxu0 0.0
      %462 = vmatpush1.msra.mxu0 0.0
      %463 = vmatprep.subr.mxu0 0.0
      %464 = vmatpush1.msra.mxu0 0.0
      %465 = vmatprep.subr.mxu0 0.0
      %466 = vmatpush1.msra.mxu0 0.0
      %467 = vmatprep.subr.mxu0 0.0
      %468 = vmatpush1.msra.mxu0 0.0
      %469 = vmatprep.subr.mxu0 0.0
      %470 = vmatpush1.msra.mxu0 0.0
      %471 = vmatprep.mubr.f32.mxu0 0.0
      %472 = vmatmul.mubr.f32.gmra.mrb[0].mxu0 %v336
      %v473 = vpop.f32.mrb[0].mxu0
      %v474 = vadd.f32 0.0, %v473
      %v475 = vpop.f32.mrb[0].mxu0
      %476 = vmatprep.mubr.f32.mxu0 0.0
      %477 = vmatmul.mubr.f32.gmra.mrb[0].mxu0 %v339
      %v478 = vpop.f32.mrb[0].mxu0
      %v479 = vadd.f32 0.0, %v478
      %v480 = vpop.f32.mrb[0].mxu0
      %481 = vmatprep.mubr.f32.mxu0 0.0
      %482 = vmatmul.mubr.f32.gmra.mrb[0].mxu0 %v342
      %v483 = vpop.f32.mrb[0].mxu0
      %v484 = vadd.f32 0.0, %v483
      %v485 = vpop.f32.mrb[0].mxu0
      %486 = vmatprep.mubr.f32.mxu0 0.0
      %487 = vmatmul.mubr.f32.gmra.mrb[0].mxu0 %v345
      %v488 = vpop.f32.mrb[0].mxu0
      %v489 = vadd.f32 0.0, %v488
      %v490 = vpop.f32.mrb[0].mxu0
      %491 = vmatprep.mubr.f32.mxu0 0.0
      %492 = vmatmul.mubr.f32.gmra.mrb[0].mxu0 %v348
      %v493 = vpop.f32.mrb[0].mxu0
      %v494 = vadd.f32 0.0, %v493
      %v495 = vpop.f32.mrb[0].mxu0
      %496 = vmatprep.mubr.f32.mxu0 0.0
      %497 = vmatmul.mubr.f32.gmra.mrb[0].mxu0 %v351
      %v498 = vpop.f32.mrb[0].mxu0
      %v499 = vadd.f32 0.0, %v498
      %v500 = vpop.f32.mrb[0].mxu0
      %501 = vmatprep.mubr.f32.mxu0 0.0
      %502 = vmatmul.mubr.f32.gmra.mrb[0].mxu0 %v354
      %v503 = vpop.f32.mrb[0].mxu0
      %v504 = vadd.f32 0.0, %v503
      %v505 = vpop.f32.mrb[0].mxu0
      %506 = vmatprep.mubr.f32.mxu0 0.0
      %507 = vmatmul.mubr.f32.gmra.mrb[0].mxu0 %v357
      %v508 = vpop.f32.mrb[0].mxu0
      %v509 = vadd.f32 0.0, %v508
      %v510 = vpop.f32.mrb[0].mxu0
      %511 = vmatprep.mubr.f32.mxu0 0.0
      %512 = vmatmul.mubr.f32.gmra.mrb[0].mxu0 %v360
      %v513 = vpop.f32.mrb[0].mxu0
      %v514 = vadd.f32 0.0, %v513
      %v515 = vpop.f32.mrb[0].mxu0
      %516 = vmatprep.mubr.f32.mxu0 0.0
      %517 = vmatmul.mubr.f32.gmra.mrb[0].mxu0 %v363
      %v518 = vpop.f32.mrb[0].mxu0
      %v519 = vadd.f32 0.0, %v518
      %v520 = vpop.f32.mrb[0].mxu0
      %521 = vmatprep.mubr.f32.mxu0 0.0
      %522 = vmatmul.mubr.f32.gmra.mrb[0].mxu0 %v366
      %v523 = vpop.f32.mrb[0].mxu0
      %v524 = vadd.f32 0.0, %v523
      %v525 = vpop.f32.mrb[0].mxu0
      %526 = vmatprep.mubr.f32.mxu0 0.0
      %527 = vmatmul.mubr.f32.gmra.mrb[0].mxu0 %v369
      %v528 = vpop.f32.mrb[0].mxu0
      %v529 = vadd.f32 0.0, %v528
      %v530 = vpop.f32.mrb[0].mxu0
      %531 = vmatprep.mubr.f32.mxu0 0.0
      %532 = vmatmul.mubr.f32.gmra.mrb[0].mxu0 %v372
      %v533 = vpop.f32.mrb[0].mxu0
      %v534 = vadd.f32 0.0, %v533
      %v535 = vpop.f32.mrb[0].mxu0
      %536 = vmatprep.mubr.f32.mxu0 0.0
      %537 = vmatmul.mubr.f32.gmra.mrb[0].mxu0 %v375
      %v538 = vpop.f32.mrb[0].mxu0
      %v539 = vadd.f32 0.0, %v538
      %v540 = vpop.f32.mrb[0].mxu0
      %541 = vmatprep.mubr.f32.mxu0 0.0
      %542 = vmatmul.mubr.f32.gmra.mrb[0].mxu0 %v378
      %v543 = vpop.f32.mrb[0].mxu0
      %v544 = vadd.f32 0.0, %v543
      %v545 = vpop.f32.mrb[0].mxu0
      %546 = vmatprep.mubr.f32.mxu0 0.0
      %547 = vmatmul.mubr.f32.gmra.mrb[0].mxu0 %v381
      %v548 = vpop.f32.mrb[0].mxu0
      %v549 = vadd.f32 0.0, %v548
      %v550 = vpop.f32.mrb[0].mxu0
      %551 = vmatprep.mubr.f32.mxu0 0.0
      %552 = vmatmul.mubr.f32.gmra.mrb[0].mxu0 %v384
      %v553 = vpop.f32.mrb[0].mxu0
      %v554 = vadd.f32 0.0, %v553
      %v555 = vpop.f32.mrb[0].mxu0
      %556 = vmatprep.mubr.f32.mxu0 0.0
      %557 = vmatmul.mubr.f32.gmra.mrb[0].mxu0 %v387
      %v558 = vpop.f32.mrb[0].mxu0
      %v559 = vadd.f32 0.0, %v558
      %v560 = vpop.f32.mrb[0].mxu0
      %561 = vmatprep.mubr.f32.mxu0 0.0
      %562 = vmatmul.mubr.f32.gmra.mrb[0].mxu0 %v390
      %v563 = vpop.f32.mrb[0].mxu0
      %v564 = vadd.f32 0.0, %v563
      %v565 = vpop.f32.mrb[0].mxu0
      %566 = vmatprep.mubr.f32.mxu0 0.0
      %567 = vmatmul.mubr.f32.gmra.mrb[0].mxu0 %v393
      %v568 = vpop.f32.mrb[0].mxu0
      %v569 = vadd.f32 0.0, %v568
      %v570 = vpop.f32.mrb[0].mxu0
      %571 = vmatprep.mubr.f32.mxu0 0.0
      %572 = vmatmul.mubr.f32.gmra.mrb[0].mxu0 %v396
      %v573 = vpop.f32.mrb[0].mxu0
      %v574 = vadd.f32 0.0, %v573
      %v575 = vpop.f32.mrb[0].mxu0
      %576 = vmatprep.mubr.f32.mxu0 0.0
      %577 = vmatmul.mubr.f32.gmra.mrb[0].mxu0 %v399
      %v578 = vpop.f32.mrb[0].mxu0
      %v579 = vadd.f32 0.0, %v578
      %v580 = vpop.f32.mrb[0].mxu0
      %581 = vmatprep.mubr.f32.mxu0 0.0
      %582 = vmatmul.mubr.f32.gmra.mrb[0].mxu0 %v402
      %v583 = vpop.f32.mrb[0].mxu0
      %v584 = vadd.f32 0.0, %v583
      %v585 = vpop.f32.mrb[0].mxu0
      %586 = vmatprep.mubr.f32.mxu0 0.0
      %587 = vmatmul.mubr.f32.gmra.mrb[0].mxu0 %v405
      %v588 = vpop.f32.mrb[0].mxu0
      %v589 = vadd.f32 0.0, %v588
      %v590 = vpop.f32.mrb[0].mxu0
      %591 = vdwg.mxu0
      %v593 = vsel %vm334, %v237, 0
      %v596 = vsel %vm334, %v238, 0
      %v599 = vsel %vm334, %v239, 0
      %v602 = vsel %vm334, %v240, 0
      %v605 = vsel %vm334, %v241, 0
      %v608 = vsel %vm334, %v242, 0
      %v611 = vsel %vm334, %v243, 0
      %v614 = vsel %vm334, %v244, 0
      %v617 = vsel %vm334, %v245, 0
      %v620 = vsel %vm334, %v246, 0
      %v623 = vsel %vm334, %v247, 0
      %v626 = vsel %vm334, %v248, 0
      %v629 = vsel %vm334, %v249, 0
      %v632 = vsel %vm334, %v250, 0
      %v635 = vsel %vm334, %v251, 0
      %v638 = vsel %vm334, %v252, 0
      %v641 = vsel %vm334, %v253, 0
      %v644 = vsel %vm334, %v254, 0
      %v647 = vsel %vm334, %v255, 0
      %v650 = vsel %vm334, %v256, 0
      %v653 = vsel %vm334, %v257, 0
      %v656 = vsel %vm334, %v258, 0
      %v659 = vsel %vm334, %v259, 0
      %v662 = vsel %vm334, %v260, 0
      %664 = vmatprep.subr.mxu0 0.0
      %665 = vmatpush1.msra.mxu0 %v225
      %666 = vmatprep.subr.mxu0 0.0
      %667 = vmatpush1.msra.mxu0 %v226
      %668 = vmatprep.subr.mxu0 0.0
      %669 = vmatpush1.msra.mxu0 %v227
      %670 = vmatprep.subr.mxu0 0.0
      %671 = vmatpush1.msra.mxu0 %v228
      %672 = vmatprep.subr.mxu0 0.0
      %673 = vmatpush1.msra.mxu0 %v229
      %674 = vmatprep.subr.mxu0 0.0
      %675 = vmatpush1.msra.mxu0 %v230
      %676 = vmatprep.subr.mxu0 0.0
      %677 = vmatpush1.msra.mxu0 %v231
      %678 = vmatprep.subr.mxu0 0.0
      %679 = vmatpush1.msra.mxu0 %v232
      %680 = vmatprep.subr.mxu0 0.0
      %681 = vmatpush1.msra.mxu0 %v233
      %682 = vmatprep.subr.mxu0 0.0
      %683 = vmatpush1.msra.mxu0 %v234
      %684 = vmatprep.subr.mxu0 0.0
      %685 = vmatpush1.msra.mxu0 %v235
      %686 = vmatprep.subr.mxu0 0.0
      %687 = vmatpush1.msra.mxu0 %v236
      %688 = vmatprep.subr.mxu0 0.0
      %689 = vmatpush1.msra.mxu0 0.0
      %690 = vmatprep.subr.mxu0 0.0
      %691 = vmatpush1.msra.mxu0 0.0
      %692 = vmatprep.subr.mxu0 0.0
      %693 = vmatpush1.msra.mxu0 0.0
      %694 = vmatprep.subr.mxu0 0.0
      %695 = vmatpush1.msra.mxu0 0.0
      %696 = vmatprep.subr.mxu0 0.0
      %697 = vmatpush1.msra.mxu0 0.0
      %698 = vmatprep.subr.mxu0 0.0
      %699 = vmatpush1.msra.mxu0 0.0
      %700 = vmatprep.subr.mxu0 0.0
      %701 = vmatpush1.msra.mxu0 0.0
      %702 = vmatprep.subr.mxu0 0.0
      %703 = vmatpush1.msra.mxu0 0.0
      %704 = vmatprep.subr.mxu0 0.0
      %705 = vmatpush1.msra.mxu0 0.0
      %706 = vmatprep.subr.mxu0 0.0
      %707 = vmatpush1.msra.mxu0 0.0
      %708 = vmatprep.subr.mxu0 0.0
      %709 = vmatpush1.msra.mxu0 0.0
      %710 = vmatprep.subr.mxu0 0.0
      %711 = vmatpush1.msra.mxu0 0.0
      %712 = vmatprep.subr.mxu0 0.0
      %713 = vmatpush1.msra.mxu0 0.0
      %714 = vmatprep.subr.mxu0 0.0
      %715 = vmatpush1.msra.mxu0 0.0
      %716 = vmatprep.subr.mxu0 0.0
      %717 = vmatpush1.msra.mxu0 0.0
      %718 = vmatprep.subr.mxu0 0.0
      %719 = vmatpush1.msra.mxu0 0.0
      %720 = vmatprep.subr.mxu0 0.0
      %721 = vmatpush1.msra.mxu0 0.0
      %722 = vmatprep.subr.mxu0 0.0
      %723 = vmatpush1.msra.mxu0 0.0
      %724 = vmatprep.subr.mxu0 0.0
      %725 = vmatpush1.msra.mxu0 0.0
      %726 = vmatprep.subr.mxu0 0.0
      %727 = vmatpush1.msra.mxu0 0.0
      %728 = vmatprep.mubr.f32.mxu0 0.0
      %729 = vmatmul.mubr.f32.gmra.mrb[0].mxu0 %v593
      %v730 = vpop.f32.mrb[0].mxu0
      %v731 = vadd.f32 %v474, %v730
      %v732 = vpop.f32.mrb[0].mxu0
      %733 = vmatprep.mubr.f32.mxu0 0.0
      %734 = vmatmul.mubr.f32.gmra.mrb[0].mxu0 %v596
      %v735 = vpop.f32.mrb[0].mxu0
      %v736 = vadd.f32 %v479, %v735
      %v737 = vpop.f32.mrb[0].mxu0
      %738 = vmatprep.mubr.f32.mxu0 0.0
      %739 = vmatmul.mubr.f32.gmra.mrb[0].mxu0 %v599
      %v740 = vpop.f32.mrb[0].mxu0
      %v741 = vadd.f32 %v484, %v740
      %v742 = vpop.f32.mrb[0].mxu0
      %743 = vmatprep.mubr.f32.mxu0 0.0
      %744 = vmatmul.mubr.f32.gmra.mrb[0].mxu0 %v602
      %v745 = vpop.f32.mrb[0].mxu0
      %v746 = vadd.f32 %v489, %v745
      %v747 = vpop.f32.mrb[0].mxu0
      %748 = vmatprep.mubr.f32.mxu0 0.0
      %749 = vmatmul.mubr.f32.gmra.mrb[0].mxu0 %v605
      %v750 = vpop.f32.mrb[0].mxu0
      %v751 = vadd.f32 %v494, %v750
      %v752 = vpop.f32.mrb[0].mxu0
      %753 = vmatprep.mubr.f32.mxu0 0.0
      %754 = vmatmul.mubr.f32.gmra.mrb[0].mxu0 %v608
      %v755 = vpop.f32.mrb[0].mxu0
      %v756 = vadd.f32 %v499, %v755
      %v757 = vpop.f32.mrb[0].mxu0
      %758 = vmatprep.mubr.f32.mxu0 0.0
      %759 = vmatmul.mubr.f32.gmra.mrb[0].mxu0 %v611
      %v760 = vpop.f32.mrb[0].mxu0
      %v761 = vadd.f32 %v504, %v760
      %v762 = vpop.f32.mrb[0].mxu0
      %763 = vmatprep.mubr.f32.mxu0 0.0
      %764 = vmatmul.mubr.f32.gmra.mrb[0].mxu0 %v614
      %v765 = vpop.f32.mrb[0].mxu0
      %v766 = vadd.f32 %v509, %v765
      %v767 = vpop.f32.mrb[0].mxu0
      %768 = vmatprep.mubr.f32.mxu0 0.0
      %769 = vmatmul.mubr.f32.gmra.mrb[0].mxu0 %v617
      %v770 = vpop.f32.mrb[0].mxu0
      %v771 = vadd.f32 %v514, %v770
      %v772 = vpop.f32.mrb[0].mxu0
      %773 = vmatprep.mubr.f32.mxu0 0.0
      %774 = vmatmul.mubr.f32.gmra.mrb[0].mxu0 %v620
      %v775 = vpop.f32.mrb[0].mxu0
      %v776 = vadd.f32 %v519, %v775
      %v777 = vpop.f32.mrb[0].mxu0
      %778 = vmatprep.mubr.f32.mxu0 0.0
      %779 = vmatmul.mubr.f32.gmra.mrb[0].mxu0 %v623
      %v780 = vpop.f32.mrb[0].mxu0
      %v781 = vadd.f32 %v524, %v780
      %v782 = vpop.f32.mrb[0].mxu0
      %783 = vmatprep.mubr.f32.mxu0 0.0
      %784 = vmatmul.mubr.f32.gmra.mrb[0].mxu0 %v626
      %v785 = vpop.f32.mrb[0].mxu0
      %v786 = vadd.f32 %v529, %v785
      %v787 = vpop.f32.mrb[0].mxu0
      %788 = vmatprep.mubr.f32.mxu0 0.0
      %789 = vmatmul.mubr.f32.gmra.mrb[0].mxu0 %v629
      %v790 = vpop.f32.mrb[0].mxu0
      %v791 = vadd.f32 %v534, %v790
      %v792 = vpop.f32.mrb[0].mxu0
      %793 = vmatprep.mubr.f32.mxu0 0.0
      %794 = vmatmul.mubr.f32.gmra.mrb[0].mxu0 %v632
      %v795 = vpop.f32.mrb[0].mxu0
      %v796 = vadd.f32 %v539, %v795
      %v797 = vpop.f32.mrb[0].mxu0
      %798 = vmatprep.mubr.f32.mxu0 0.0
      %799 = vmatmul.mubr.f32.gmra.mrb[0].mxu0 %v635
      %v800 = vpop.f32.mrb[0].mxu0
      %v801 = vadd.f32 %v544, %v800
      %v802 = vpop.f32.mrb[0].mxu0
      %803 = vmatprep.mubr.f32.mxu0 0.0
      %804 = vmatmul.mubr.f32.gmra.mrb[0].mxu0 %v638
      %v805 = vpop.f32.mrb[0].mxu0
      %v806 = vadd.f32 %v549, %v805
      %v807 = vpop.f32.mrb[0].mxu0
      %808 = vmatprep.mubr.f32.mxu0 0.0
      %809 = vmatmul.mubr.f32.gmra.mrb[0].mxu0 %v641
      %v810 = vpop.f32.mrb[0].mxu0
      %v811 = vadd.f32 %v554, %v810
      %v812 = vpop.f32.mrb[0].mxu0
      %813 = vmatprep.mubr.f32.mxu0 0.0
      %814 = vmatmul.mubr.f32.gmra.mrb[0].mxu0 %v644
      %v815 = vpop.f32.mrb[0].mxu0
      %v816 = vadd.f32 %v559, %v815
      %v817 = vpop.f32.mrb[0].mxu0
      %818 = vmatprep.mubr.f32.mxu0 0.0
      %819 = vmatmul.mubr.f32.gmra.mrb[0].mxu0 %v647
      %v820 = vpop.f32.mrb[0].mxu0
      %v821 = vadd.f32 %v564, %v820
      %v822 = vpop.f32.mrb[0].mxu0
      %823 = vmatprep.mubr.f32.mxu0 0.0
      %824 = vmatmul.mubr.f32.gmra.mrb[0].mxu0 %v650
      %v825 = vpop.f32.mrb[0].mxu0
      %v826 = vadd.f32 %v569, %v825
      %v827 = vpop.f32.mrb[0].mxu0
      %828 = vmatprep.mubr.f32.mxu0 0.0
      %829 = vmatmul.mubr.f32.gmra.mrb[0].mxu0 %v653
      %v830 = vpop.f32.mrb[0].mxu0
      %v831 = vadd.f32 %v574, %v830
      %v832 = vpop.f32.mrb[0].mxu0
      %833 = vmatprep.mubr.f32.mxu0 0.0
      %834 = vmatmul.mubr.f32.gmra.mrb[0].mxu0 %v656
      %v835 = vpop.f32.mrb[0].mxu0
      %v836 = vadd.f32 %v579, %v835
      %v837 = vpop.f32.mrb[0].mxu0
      %838 = vmatprep.mubr.f32.mxu0 0.0
      %839 = vmatmul.mubr.f32.gmra.mrb[0].mxu0 %v659
      %v840 = vpop.f32.mrb[0].mxu0
      %v841 = vadd.f32 %v584, %v840
      %v842 = vpop.f32.mrb[0].mxu0
      %843 = vmatprep.mubr.f32.mxu0 0.0
      %844 = vmatmul.mubr.f32.gmra.mrb[0].mxu0 %v662
      %v845 = vpop.f32.mrb[0].mxu0
      %v846 = vadd.f32 %v589, %v845
      %v847 = vpop.f32.mrb[0].mxu0
      %848 = vdwg.mxu0
      %s849 = scalar_lea.vmem %s1, 384
      %v850 = vld [vmem:[%s849] sm:$0xff]
      %v851 = vld [vmem:[%s849 + $0x8] sm:$0xff]
      %v852 = vld [vmem:[%s849 + $0x10] sm:$0xff]
      %v853 = vld [vmem:[%s849 + $0x18] sm:$0xff]
      %v854 = vld [vmem:[%s849 + $0x20] sm:$0xff]
      %v855 = vld [vmem:[%s849 + $0x28] sm:$0xff]
      %v856 = vld [vmem:[%s849 + $0x30] sm:$0xff]
      %v857 = vld [vmem:[%s849 + $0x38] sm:$0xff]
      %v858 = vld [vmem:[%s849 + $0x40] sm:$0xff]
      %v859 = vld [vmem:[%s849 + $0x48] sm:$0xff]
      %v860 = vld [vmem:[%s849 + $0x50] sm:$0xff]
      %v861 = vld [vmem:[%s849 + $0x58] sm:$0xff]
      %v862 = vld [vmem:[%s849 + $0x60] sm:$0xff]
      %v863 = vld [vmem:[%s849 + $0x68] sm:$0xff]
      %v864 = vld [vmem:[%s849 + $0x70] sm:$0xff]
      %v865 = vld [vmem:[%s849 + $0x78] sm:$0xff]
      %v866 = vld [vmem:[%s849 + $0x80] sm:$0xff]
      %v867 = vld [vmem:[%s849 + $0x88] sm:$0xff]
      %v868 = vld [vmem:[%s849 + $0x90] sm:$0xff]
      %v869 = vld [vmem:[%s849 + $0x98] sm:$0xff]
      %v870 = vld [vmem:[%s849 + $0xa0] sm:$0xff]
      %v871 = vld [vmem:[%s849 + $0xa8] sm:$0xff]
      %v872 = vld [vmem:[%s849 + $0xb0] sm:$0xff]
      %v873 = vld [vmem:[%s849 + $0xb8] sm:$0xff]
      %874 = vrot.lane.b32.xlu0 %v225, 126
      %v875 = vpop.permute.xlu0 %874
      %876 = vrot.lane.b32.xlu0 %v226, 126
      %v877 = vpop.permute.xlu0 %876
      %878 = vrot.lane.b32.xlu0 %v227, 126
      %v879 = vpop.permute.xlu0 %878
      %880 = vrot.lane.b32.xlu0 %v228, 126
      %v881 = vpop.permute.xlu0 %880
      %882 = vrot.lane.b32.xlu0 %v229, 126
      %v883 = vpop.permute.xlu0 %882
      %884 = vrot.lane.b32.xlu0 %v230, 126
      %v885 = vpop.permute.xlu0 %884
      %886 = vrot.lane.b32.xlu0 %v231, 126
      %v887 = vpop.permute.xlu0 %886
      %888 = vrot.lane.b32.xlu0 %v232, 126
      %v889 = vpop.permute.xlu0 %888
      %890 = vrot.lane.b32.xlu0 %v233, 126
      %v891 = vpop.permute.xlu0 %890
      %892 = vrot.lane.b32.xlu0 %v234, 126
      %v893 = vpop.permute.xlu0 %892
      %894 = vrot.lane.b32.xlu0 %v235, 126
      %v895 = vpop.permute.xlu0 %894
      %896 = vrot.lane.b32.xlu0 %v236, 126
      %v897 = vpop.permute.xlu0 %896
      %v911 = vsel %vm334, %v850, 0
      %v914 = vsel %vm334, %v851, 0
      %v917 = vsel %vm334, %v852, 0
      %v920 = vsel %vm334, %v853, 0
      %v923 = vsel %vm334, %v854, 0
      %v926 = vsel %vm334, %v855, 0
      %v929 = vsel %vm334, %v856, 0
      %v932 = vsel %vm334, %v857, 0
      %v935 = vsel %vm334, %v858, 0
      %v938 = vsel %vm334, %v859, 0
      %v941 = vsel %vm334, %v860, 0
      %v944 = vsel %vm334, %v861, 0
      %v947 = vsel %vm334, %v862, 0
      %v950 = vsel %vm334, %v863, 0
      %v953 = vsel %vm334, %v864, 0
      %v956 = vsel %vm334, %v865, 0
      %v959 = vsel %vm334, %v866, 0
      %v962 = vsel %vm334, %v867, 0
      %v965 = vsel %vm334, %v868, 0
      %v968 = vsel %vm334, %v869, 0
      %v971 = vsel %vm334, %v870, 0
      %v974 = vsel %vm334, %v871, 0
      %v977 = vsel %vm334, %v872, 0
      %v980 = vsel %vm334, %v873, 0
      %982 = vmatprep.subr.mxu0 0.0
      %983 = vmatpush1.msra.mxu0 %v875
      %984 = vmatprep.subr.mxu0 0.0
      %985 = vmatpush1.msra.mxu0 %v877
      %986 = vmatprep.subr.mxu0 0.0
      %987 = vmatpush1.msra.mxu0 %v879
      %988 = vmatprep.subr.mxu0 0.0
      %989 = vmatpush1.msra.mxu0 %v881
      %990 = vmatprep.subr.mxu0 0.0
      %991 = vmatpush1.msra.mxu0 %v883
      %992 = vmatprep.subr.mxu0 0.0
      %993 = vmatpush1.msra.mxu0 %v885
      %994 = vmatprep.subr.mxu0 0.0
      %995 = vmatpush1.msra.mxu0 %v887
      %996 = vmatprep.subr.mxu0 0.0
      %997 = vmatpush1.msra.mxu0 %v889
      %998 = vmatprep.subr.mxu0 0.0
      %999 = vmatpush1.msra.mxu0 %v891
      %1000 = vmatprep.subr.mxu0 0.0
      %1001 = vmatpush1.msra.mxu0 %v893
      %1002 = vmatprep.subr.mxu0 0.0
      %1003 = vmatpush1.msra.mxu0 %v895
      %1004 = vmatprep.subr.mxu0 0.0
      %1005 = vmatpush1.msra.mxu0 %v897
      %1006 = vmatprep.subr.mxu0 0.0
      %1007 = vmatpush1.msra.mxu0 0.0
      %1008 = vmatprep.subr.mxu0 0.0
      %1009 = vmatpush1.msra.mxu0 0.0
      %1010 = vmatprep.subr.mxu0 0.0
      %1011 = vmatpush1.msra.mxu0 0.0
      %1012 = vmatprep.subr.mxu0 0.0
      %1013 = vmatpush1.msra.mxu0 0.0
      %1014 = vmatprep.subr.mxu0 0.0
      %1015 = vmatpush1.msra.mxu0 0.0
      %1016 = vmatprep.subr.mxu0 0.0
      %1017 = vmatpush1.msra.mxu0 0.0
      %1018 = vmatprep.subr.mxu0 0.0
      %1019 = vmatpush1.msra.mxu0 0.0
      %1020 = vmatprep.subr.mxu0 0.0
      %1021 = vmatpush1.msra.mxu0 0.0
      %1022 = vmatprep.subr.mxu0 0.0
      %1023 = vmatpush1.msra.mxu0 0.0
      %1024 = vmatprep.subr.mxu0 0.0
      %1025 = vmatpush1.msra.mxu0 0.0
      %1026 = vmatprep.subr.mxu0 0.0
      %1027 = vmatpush1.msra.mxu0 0.0
      %1028 = vmatprep.subr.mxu0 0.0
      %1029 = vmatpush1.msra.mxu0 0.0
      %1030 = vmatprep.subr.mxu0 0.0
      %1031 = vmatpush1.msra.mxu0 0.0
      %1032 = vmatprep.subr.mxu0 0.0
      %1033 = vmatpush1.msra.mxu0 0.0
      %1034 = vmatprep.subr.mxu0 0.0
      %1035 = vmatpush1.msra.mxu0 0.0
      %1036 = vmatprep.subr.mxu0 0.0
      %1037 = vmatpush1.msra.mxu0 0.0
      %1038 = vmatprep.subr.mxu0 0.0
      %1039 = vmatpush1.msra.mxu0 0.0
      %1040 = vmatprep.subr.mxu0 0.0
      %1041 = vmatpush1.msra.mxu0 0.0
      %1042 = vmatprep.subr.mxu0 0.0
      %1043 = vmatpush1.msra.mxu0 0.0
      %1044 = vmatprep.subr.mxu0 0.0
      %1045 = vmatpush1.msra.mxu0 0.0
      %1046 = vmatprep.mubr.f32.mxu0 0.0
      %1047 = vmatmul.mubr.f32.gmra.mrb[0].mxu0 %v911
      %v1048 = vpop.f32.mrb[0].mxu0
      %v1049 = vadd.f32 0.0, %v1048
      %v1050 = vpop.f32.mrb[0].mxu0
      %1051 = vmatprep.mubr.f32.mxu0 0.0
      %1052 = vmatmul.mubr.f32.gmra.mrb[0].mxu0 %v914
      %v1053 = vpop.f32.mrb[0].mxu0
      %v1054 = vadd.f32 0.0, %v1053
      %v1055 = vpop.f32.mrb[0].mxu0
      %1056 = vmatprep.mubr.f32.mxu0 0.0
      %1057 = vmatmul.mubr.f32.gmra.mrb[0].mxu0 %v917
      %v1058 = vpop.f32.mrb[0].mxu0
      %v1059 = vadd.f32 0.0, %v1058
      %v1060 = vpop.f32.mrb[0].mxu0
      %1061 = vmatprep.mubr.f32.mxu0 0.0
      %1062 = vmatmul.mubr.f32.gmra.mrb[0].mxu0 %v920
      %v1063 = vpop.f32.mrb[0].mxu0
      %v1064 = vadd.f32 0.0, %v1063
      %v1065 = vpop.f32.mrb[0].mxu0
      %1066 = vmatprep.mubr.f32.mxu0 0.0
      %1067 = vmatmul.mubr.f32.gmra.mrb[0].mxu0 %v923
      %v1068 = vpop.f32.mrb[0].mxu0
      %v1069 = vadd.f32 0.0, %v1068
      %v1070 = vpop.f32.mrb[0].mxu0
      %1071 = vmatprep.mubr.f32.mxu0 0.0
      %1072 = vmatmul.mubr.f32.gmra.mrb[0].mxu0 %v926
      %v1073 = vpop.f32.mrb[0].mxu0
      %v1074 = vadd.f32 0.0, %v1073
      %v1075 = vpop.f32.mrb[0].mxu0
      %1076 = vmatprep.mubr.f32.mxu0 0.0
      %1077 = vmatmul.mubr.f32.gmra.mrb[0].mxu0 %v929
      %v1078 = vpop.f32.mrb[0].mxu0
      %v1079 = vadd.f32 0.0, %v1078
      %v1080 = vpop.f32.mrb[0].mxu0
      %1081 = vmatprep.mubr.f32.mxu0 0.0
      %1082 = vmatmul.mubr.f32.gmra.mrb[0].mxu0 %v932
      %v1083 = vpop.f32.mrb[0].mxu0
      %v1084 = vadd.f32 0.0, %v1083
      %v1085 = vpop.f32.mrb[0].mxu0
      %1086 = vmatprep.mubr.f32.mxu0 0.0
      %1087 = vmatmul.mubr.f32.gmra.mrb[0].mxu0 %v935
      %v1088 = vpop.f32.mrb[0].mxu0
      %v1089 = vadd.f32 0.0, %v1088
      %v1090 = vpop.f32.mrb[0].mxu0
      %1091 = vmatprep.mubr.f32.mxu0 0.0
      %1092 = vmatmul.mubr.f32.gmra.mrb[0].mxu0 %v938
      %v1093 = vpop.f32.mrb[0].mxu0
      %v1094 = vadd.f32 0.0, %v1093
      %v1095 = vpop.f32.mrb[0].mxu0
      %1096 = vmatprep.mubr.f32.mxu0 0.0
      %1097 = vmatmul.mubr.f32.gmra.mrb[0].mxu0 %v941
      %v1098 = vpop.f32.mrb[0].mxu0
      %v1099 = vadd.f32 0.0, %v1098
      %v1100 = vpop.f32.mrb[0].mxu0
      %1101 = vmatprep.mubr.f32.mxu0 0.0
      %1102 = vmatmul.mubr.f32.gmra.mrb[0].mxu0 %v944
      %v1103 = vpop.f32.mrb[0].mxu0
      %v1104 = vadd.f32 0.0, %v1103
      %v1105 = vpop.f32.mrb[0].mxu0
      %1106 = vmatprep.mubr.f32.mxu0 0.0
      %1107 = vmatmul.mubr.f32.gmra.mrb[0].mxu0 %v947
      %v1108 = vpop.f32.mrb[0].mxu0
      %v1109 = vadd.f32 0.0, %v1108
      %v1110 = vpop.f32.mrb[0].mxu0
      %1111 = vmatprep.mubr.f32.mxu0 0.0
      %1112 = vmatmul.mubr.f32.gmra.mrb[0].mxu0 %v950
      %v1113 = vpop.f32.mrb[0].mxu0
      %v1114 = vadd.f32 0.0, %v1113
      %v1115 = vpop.f32.mrb[0].mxu0
      %1116 = vmatprep.mubr.f32.mxu0 0.0
      %1117 = vmatmul.mubr.f32.gmra.mrb[0].mxu0 %v953
      %v1118 = vpop.f32.mrb[0].mxu0
      %v1119 = vadd.f32 0.0, %v1118
      %v1120 = vpop.f32.mrb[0].mxu0
      %1121 = vmatprep.mubr.f32.mxu0 0.0
      %1122 = vmatmul.mubr.f32.gmra.mrb[0].mxu0 %v956
      %v1123 = vpop.f32.mrb[0].mxu0
      %v1124 = vadd.f32 0.0, %v1123
      %v1125 = vpop.f32.mrb[0].mxu0
      %1126 = vmatprep.mubr.f32.mxu0 0.0
      %1127 = vmatmul.mubr.f32.gmra.mrb[0].mxu0 %v959
      %v1128 = vpop.f32.mrb[0].mxu0
      %v1129 = vadd.f32 0.0, %v1128
      %v1130 = vpop.f32.mrb[0].mxu0
      %1131 = vmatprep.mubr.f32.mxu0 0.0
      %1132 = vmatmul.mubr.f32.gmra.mrb[0].mxu0 %v962
      %v1133 = vpop.f32.mrb[0].mxu0
      %v1134 = vadd.f32 0.0, %v1133
      %v1135 = vpop.f32.mrb[0].mxu0
      %1136 = vmatprep.mubr.f32.mxu0 0.0
      %1137 = vmatmul.mubr.f32.gmra.mrb[0].mxu0 %v965
      %v1138 = vpop.f32.mrb[0].mxu0
      %v1139 = vadd.f32 0.0, %v1138
      %v1140 = vpop.f32.mrb[0].mxu0
      %1141 = vmatprep.mubr.f32.mxu0 0.0
      %1142 = vmatmul.mubr.f32.gmra.mrb[0].mxu0 %v968
      %v1143 = vpop.f32.mrb[0].mxu0
      %v1144 = vadd.f32 0.0, %v1143
      %v1145 = vpop.f32.mrb[0].mxu0
      %1146 = vmatprep.mubr.f32.mxu0 0.0
      %1147 = vmatmul.mubr.f32.gmra.mrb[0].mxu0 %v971
      %v1148 = vpop.f32.mrb[0].mxu0
      %v1149 = vadd.f32 0.0, %v1148
      %v1150 = vpop.f32.mrb[0].mxu0
      %1151 = vmatprep.mubr.f32.mxu0 0.0
      %1152 = vmatmul.mubr.f32.gmra.mrb[0].mxu0 %v974
      %v1153 = vpop.f32.mrb[0].mxu0
      %v1154 = vadd.f32 0.0, %v1153
      %v1155 = vpop.f32.mrb[0].mxu0
      %1156 = vmatprep.mubr.f32.mxu0 0.0
      %1157 = vmatmul.mubr.f32.gmra.mrb[0].mxu0 %v977
      %v1158 = vpop.f32.mrb[0].mxu0
      %v1159 = vadd.f32 0.0, %v1158
      %v1160 = vpop.f32.mrb[0].mxu0
      %1161 = vmatprep.mubr.f32.mxu0 0.0
      %1162 = vmatmul.mubr.f32.gmra.mrb[0].mxu0 %v980
      %v1163 = vpop.f32.mrb[0].mxu0
      %v1164 = vadd.f32 0.0, %v1163
      %v1165 = vpop.f32.mrb[0].mxu0
      %1166 = vdwg.mxu0
      %v1167 = vadd.f32 %v731, %v1049
      %v1168 = vadd.f32 %v736, %v1054
      %v1169 = vadd.f32 %v741, %v1059
      %v1170 = vadd.f32 %v746, %v1064
      %v1171 = vadd.f32 %v751, %v1069
      %v1172 = vadd.f32 %v756, %v1074
      %v1173 = vadd.f32 %v761, %v1079
      %v1174 = vadd.f32 %v766, %v1084
      %v1175 = vadd.f32 %v771, %v1089
      %v1176 = vadd.f32 %v776, %v1094
      %v1177 = vadd.f32 %v781, %v1099
      %v1178 = vadd.f32 %v786, %v1104
      %v1179 = vadd.f32 %v791, %v1109
      %v1180 = vadd.f32 %v796, %v1114
      %v1181 = vadd.f32 %v801, %v1119
      %v1182 = vadd.f32 %v806, %v1124
      %v1183 = vadd.f32 %v811, %v1129
      %v1184 = vadd.f32 %v816, %v1134
      %v1185 = vadd.f32 %v821, %v1139
      %v1186 = vadd.f32 %v826, %v1144
      %v1187 = vadd.f32 %v831, %v1149
      %v1188 = vadd.f32 %v836, %v1154
      %v1189 = vadd.f32 %v841, %v1159
      %v1190 = vadd.f32 %v846, %v1164
      %s1191 = scalar_lea.vmem %s1, 576
      %v1192 = vld [vmem:[%s1191] sm:$0xff]
      %v1193 = vld [vmem:[%s1191 + $0x8] sm:$0xff]
      %v1194 = vld [vmem:[%s1191 + $0x10] sm:$0xff]
      %v1195 = vld [vmem:[%s1191 + $0x18] sm:$0xff]
      %v1196 = vld [vmem:[%s1191 + $0x20] sm:$0xff]
      %v1197 = vld [vmem:[%s1191 + $0x28] sm:$0xff]
      %v1198 = vld [vmem:[%s1191 + $0x30] sm:$0xff]
      %v1199 = vld [vmem:[%s1191 + $0x38] sm:$0xff]
      %v1200 = vld [vmem:[%s1191 + $0x40] sm:$0xff]
      %v1201 = vld [vmem:[%s1191 + $0x48] sm:$0xff]
      %v1202 = vld [vmem:[%s1191 + $0x50] sm:$0xff]
      %v1203 = vld [vmem:[%s1191 + $0x58] sm:$0xff]
      %v1204 = vld [vmem:[%s1191 + $0x60] sm:$0xff]
      %v1205 = vld [vmem:[%s1191 + $0x68] sm:$0xff]
      %v1206 = vld [vmem:[%s1191 + $0x70] sm:$0xff]
      %v1207 = vld [vmem:[%s1191 + $0x78] sm:$0xff]
      %v1208 = vld [vmem:[%s1191 + $0x80] sm:$0xff]
      %v1209 = vld [vmem:[%s1191 + $0x88] sm:$0xff]
      %v1210 = vld [vmem:[%s1191 + $0x90] sm:$0xff]
      %v1211 = vld [vmem:[%s1191 + $0x98] sm:$0xff]
      %v1212 = vld [vmem:[%s1191 + $0xa0] sm:$0xff]
      %v1213 = vld [vmem:[%s1191 + $0xa8] sm:$0xff]
      %v1214 = vld [vmem:[%s1191 + $0xb0] sm:$0xff]
      %v1215 = vld [vmem:[%s1191 + $0xb8] sm:$0xff]
      %1216 = vrot.lane.b32.xlu0 %v225, 125
      %v1217 = vpop.permute.xlu0 %1216
      %1218 = vrot.lane.b32.xlu0 %v226, 125
      %v1219 = vpop.permute.xlu0 %1218
      %1220 = vrot.lane.b32.xlu0 %v227, 125
      %v1221 = vpop.permute.xlu0 %1220
      %1222 = vrot.lane.b32.xlu0 %v228, 125
      %v1223 = vpop.permute.xlu0 %1222
      %1224 = vrot.lane.b32.xlu0 %v229, 125
      %v1225 = vpop.permute.xlu0 %1224
      %1226 = vrot.lane.b32.xlu0 %v230, 125
      %v1227 = vpop.permute.xlu0 %1226
      %1228 = vrot.lane.b32.xlu0 %v231, 125
      %v1229 = vpop.permute.xlu0 %1228
      %1230 = vrot.lane.b32.xlu0 %v232, 125
      %v1231 = vpop.permute.xlu0 %1230
      %1232 = vrot.lane.b32.xlu0 %v233, 125
      %v1233 = vpop.permute.xlu0 %1232
      %1234 = vrot.lane.b32.xlu0 %v234, 125
      %v1235 = vpop.permute.xlu0 %1234
      %1236 = vrot.lane.b32.xlu0 %v235, 125
      %v1237 = vpop.permute.xlu0 %1236
      %1238 = vrot.lane.b32.xlu0 %v236, 125
      %v1239 = vpop.permute.xlu0 %1238
      %v1253 = vsel %vm334, %v1192, 0
      %v1256 = vsel %vm334, %v1193, 0
      %v1259 = vsel %vm334, %v1194, 0
      %v1262 = vsel %vm334, %v1195, 0
      %v1265 = vsel %vm334, %v1196, 0
      %v1268 = vsel %vm334, %v1197, 0
      %v1271 = vsel %vm334, %v1198, 0
      %v1274 = vsel %vm334, %v1199, 0
      %v1277 = vsel %vm334, %v1200, 0
      %v1280 = vsel %vm334, %v1201, 0
      %v1283 = vsel %vm334, %v1202, 0
      %v1286 = vsel %vm334, %v1203, 0
      %v1289 = vsel %vm334, %v1204, 0
      %v1292 = vsel %vm334, %v1205, 0
      %v1295 = vsel %vm334, %v1206, 0
      %v1298 = vsel %vm334, %v1207, 0
      %v1301 = vsel %vm334, %v1208, 0
      %v1304 = vsel %vm334, %v1209, 0
      %v1307 = vsel %vm334, %v1210, 0
      %v1310 = vsel %vm334, %v1211, 0
      %v1313 = vsel %vm334, %v1212, 0
      %v1316 = vsel %vm334, %v1213, 0
      %v1319 = vsel %vm334, %v1214, 0
      %v1322 = vsel %vm334, %v1215, 0
      %1324 = vmatprep.subr.mxu0 0.0
      %1325 = vmatpush1.msra.mxu0 %v1217
      %1326 = vmatprep.subr.mxu0 0.0
      %1327 = vmatpush1.msra.mxu0 %v1219
      %1328 = vmatprep.subr.mxu0 0.0
      %1329 = vmatpush1.msra.mxu0 %v1221
      %1330 = vmatprep.subr.mxu0 0.0
      %1331 = vmatpush1.msra.mxu0 %v1223
      %1332 = vmatprep.subr.mxu0 0.0
      %1333 = vmatpush1.msra.mxu0 %v1225
      %1334 = vmatprep.subr.mxu0 0.0
      %1335 = vmatpush1.msra.mxu0 %v1227
      %1336 = vmatprep.subr.mxu0 0.0
      %1337 = vmatpush1.msra.mxu0 %v1229
      %1338 = vmatprep.subr.mxu0 0.0
      %1339 = vmatpush1.msra.mxu0 %v1231
      %1340 = vmatprep.subr.mxu0 0.0
      %1341 = vmatpush1.msra.mxu0 %v1233
      %1342 = vmatprep.subr.mxu0 0.0
      %1343 = vmatpush1.msra.mxu0 %v1235
      %1344 = vmatprep.subr.mxu0 0.0
      %1345 = vmatpush1.msra.mxu0 %v1237
      %1346 = vmatprep.subr.mxu0 0.0
      %1347 = vmatpush1.msra.mxu0 %v1239
      %1348 = vmatprep.subr.mxu0 0.0
      %1349 = vmatpush1.msra.mxu0 0.0
      %1350 = vmatprep.subr.mxu0 0.0
      %1351 = vmatpush1.msra.mxu0 0.0
      %1352 = vmatprep.subr.mxu0 0.0
      %1353 = vmatpush1.msra.mxu0 0.0
      %1354 = vmatprep.subr.mxu0 0.0
      %1355 = vmatpush1.msra.mxu0 0.0
      %1356 = vmatprep.subr.mxu0 0.0
      %1357 = vmatpush1.msra.mxu0 0.0
      %1358 = vmatprep.subr.mxu0 0.0
      %1359 = vmatpush1.msra.mxu0 0.0
      %1360 = vmatprep.subr.mxu0 0.0
      %1361 = vmatpush1.msra.mxu0 0.0
      %1362 = vmatprep.subr.mxu0 0.0
      %1363 = vmatpush1.msra.mxu0 0.0
      %1364 = vmatprep.subr.mxu0 0.0
      %1365 = vmatpush1.msra.mxu0 0.0
      %1366 = vmatprep.subr.mxu0 0.0
      %1367 = vmatpush1.msra.mxu0 0.0
      %1368 = vmatprep.subr.mxu0 0.0
      %1369 = vmatpush1.msra.mxu0 0.0
      %1370 = vmatprep.subr.mxu0 0.0
      %1371 = vmatpush1.msra.mxu0 0.0
      %1372 = vmatprep.subr.mxu0 0.0
      %1373 = vmatpush1.msra.mxu0 0.0
      %1374 = vmatprep.subr.mxu0 0.0
      %1375 = vmatpush1.msra.mxu0 0.0
      %1376 = vmatprep.subr.mxu0 0.0
      %1377 = vmatpush1.msra.mxu0 0.0
      %1378 = vmatprep.subr.mxu0 0.0
      %1379 = vmatpush1.msra.mxu0 0.0
      %1380 = vmatprep.subr.mxu0 0.0
      %1381 = vmatpush1.msra.mxu0 0.0
      %1382 = vmatprep.subr.mxu0 0.0
      %1383 = vmatpush1.msra.mxu0 0.0
      %1384 = vmatprep.subr.mxu0 0.0
      %1385 = vmatpush1.msra.mxu0 0.0
      %1386 = vmatprep.subr.mxu0 0.0
      %1387 = vmatpush1.msra.mxu0 0.0
      %1388 = vmatprep.mubr.f32.mxu0 0.0
      %1389 = vmatmul.mubr.f32.gmra.mrb[0].mxu0 %v1253
      %v1390 = vpop.f32.mrb[0].mxu0
      %v1391 = vadd.f32 0.0, %v1390
      %v1392 = vpop.f32.mrb[0].mxu0
      %1393 = vmatprep.mubr.f32.mxu0 0.0
      %1394 = vmatmul.mubr.f32.gmra.mrb[0].mxu0 %v1256
      %v1395 = vpop.f32.mrb[0].mxu0
      %v1396 = vadd.f32 0.0, %v1395
      %v1397 = vpop.f32.mrb[0].mxu0
      %1398 = vmatprep.mubr.f32.mxu0 0.0
      %1399 = vmatmul.mubr.f32.gmra.mrb[0].mxu0 %v1259
      %v1400 = vpop.f32.mrb[0].mxu0
      %v1401 = vadd.f32 0.0, %v1400
      %v1402 = vpop.f32.mrb[0].mxu0
      %1403 = vmatprep.mubr.f32.mxu0 0.0
      %1404 = vmatmul.mubr.f32.gmra.mrb[0].mxu0 %v1262
      %v1405 = vpop.f32.mrb[0].mxu0
      %v1406 = vadd.f32 0.0, %v1405
      %v1407 = vpop.f32.mrb[0].mxu0
      %1408 = vmatprep.mubr.f32.mxu0 0.0
      %1409 = vmatmul.mubr.f32.gmra.mrb[0].mxu0 %v1265
      %v1410 = vpop.f32.mrb[0].mxu0
      %v1411 = vadd.f32 0.0, %v1410
      %v1412 = vpop.f32.mrb[0].mxu0
      %1413 = vmatprep.mubr.f32.mxu0 0.0
      %1414 = vmatmul.mubr.f32.gmra.mrb[0].mxu0 %v1268
      %v1415 = vpop.f32.mrb[0].mxu0
      %v1416 = vadd.f32 0.0, %v1415
      %v1417 = vpop.f32.mrb[0].mxu0
      %1418 = vmatprep.mubr.f32.mxu0 0.0
      %1419 = vmatmul.mubr.f32.gmra.mrb[0].mxu0 %v1271
      %v1420 = vpop.f32.mrb[0].mxu0
      %v1421 = vadd.f32 0.0, %v1420
      %v1422 = vpop.f32.mrb[0].mxu0
      %1423 = vmatprep.mubr.f32.mxu0 0.0
      %1424 = vmatmul.mubr.f32.gmra.mrb[0].mxu0 %v1274
      %v1425 = vpop.f32.mrb[0].mxu0
      %v1426 = vadd.f32 0.0, %v1425
      %v1427 = vpop.f32.mrb[0].mxu0
      %1428 = vmatprep.mubr.f32.mxu0 0.0
      %1429 = vmatmul.mubr.f32.gmra.mrb[0].mxu0 %v1277
      %v1430 = vpop.f32.mrb[0].mxu0
      %v1431 = vadd.f32 0.0, %v1430
      %v1432 = vpop.f32.mrb[0].mxu0
      %1433 = vmatprep.mubr.f32.mxu0 0.0
      %1434 = vmatmul.mubr.f32.gmra.mrb[0].mxu0 %v1280
      %v1435 = vpop.f32.mrb[0].mxu0
      %v1436 = vadd.f32 0.0, %v1435
      %v1437 = vpop.f32.mrb[0].mxu0
      %1438 = vmatprep.mubr.f32.mxu0 0.0
      %1439 = vmatmul.mubr.f32.gmra.mrb[0].mxu0 %v1283
      %v1440 = vpop.f32.mrb[0].mxu0
      %v1441 = vadd.f32 0.0, %v1440
      %v1442 = vpop.f32.mrb[0].mxu0
      %1443 = vmatprep.mubr.f32.mxu0 0.0
      %1444 = vmatmul.mubr.f32.gmra.mrb[0].mxu0 %v1286
      %v1445 = vpop.f32.mrb[0].mxu0
      %v1446 = vadd.f32 0.0, %v1445
      %v1447 = vpop.f32.mrb[0].mxu0
      %1448 = vmatprep.mubr.f32.mxu0 0.0
      %1449 = vmatmul.mubr.f32.gmra.mrb[0].mxu0 %v1289
      %v1450 = vpop.f32.mrb[0].mxu0
      %v1451 = vadd.f32 0.0, %v1450
      %v1452 = vpop.f32.mrb[0].mxu0
      %1453 = vmatprep.mubr.f32.mxu0 0.0
      %1454 = vmatmul.mubr.f32.gmra.mrb[0].mxu0 %v1292
      %v1455 = vpop.f32.mrb[0].mxu0
      %v1456 = vadd.f32 0.0, %v1455
      %v1457 = vpop.f32.mrb[0].mxu0
      %1458 = vmatprep.mubr.f32.mxu0 0.0
      %1459 = vmatmul.mubr.f32.gmra.mrb[0].mxu0 %v1295
      %v1460 = vpop.f32.mrb[0].mxu0
      %v1461 = vadd.f32 0.0, %v1460
      %v1462 = vpop.f32.mrb[0].mxu0
      %1463 = vmatprep.mubr.f32.mxu0 0.0
      %1464 = vmatmul.mubr.f32.gmra.mrb[0].mxu0 %v1298
      %v1465 = vpop.f32.mrb[0].mxu0
      %v1466 = vadd.f32 0.0, %v1465
      %v1467 = vpop.f32.mrb[0].mxu0
      %1468 = vmatprep.mubr.f32.mxu0 0.0
      %1469 = vmatmul.mubr.f32.gmra.mrb[0].mxu0 %v1301
      %v1470 = vpop.f32.mrb[0].mxu0
      %v1471 = vadd.f32 0.0, %v1470
      %v1472 = vpop.f32.mrb[0].mxu0
      %1473 = vmatprep.mubr.f32.mxu0 0.0
      %1474 = vmatmul.mubr.f32.gmra.mrb[0].mxu0 %v1304
      %v1475 = vpop.f32.mrb[0].mxu0
      %v1476 = vadd.f32 0.0, %v1475
      %v1477 = vpop.f32.mrb[0].mxu0
      %1478 = vmatprep.mubr.f32.mxu0 0.0
      %1479 = vmatmul.mubr.f32.gmra.mrb[0].mxu0 %v1307
      %v1480 = vpop.f32.mrb[0].mxu0
      %v1481 = vadd.f32 0.0, %v1480
      %v1482 = vpop.f32.mrb[0].mxu0
      %1483 = vmatprep.mubr.f32.mxu0 0.0
      %1484 = vmatmul.mubr.f32.gmra.mrb[0].mxu0 %v1310
      %v1485 = vpop.f32.mrb[0].mxu0
      %v1486 = vadd.f32 0.0, %v1485
      %v1487 = vpop.f32.mrb[0].mxu0
      %1488 = vmatprep.mubr.f32.mxu0 0.0
      %1489 = vmatmul.mubr.f32.gmra.mrb[0].mxu0 %v1313
      %v1490 = vpop.f32.mrb[0].mxu0
      %v1491 = vadd.f32 0.0, %v1490
      %v1492 = vpop.f32.mrb[0].mxu0
      %1493 = vmatprep.mubr.f32.mxu0 0.0
      %1494 = vmatmul.mubr.f32.gmra.mrb[0].mxu0 %v1316
      %v1495 = vpop.f32.mrb[0].mxu0
      %v1496 = vadd.f32 0.0, %v1495
      %v1497 = vpop.f32.mrb[0].mxu0
      %1498 = vmatprep.mubr.f32.mxu0 0.0
      %1499 = vmatmul.mubr.f32.gmra.mrb[0].mxu0 %v1319
      %v1500 = vpop.f32.mrb[0].mxu0
      %v1501 = vadd.f32 0.0, %v1500
      %v1502 = vpop.f32.mrb[0].mxu0
      %1503 = vmatprep.mubr.f32.mxu0 0.0
      %1504 = vmatmul.mubr.f32.gmra.mrb[0].mxu0 %v1322
      %v1505 = vpop.f32.mrb[0].mxu0
      %v1506 = vadd.f32 0.0, %v1505
      %v1507 = vpop.f32.mrb[0].mxu0
      %1508 = vdwg.mxu0
      %v1509 = vadd.f32 %v1167, %v1391
      %v1510 = vadd.f32 %v1168, %v1396
      %v1511 = vadd.f32 %v1169, %v1401
      %v1512 = vadd.f32 %v1170, %v1406
      %v1513 = vadd.f32 %v1171, %v1411
      %v1514 = vadd.f32 %v1172, %v1416
      %v1515 = vadd.f32 %v1173, %v1421
      %v1516 = vadd.f32 %v1174, %v1426
      %v1517 = vadd.f32 %v1175, %v1431
      %v1518 = vadd.f32 %v1176, %v1436
      %v1519 = vadd.f32 %v1177, %v1441
      %v1520 = vadd.f32 %v1178, %v1446
      %v1521 = vadd.f32 %v1179, %v1451
      %v1522 = vadd.f32 %v1180, %v1456
      %v1523 = vadd.f32 %v1181, %v1461
      %v1524 = vadd.f32 %v1182, %v1466
      %v1525 = vadd.f32 %v1183, %v1471
      %v1526 = vadd.f32 %v1184, %v1476
      %v1527 = vadd.f32 %v1185, %v1481
      %v1528 = vadd.f32 %v1186, %v1486
      %v1529 = vadd.f32 %v1187, %v1491
      %v1530 = vadd.f32 %v1188, %v1496
      %v1531 = vadd.f32 %v1189, %v1501
      %v1532 = vadd.f32 %v1190, %v1506
      %s1533 = scalar_lea.vmem %s1, 768
      %v1534 = vld [vmem:[%s1533] sm:$0xff]
      %v1535 = vld [vmem:[%s1533 + $0x8] sm:$0xff]
      %v1536 = vld [vmem:[%s1533 + $0x10] sm:$0xff]
      %v1537 = vld [vmem:[%s1533 + $0x18] sm:$0xff]
      %v1538 = vld [vmem:[%s1533 + $0x20] sm:$0xff]
      %v1539 = vld [vmem:[%s1533 + $0x28] sm:$0xff]
      %v1540 = vld [vmem:[%s1533 + $0x30] sm:$0xff]
      %v1541 = vld [vmem:[%s1533 + $0x38] sm:$0xff]
      %v1542 = vld [vmem:[%s1533 + $0x40] sm:$0xff]
      %v1543 = vld [vmem:[%s1533 + $0x48] sm:$0xff]
      %v1544 = vld [vmem:[%s1533 + $0x50] sm:$0xff]
      %v1545 = vld [vmem:[%s1533 + $0x58] sm:$0xff]
      %v1546 = vld [vmem:[%s1533 + $0x60] sm:$0xff]
      %v1547 = vld [vmem:[%s1533 + $0x68] sm:$0xff]
      %v1548 = vld [vmem:[%s1533 + $0x70] sm:$0xff]
      %v1549 = vld [vmem:[%s1533 + $0x78] sm:$0xff]
      %v1550 = vld [vmem:[%s1533 + $0x80] sm:$0xff]
      %v1551 = vld [vmem:[%s1533 + $0x88] sm:$0xff]
      %v1552 = vld [vmem:[%s1533 + $0x90] sm:$0xff]
      %v1553 = vld [vmem:[%s1533 + $0x98] sm:$0xff]
      %v1554 = vld [vmem:[%s1533 + $0xa0] sm:$0xff]
      %v1555 = vld [vmem:[%s1533 + $0xa8] sm:$0xff]
      %v1556 = vld [vmem:[%s1533 + $0xb0] sm:$0xff]
      %v1557 = vld [vmem:[%s1533 + $0xb8] sm:$0xff]
      %1558 = vrot.lane.b32.xlu0 %v225, 124
      %v1559 = vpop.permute.xlu0 %1558
      %1560 = vrot.lane.b32.xlu0 %v226, 124
      %v1561 = vpop.permute.xlu0 %1560
      %1562 = vrot.lane.b32.xlu0 %v227, 124
      %v1563 = vpop.permute.xlu0 %1562
      %1564 = vrot.lane.b32.xlu0 %v228, 124
      %v1565 = vpop.permute.xlu0 %1564
      %1566 = vrot.lane.b32.xlu0 %v229, 124
      %v1567 = vpop.permute.xlu0 %1566
      %1568 = vrot.lane.b32.xlu0 %v230, 124
      %v1569 = vpop.permute.xlu0 %1568
      %1570 = vrot.lane.b32.xlu0 %v231, 124
      %v1571 = vpop.permute.xlu0 %1570
      %1572 = vrot.lane.b32.xlu0 %v232, 124
      %v1573 = vpop.permute.xlu0 %1572
      %1574 = vrot.lane.b32.xlu0 %v233, 124
      %v1575 = vpop.permute.xlu0 %1574
      %1576 = vrot.lane.b32.xlu0 %v234, 124
      %v1577 = vpop.permute.xlu0 %1576
      %1578 = vrot.lane.b32.xlu0 %v235, 124
      %v1579 = vpop.permute.xlu0 %1578
      %1580 = vrot.lane.b32.xlu0 %v236, 124
      %v1581 = vpop.permute.xlu0 %1580
      %v1595 = vsel %vm334, %v1534, 0
      %v1598 = vsel %vm334, %v1535, 0
      %v1601 = vsel %vm334, %v1536, 0
      %v1604 = vsel %vm334, %v1537, 0
      %v1607 = vsel %vm334, %v1538, 0
      %v1610 = vsel %vm334, %v1539, 0
      %v1613 = vsel %vm334, %v1540, 0
      %v1616 = vsel %vm334, %v1541, 0
      %v1619 = vsel %vm334, %v1542, 0
      %v1622 = vsel %vm334, %v1543, 0
      %v1625 = vsel %vm334, %v1544, 0
      %v1628 = vsel %vm334, %v1545, 0
      %v1631 = vsel %vm334, %v1546, 0
      %v1634 = vsel %vm334, %v1547, 0
      %v1637 = vsel %vm334, %v1548, 0
      %v1640 = vsel %vm334, %v1549, 0
      %v1643 = vsel %vm334, %v1550, 0
      %v1646 = vsel %vm334, %v1551, 0
      %v1649 = vsel %vm334, %v1552, 0
      %v1652 = vsel %vm334, %v1553, 0
      %v1655 = vsel %vm334, %v1554, 0
      %v1658 = vsel %vm334, %v1555, 0
      %v1661 = vsel %vm334, %v1556, 0
      %v1664 = vsel %vm334, %v1557, 0
      %1666 = vmatprep.subr.mxu0 0.0
      %1667 = vmatpush1.msra.mxu0 %v1559
      %1668 = vmatprep.subr.mxu0 0.0
      %1669 = vmatpush1.msra.mxu0 %v1561
      %1670 = vmatprep.subr.mxu0 0.0
      %1671 = vmatpush1.msra.mxu0 %v1563
      %1672 = vmatprep.subr.mxu0 0.0
      %1673 = vmatpush1.msra.mxu0 %v1565
      %1674 = vmatprep.subr.mxu0 0.0
      %1675 = vmatpush1.msra.mxu0 %v1567
      %1676 = vmatprep.subr.mxu0 0.0
      %1677 = vmatpush1.msra.mxu0 %v1569
      %1678 = vmatprep.subr.mxu0 0.0
      %1679 = vmatpush1.msra.mxu0 %v1571
      %1680 = vmatprep.subr.mxu0 0.0
      %1681 = vmatpush1.msra.mxu0 %v1573
      %1682 = vmatprep.subr.mxu0 0.0
      %1683 = vmatpush1.msra.mxu0 %v1575
      %1684 = vmatprep.subr.mxu0 0.0
      %1685 = vmatpush1.msra.mxu0 %v1577
      %1686 = vmatprep.subr.mxu0 0.0
      %1687 = vmatpush1.msra.mxu0 %v1579
      %1688 = vmatprep.subr.mxu0 0.0
      %1689 = vmatpush1.msra.mxu0 %v1581
      %1690 = vmatprep.subr.mxu0 0.0
      %1691 = vmatpush1.msra.mxu0 0.0
      %1692 = vmatprep.subr.mxu0 0.0
      %1693 = vmatpush1.msra.mxu0 0.0
      %1694 = vmatprep.subr.mxu0 0.0
      %1695 = vmatpush1.msra.mxu0 0.0
      %1696 = vmatprep.subr.mxu0 0.0
      %1697 = vmatpush1.msra.mxu0 0.0
      %1698 = vmatprep.subr.mxu0 0.0
      %1699 = vmatpush1.msra.mxu0 0.0
      %1700 = vmatprep.subr.mxu0 0.0
      %1701 = vmatpush1.msra.mxu0 0.0
      %1702 = vmatprep.subr.mxu0 0.0
      %1703 = vmatpush1.msra.mxu0 0.0
      %1704 = vmatprep.subr.mxu0 0.0
      %1705 = vmatpush1.msra.mxu0 0.0
      %1706 = vmatprep.subr.mxu0 0.0
      %1707 = vmatpush1.msra.mxu0 0.0
      %1708 = vmatprep.subr.mxu0 0.0
      %1709 = vmatpush1.msra.mxu0 0.0
      %1710 = vmatprep.subr.mxu0 0.0
      %1711 = vmatpush1.msra.mxu0 0.0
      %1712 = vmatprep.subr.mxu0 0.0
      %1713 = vmatpush1.msra.mxu0 0.0
      %1714 = vmatprep.subr.mxu0 0.0
      %1715 = vmatpush1.msra.mxu0 0.0
      %1716 = vmatprep.subr.mxu0 0.0
      %1717 = vmatpush1.msra.mxu0 0.0
      %1718 = vmatprep.subr.mxu0 0.0
      %1719 = vmatpush1.msra.mxu0 0.0
      %1720 = vmatprep.subr.mxu0 0.0
      %1721 = vmatpush1.msra.mxu0 0.0
      %1722 = vmatprep.subr.mxu0 0.0
      %1723 = vmatpush1.msra.mxu0 0.0
      %1724 = vmatprep.subr.mxu0 0.0
      %1725 = vmatpush1.msra.mxu0 0.0
      %1726 = vmatprep.subr.mxu0 0.0
      %1727 = vmatpush1.msra.mxu0 0.0
      %1728 = vmatprep.subr.mxu0 0.0
      %1729 = vmatpush1.msra.mxu0 0.0
      %1730 = vmatprep.mubr.f32.mxu0 0.0
      %1731 = vmatmul.mubr.f32.gmra.mrb[0].mxu0 %v1595
      %v1732 = vpop.f32.mrb[0].mxu0
      %v1733 = vadd.f32 0.0, %v1732
      %v1734 = vpop.f32.mrb[0].mxu0
      %1735 = vmatprep.mubr.f32.mxu0 0.0
      %1736 = vmatmul.mubr.f32.gmra.mrb[0].mxu0 %v1598
      %v1737 = vpop.f32.mrb[0].mxu0
      %v1738 = vadd.f32 0.0, %v1737
      %v1739 = vpop.f32.mrb[0].mxu0
      %1740 = vmatprep.mubr.f32.mxu0 0.0
      %1741 = vmatmul.mubr.f32.gmra.mrb[0].mxu0 %v1601
      %v1742 = vpop.f32.mrb[0].mxu0
      %v1743 = vadd.f32 0.0, %v1742
      %v1744 = vpop.f32.mrb[0].mxu0
      %1745 = vmatprep.mubr.f32.mxu0 0.0
      %1746 = vmatmul.mubr.f32.gmra.mrb[0].mxu0 %v1604
      %v1747 = vpop.f32.mrb[0].mxu0
      %v1748 = vadd.f32 0.0, %v1747
      %v1749 = vpop.f32.mrb[0].mxu0
      %1750 = vmatprep.mubr.f32.mxu0 0.0
      %1751 = vmatmul.mubr.f32.gmra.mrb[0].mxu0 %v1607
      %v1752 = vpop.f32.mrb[0].mxu0
      %v1753 = vadd.f32 0.0, %v1752
      %v1754 = vpop.f32.mrb[0].mxu0
      %1755 = vmatprep.mubr.f32.mxu0 0.0
      %1756 = vmatmul.mubr.f32.gmra.mrb[0].mxu0 %v1610
      %v1757 = vpop.f32.mrb[0].mxu0
      %v1758 = vadd.f32 0.0, %v1757
      %v1759 = vpop.f32.mrb[0].mxu0
      %1760 = vmatprep.mubr.f32.mxu0 0.0
      %1761 = vmatmul.mubr.f32.gmra.mrb[0].mxu0 %v1613
      %v1762 = vpop.f32.mrb[0].mxu0
      %v1763 = vadd.f32 0.0, %v1762
      %v1764 = vpop.f32.mrb[0].mxu0
      %1765 = vmatprep.mubr.f32.mxu0 0.0
      %1766 = vmatmul.mubr.f32.gmra.mrb[0].mxu0 %v1616
      %v1767 = vpop.f32.mrb[0].mxu0
      %v1768 = vadd.f32 0.0, %v1767
      %v1769 = vpop.f32.mrb[0].mxu0
      %1770 = vmatprep.mubr.f32.mxu0 0.0
      %1771 = vmatmul.mubr.f32.gmra.mrb[0].mxu0 %v1619
      %v1772 = vpop.f32.mrb[0].mxu0
      %v1773 = vadd.f32 0.0, %v1772
      %v1774 = vpop.f32.mrb[0].mxu0
      %1775 = vmatprep.mubr.f32.mxu0 0.0
      %1776 = vmatmul.mubr.f32.gmra.mrb[0].mxu0 %v1622
      %v1777 = vpop.f32.mrb[0].mxu0
      %v1778 = vadd.f32 0.0, %v1777
      %v1779 = vpop.f32.mrb[0].mxu0
      %1780 = vmatprep.mubr.f32.mxu0 0.0
      %1781 = vmatmul.mubr.f32.gmra.mrb[0].mxu0 %v1625
      %v1782 = vpop.f32.mrb[0].mxu0
      %v1783 = vadd.f32 0.0, %v1782
      %v1784 = vpop.f32.mrb[0].mxu0
      %1785 = vmatprep.mubr.f32.mxu0 0.0
      %1786 = vmatmul.mubr.f32.gmra.mrb[0].mxu0 %v1628
      %v1787 = vpop.f32.mrb[0].mxu0
      %v1788 = vadd.f32 0.0, %v1787
      %v1789 = vpop.f32.mrb[0].mxu0
      %1790 = vmatprep.mubr.f32.mxu0 0.0
      %1791 = vmatmul.mubr.f32.gmra.mrb[0].mxu0 %v1631
      %v1792 = vpop.f32.mrb[0].mxu0
      %v1793 = vadd.f32 0.0, %v1792
      %v1794 = vpop.f32.mrb[0].mxu0
      %1795 = vmatprep.mubr.f32.mxu0 0.0
      %1796 = vmatmul.mubr.f32.gmra.mrb[0].mxu0 %v1634
      %v1797 = vpop.f32.mrb[0].mxu0
      %v1798 = vadd.f32 0.0, %v1797
      %v1799 = vpop.f32.mrb[0].mxu0
      %1800 = vmatprep.mubr.f32.mxu0 0.0
      %1801 = vmatmul.mubr.f32.gmra.mrb[0].mxu0 %v1637
      %v1802 = vpop.f32.mrb[0].mxu0
      %v1803 = vadd.f32 0.0, %v1802
      %v1804 = vpop.f32.mrb[0].mxu0
      %1805 = vmatprep.mubr.f32.mxu0 0.0
      %1806 = vmatmul.mubr.f32.gmra.mrb[0].mxu0 %v1640
      %v1807 = vpop.f32.mrb[0].mxu0
      %v1808 = vadd.f32 0.0, %v1807
      %v1809 = vpop.f32.mrb[0].mxu0
      %1810 = vmatprep.mubr.f32.mxu0 0.0
      %1811 = vmatmul.mubr.f32.gmra.mrb[0].mxu0 %v1643
      %v1812 = vpop.f32.mrb[0].mxu0
      %v1813 = vadd.f32 0.0, %v1812
      %v1814 = vpop.f32.mrb[0].mxu0
      %1815 = vmatprep.mubr.f32.mxu0 0.0
      %1816 = vmatmul.mubr.f32.gmra.mrb[0].mxu0 %v1646
      %v1817 = vpop.f32.mrb[0].mxu0
      %v1818 = vadd.f32 0.0, %v1817
      %v1819 = vpop.f32.mrb[0].mxu0
      %1820 = vmatprep.mubr.f32.mxu0 0.0
      %1821 = vmatmul.mubr.f32.gmra.mrb[0].mxu0 %v1649
      %v1822 = vpop.f32.mrb[0].mxu0
      %v1823 = vadd.f32 0.0, %v1822
      %v1824 = vpop.f32.mrb[0].mxu0
      %1825 = vmatprep.mubr.f32.mxu0 0.0
      %1826 = vmatmul.mubr.f32.gmra.mrb[0].mxu0 %v1652
      %v1827 = vpop.f32.mrb[0].mxu0
      %v1828 = vadd.f32 0.0, %v1827
      %v1829 = vpop.f32.mrb[0].mxu0
      %1830 = vmatprep.mubr.f32.mxu0 0.0
      %1831 = vmatmul.mubr.f32.gmra.mrb[0].mxu0 %v1655
      %v1832 = vpop.f32.mrb[0].mxu0
      %v1833 = vadd.f32 0.0, %v1832
      %v1834 = vpop.f32.mrb[0].mxu0
      %1835 = vmatprep.mubr.f32.mxu0 0.0
      %1836 = vmatmul.mubr.f32.gmra.mrb[0].mxu0 %v1658
      %v1837 = vpop.f32.mrb[0].mxu0
      %v1838 = vadd.f32 0.0, %v1837
      %v1839 = vpop.f32.mrb[0].mxu0
      %1840 = vmatprep.mubr.f32.mxu0 0.0
      %1841 = vmatmul.mubr.f32.gmra.mrb[0].mxu0 %v1661
      %v1842 = vpop.f32.mrb[0].mxu0
      %v1843 = vadd.f32 0.0, %v1842
      %v1844 = vpop.f32.mrb[0].mxu0
      %1845 = vmatprep.mubr.f32.mxu0 0.0
      %1846 = vmatmul.mubr.f32.gmra.mrb[0].mxu0 %v1664
      %v1847 = vpop.f32.mrb[0].mxu0
      %v1848 = vadd.f32 0.0, %v1847
      %v1849 = vpop.f32.mrb[0].mxu0
      %1850 = vdwg.mxu0
      %v1851 = vadd.f32 %v1509, %v1733
      %v1852 = vadd.f32 %v1510, %v1738
      %v1853 = vadd.f32 %v1511, %v1743
      %v1854 = vadd.f32 %v1512, %v1748
      %v1855 = vadd.f32 %v1513, %v1753
      %v1856 = vadd.f32 %v1514, %v1758
      %v1857 = vadd.f32 %v1515, %v1763
      %v1858 = vadd.f32 %v1516, %v1768
      %v1859 = vadd.f32 %v1517, %v1773
      %v1860 = vadd.f32 %v1518, %v1778
      %v1861 = vadd.f32 %v1519, %v1783
      %v1862 = vadd.f32 %v1520, %v1788
      %v1863 = vadd.f32 %v1521, %v1793
      %v1864 = vadd.f32 %v1522, %v1798
      %v1865 = vadd.f32 %v1523, %v1803
      %v1866 = vadd.f32 %v1524, %v1808
      %v1867 = vadd.f32 %v1525, %v1813
      %v1868 = vadd.f32 %v1526, %v1818
      %v1869 = vadd.f32 %v1527, %v1823
      %v1870 = vadd.f32 %v1528, %v1828
      %v1871 = vadd.f32 %v1529, %v1833
      %v1872 = vadd.f32 %v1530, %v1838
      %v1873 = vadd.f32 %v1531, %v1843
      %v1874 = vadd.f32 %v1532, %v1848
      %v1875 = vld [vmem:[%s2] sm:$0xff]
      %v1876 = vld [vmem:[%s2 + $0x8] sm:$0xff]
      %v1877 = vld [vmem:[%s2 + $0x10] sm:$0xff]
      %v1878 = vld [vmem:[%s2 + $0x18] sm:$0xff]
      %v1879 = vld [vmem:[%s2 + $0x20] sm:$0xff]
      %v1880 = vld [vmem:[%s2 + $0x28] sm:$0xff]
      %v1881 = vld [vmem:[%s2 + $0x30] sm:$0xff]
      %v1882 = vld [vmem:[%s2 + $0x38] sm:$0xff]
      %v1883 = vld [vmem:[%s2 + $0x40] sm:$0xff]
      %v1884 = vld [vmem:[%s2 + $0x48] sm:$0xff]
      %v1885 = vld [vmem:[%s2 + $0x50] sm:$0xff]
      %v1886 = vld [vmem:[%s2 + $0x58] sm:$0xff]
      %v1887 = vld [vmem:[%s2 + $0x60] sm:$0xff]
      %v1888 = vld [vmem:[%s2 + $0x68] sm:$0xff]
      %v1889 = vld [vmem:[%s2 + $0x70] sm:$0xff]
      %v1890 = vld [vmem:[%s2 + $0x78] sm:$0xff]
      %v1891 = vld [vmem:[%s2 + $0x80] sm:$0xff]
      %v1892 = vld [vmem:[%s2 + $0x88] sm:$0xff]
      %v1893 = vld [vmem:[%s2 + $0x90] sm:$0xff]
      %v1894 = vld [vmem:[%s2 + $0x98] sm:$0xff]
      %v1895 = vld [vmem:[%s2 + $0xa0] sm:$0xff]
      %v1896 = vld [vmem:[%s2 + $0xa8] sm:$0xff]
      %v1897 = vld [vmem:[%s2 + $0xb0] sm:$0xff]
      %v1898 = vld [vmem:[%s2 + $0xb8] sm:$0xff]
      %1900 = vset.pattern.permute.xlu0 0
      %1901 = vperm.xlu0 %1900, %v1875
      %v1902 = vpop.permute.xlu0 %1901
      %1905 = vset.pattern.permute.xlu0 0
      %1906 = vperm.xlu0 %1905, %v1876
      %v1907 = vpop.permute.xlu0 %1906
      %1910 = vset.pattern.permute.xlu0 0
      %1911 = vperm.xlu0 %1910, %v1877
      %v1912 = vpop.permute.xlu0 %1911
      %1915 = vset.pattern.permute.xlu0 0
      %1916 = vperm.xlu0 %1915, %v1878
      %v1917 = vpop.permute.xlu0 %1916
      %1920 = vset.pattern.permute.xlu0 0
      %1921 = vperm.xlu0 %1920, %v1879
      %v1922 = vpop.permute.xlu0 %1921
      %1925 = vset.pattern.permute.xlu0 0
      %1926 = vperm.xlu0 %1925, %v1880
      %v1927 = vpop.permute.xlu0 %1926
      %1930 = vset.pattern.permute.xlu0 0
      %1931 = vperm.xlu0 %1930, %v1881
      %v1932 = vpop.permute.xlu0 %1931
      %1935 = vset.pattern.permute.xlu0 0
      %1936 = vperm.xlu0 %1935, %v1882
      %v1937 = vpop.permute.xlu0 %1936
      %1940 = vset.pattern.permute.xlu0 0
      %1941 = vperm.xlu0 %1940, %v1883
      %v1942 = vpop.permute.xlu0 %1941
      %1945 = vset.pattern.permute.xlu0 0
      %1946 = vperm.xlu0 %1945, %v1884
      %v1947 = vpop.permute.xlu0 %1946
      %1950 = vset.pattern.permute.xlu0 0
      %1951 = vperm.xlu0 %1950, %v1885
      %v1952 = vpop.permute.xlu0 %1951
      %1955 = vset.pattern.permute.xlu0 0
      %1956 = vperm.xlu0 %1955, %v1886
      %v1957 = vpop.permute.xlu0 %1956
      %1960 = vset.pattern.permute.xlu0 0
      %1961 = vperm.xlu0 %1960, %v1887
      %v1962 = vpop.permute.xlu0 %1961
      %1965 = vset.pattern.permute.xlu0 0
      %1966 = vperm.xlu0 %1965, %v1888
      %v1967 = vpop.permute.xlu0 %1966
      %1970 = vset.pattern.permute.xlu0 0
      %1971 = vperm.xlu0 %1970, %v1889
      %v1972 = vpop.permute.xlu0 %1971
      %1975 = vset.pattern.permute.xlu0 0
      %1976 = vperm.xlu0 %1975, %v1890
      %v1977 = vpop.permute.xlu0 %1976
      %1980 = vset.pattern.permute.xlu0 0
      %1981 = vperm.xlu0 %1980, %v1891
      %v1982 = vpop.permute.xlu0 %1981
      %1985 = vset.pattern.permute.xlu0 0
      %1986 = vperm.xlu0 %1985, %v1892
      %v1987 = vpop.permute.xlu0 %1986
      %1990 = vset.pattern.permute.xlu0 0
      %1991 = vperm.xlu0 %1990, %v1893
      %v1992 = vpop.permute.xlu0 %1991
      %1995 = vset.pattern.permute.xlu0 0
      %1996 = vperm.xlu0 %1995, %v1894
      %v1997 = vpop.permute.xlu0 %1996
      %2000 = vset.pattern.permute.xlu0 0
      %2001 = vperm.xlu0 %2000, %v1895
      %v2002 = vpop.permute.xlu0 %2001
      %2005 = vset.pattern.permute.xlu0 0
      %2006 = vperm.xlu0 %2005, %v1896
      %v2007 = vpop.permute.xlu0 %2006
      %2010 = vset.pattern.permute.xlu0 0
      %2011 = vperm.xlu0 %2010, %v1897
      %v2012 = vpop.permute.xlu0 %2011
      %2015 = vset.pattern.permute.xlu0 0
      %2016 = vperm.xlu0 %2015, %v1898
      %v2017 = vpop.permute.xlu0 %2016
      %v2019 = vadd.f32 %v1851, %v1902
      %v2020 = vadd.f32 %v1852, %v1907
      %v2021 = vadd.f32 %v1853, %v1912
      %v2022 = vadd.f32 %v1854, %v1917
      %v2023 = vadd.f32 %v1855, %v1922
      %v2024 = vadd.f32 %v1856, %v1927
      %v2025 = vadd.f32 %v1857, %v1932
      %v2026 = vadd.f32 %v1858, %v1937
      %v2027 = vadd.f32 %v1859, %v1942
      %v2028 = vadd.f32 %v1860, %v1947
      %v2029 = vadd.f32 %v1861, %v1952
      %v2030 = vadd.f32 %v1862, %v1957
      %v2031 = vadd.f32 %v1863, %v1962
      %v2032 = vadd.f32 %v1864, %v1967
      %v2033 = vadd.f32 %v1865, %v1972
      %v2034 = vadd.f32 %v1866, %v1977
      %v2035 = vadd.f32 %v1867, %v1982
      %v2036 = vadd.f32 %v1868, %v1987
      %v2037 = vadd.f32 %v1869, %v1992
      %v2038 = vadd.f32 %v1870, %v1997
      %v2039 = vadd.f32 %v1871, %v2002
      %v2040 = vadd.f32 %v1872, %v2007
      %v2041 = vadd.f32 %v1873, %v2012
      %v2042 = vadd.f32 %v1874, %v2017
      %v2043 = vmax.f32 %v2019, 0.0
      %v2044 = vmax.f32 %v2020, 0.0
      %v2045 = vmax.f32 %v2021, 0.0
      %v2046 = vmax.f32 %v2022, 0.0
      %v2047 = vmax.f32 %v2023, 0.0
      %v2048 = vmax.f32 %v2024, 0.0
      %v2049 = vmax.f32 %v2025, 0.0
      %v2050 = vmax.f32 %v2026, 0.0
      %v2051 = vmax.f32 %v2027, 0.0
      %v2052 = vmax.f32 %v2028, 0.0
      %v2053 = vmax.f32 %v2029, 0.0
      %v2054 = vmax.f32 %v2030, 0.0
      %v2055 = vmax.f32 %v2031, 0.0
      %v2056 = vmax.f32 %v2032, 0.0
      %v2057 = vmax.f32 %v2033, 0.0
      %v2058 = vmax.f32 %v2034, 0.0
      %v2059 = vmax.f32 %v2035, 0.0
      %v2060 = vmax.f32 %v2036, 0.0
      %v2061 = vmax.f32 %v2037, 0.0
      %v2062 = vmax.f32 %v2038, 0.0
      %v2063 = vmax.f32 %v2039, 0.0
      %v2064 = vmax.f32 %v2040, 0.0
      %v2065 = vmax.f32 %v2041, 0.0
      %v2066 = vmax.f32 %v2042, 0.0
      %vm2091 = vcmask 1046528
      %v2092 = vrot.slane %v2043, 1
      %v2093 = vrot.slane %v2044, 1
      %v2094 = vsel %vm2091, %v2092, %v2093
      %v2095 = vrot.slane %v2045, 1
      %v2096 = vsel %vm2091, %v2093, %v2095
      %v2097 = vrot.slane %v2046, 1
      %v2098 = vsel %vm2091, %v2095, %v2097
      %v2099 = vrot.slane %v2047, 1
      %v2100 = vsel %vm2091, %v2097, %v2099
      %v2101 = vrot.slane %v2048, 1
      %v2102 = vsel %vm2091, %v2099, %v2101
      %v2103 = vrot.slane %v2049, 1
      %v2104 = vsel %vm2091, %v2101, %v2103
      %v2105 = vrot.slane %v2050, 1
      %v2106 = vsel %vm2091, %v2103, %v2105
      %v2107 = vrot.slane %v2051, 1
      %v2108 = vsel %vm2091, %v2105, %v2107
      %v2109 = vrot.slane %v2052, 1
      %v2110 = vsel %vm2091, %v2107, %v2109
      %v2111 = vrot.slane %v2053, 1
      %v2112 = vsel %vm2091, %v2109, %v2111
      %v2113 = vrot.slane %v2054, 1
      %v2114 = vsel %vm2091, %v2111, %v2113
      %v2115 = vrot.slane %v2055, 1
      %v2116 = vsel %vm2091, %v2113, %v2115
      %v2117 = vrot.slane %v2056, 1
      %v2118 = vsel %vm2091, %v2115, %v2117
      %v2119 = vrot.slane %v2057, 1
      %v2120 = vsel %vm2091, %v2117, %v2119
      %v2121 = vrot.slane %v2058, 1
      %v2122 = vsel %vm2091, %v2119, %v2121
      %v2123 = vrot.slane %v2059, 1
      %v2124 = vsel %vm2091, %v2121, %v2123
      %v2125 = vrot.slane %v2060, 1
      %v2126 = vsel %vm2091, %v2123, %v2125
      %v2127 = vrot.slane %v2061, 1
      %v2128 = vsel %vm2091, %v2125, %v2127
      %v2129 = vrot.slane %v2062, 1
      %v2130 = vsel %vm2091, %v2127, %v2129
      %v2131 = vrot.slane %v2063, 1
      %v2132 = vsel %vm2091, %v2129, %v2131
      %v2133 = vrot.slane %v2064, 1
      %v2134 = vsel %vm2091, %v2131, %v2133
      %v2135 = vrot.slane %v2065, 1
      %v2136 = vsel %vm2091, %v2133, %v2135
      %v2137 = vrot.slane %v2066, 1
      %v2138 = vsel %vm2091, %v2135, %v2137
      %v2163 = vmax.f32 %v2043, %v2094
      %v2164 = vmax.f32 %v2044, %v2096
      %v2165 = vmax.f32 %v2045, %v2098
      %v2166 = vmax.f32 %v2046, %v2100
      %v2167 = vmax.f32 %v2047, %v2102
      %v2168 = vmax.f32 %v2048, %v2104
      %v2169 = vmax.f32 %v2049, %v2106
      %v2170 = vmax.f32 %v2050, %v2108
      %v2171 = vmax.f32 %v2051, %v2110
      %v2172 = vmax.f32 %v2052, %v2112
      %v2173 = vmax.f32 %v2053, %v2114
      %v2174 = vmax.f32 %v2054, %v2116
      %v2175 = vmax.f32 %v2055, %v2118
      %v2176 = vmax.f32 %v2056, %v2120
      %v2177 = vmax.f32 %v2057, %v2122
      %v2178 = vmax.f32 %v2058, %v2124
      %v2179 = vmax.f32 %v2059, %v2126
      %v2180 = vmax.f32 %v2060, %v2128
      %v2181 = vmax.f32 %v2061, %v2130
      %v2182 = vmax.f32 %v2062, %v2132
      %v2183 = vmax.f32 %v2063, %v2134
      %v2184 = vmax.f32 %v2064, %v2136
      %v2185 = vmax.f32 %v2065, %v2138
      %v2186 = vmax.f32 %v2066, %v2137
      %2211 = vrot.lane.b32.xlu0 %v2163, 127
      %v2212 = vpop.permute.xlu0 %2211
      %2213 = vrot.lane.b32.xlu0 %v2164, 127
      %v2214 = vpop.permute.xlu0 %2213
      %2215 = vrot.lane.b32.xlu0 %v2165, 127
      %v2216 = vpop.permute.xlu0 %2215
      %2217 = vrot.lane.b32.xlu0 %v2166, 127
      %v2218 = vpop.permute.xlu0 %2217
      %2219 = vrot.lane.b32.xlu0 %v2167, 127
      %v2220 = vpop.permute.xlu0 %2219
      %2221 = vrot.lane.b32.xlu0 %v2168, 127
      %v2222 = vpop.permute.xlu0 %2221
      %2223 = vrot.lane.b32.xlu0 %v2169, 127
      %v2224 = vpop.permute.xlu0 %2223
      %2225 = vrot.lane.b32.xlu0 %v2170, 127
      %v2226 = vpop.permute.xlu0 %2225
      %2227 = vrot.lane.b32.xlu0 %v2171, 127
      %v2228 = vpop.permute.xlu0 %2227
      %2229 = vrot.lane.b32.xlu0 %v2172, 127
      %v2230 = vpop.permute.xlu0 %2229
      %2231 = vrot.lane.b32.xlu0 %v2173, 127
      %v2232 = vpop.permute.xlu0 %2231
      %2233 = vrot.lane.b32.xlu0 %v2174, 127
      %v2234 = vpop.permute.xlu0 %2233
      %2235 = vrot.lane.b32.xlu0 %v2175, 127
      %v2236 = vpop.permute.xlu0 %2235
      %2237 = vrot.lane.b32.xlu0 %v2176, 127
      %v2238 = vpop.permute.xlu0 %2237
      %2239 = vrot.lane.b32.xlu0 %v2177, 127
      %v2240 = vpop.permute.xlu0 %2239
      %2241 = vrot.lane.b32.xlu0 %v2178, 127
      %v2242 = vpop.permute.xlu0 %2241
      %2243 = vrot.lane.b32.xlu0 %v2179, 127
      %v2244 = vpop.permute.xlu0 %2243
      %2245 = vrot.lane.b32.xlu0 %v2180, 127
      %v2246 = vpop.permute.xlu0 %2245
      %2247 = vrot.lane.b32.xlu0 %v2181, 127
      %v2248 = vpop.permute.xlu0 %2247
      %2249 = vrot.lane.b32.xlu0 %v2182, 127
      %v2250 = vpop.permute.xlu0 %2249
      %2251 = vrot.lane.b32.xlu0 %v2183, 127
      %v2252 = vpop.permute.xlu0 %2251
      %2253 = vrot.lane.b32.xlu0 %v2184, 127
      %v2254 = vpop.permute.xlu0 %2253
      %2255 = vrot.lane.b32.xlu0 %v2185, 127
      %v2256 = vpop.permute.xlu0 %2255
      %2257 = vrot.lane.b32.xlu0 %v2186, 127
      %v2258 = vpop.permute.xlu0 %2257
      %v2283 = vmax.f32 %v2163, %v2212
      %v2284 = vmax.f32 %v2164, %v2214
      %v2285 = vmax.f32 %v2165, %v2216
      %v2286 = vmax.f32 %v2166, %v2218
      %v2287 = vmax.f32 %v2167, %v2220
      %v2288 = vmax.f32 %v2168, %v2222
      %v2289 = vmax.f32 %v2169, %v2224
      %v2290 = vmax.f32 %v2170, %v2226
      %v2291 = vmax.f32 %v2171, %v2228
      %v2292 = vmax.f32 %v2172, %v2230
      %v2293 = vmax.f32 %v2173, %v2232
      %v2294 = vmax.f32 %v2174, %v2234
      %v2295 = vmax.f32 %v2175, %v2236
      %v2296 = vmax.f32 %v2176, %v2238
      %v2297 = vmax.f32 %v2177, %v2240
      %v2298 = vmax.f32 %v2178, %v2242
      %v2299 = vmax.f32 %v2179, %v2244
      %v2300 = vmax.f32 %v2180, %v2246
      %v2301 = vmax.f32 %v2181, %v2248
      %v2302 = vmax.f32 %v2182, %v2250
      %v2303 = vmax.f32 %v2183, %v2252
      %v2304 = vmax.f32 %v2184, %v2254
      %v2305 = vmax.f32 %v2185, %v2256
      %v2306 = vmax.f32 %v2186, %v2258
      %v2307 = vld [vmem:[%s3] sm:$0xff]
      %v2308 = vld [vmem:[%s3 + $0x8] sm:$0xff]
      %v2309 = vld [vmem:[%s3 + $0x10] sm:$0xff]
      %v2310 = vld [vmem:[%s3 + $0x18] sm:$0xff]
      %v2311 = vld [vmem:[%s3 + $0x20] sm:$0xff]
      %v2312 = vld [vmem:[%s3 + $0x28] sm:$0xff]
      %v2313 = vld [vmem:[%s3 + $0x30] sm:$0xff]
      %v2314 = vld [vmem:[%s3 + $0x38] sm:$0xff]
      %v2315 = vld [vmem:[%s3 + $0x40] sm:$0xff]
      %v2316 = vld [vmem:[%s3 + $0x48] sm:$0xff]
      %v2317 = vld [vmem:[%s3 + $0x50] sm:$0xff]
      %v2318 = vld [vmem:[%s3 + $0x58] sm:$0xff]
      %v2319 = vld [vmem:[%s3 + $0x60] sm:$0xff]
      %v2320 = vld [vmem:[%s3 + $0x68] sm:$0xff]
      %v2321 = vld [vmem:[%s3 + $0x70] sm:$0xff]
      %v2322 = vld [vmem:[%s3 + $0x78] sm:$0xff]
      %v2323 = vld [vmem:[%s3 + $0x80] sm:$0xff]
      %v2324 = vld [vmem:[%s3 + $0x88] sm:$0xff]
      %v2325 = vld [vmem:[%s3 + $0x90] sm:$0xff]
      %v2326 = vld [vmem:[%s3 + $0x98] sm:$0xff]
      %v2327 = vld [vmem:[%s3 + $0xa0] sm:$0xff]
      %v2328 = vld [vmem:[%s3 + $0xa8] sm:$0xff]
      %v2329 = vld [vmem:[%s3 + $0xb0] sm:$0xff]
      %v2330 = vld [vmem:[%s3 + $0xb8] sm:$0xff]
      %vm2331 = vcmask 515072
      %v2333 = vsel %vm2331, %v2308, 0
      %v2336 = vsel %vm2331, %v2310, 0
      %v2339 = vsel %vm2331, %v2312, 0
      %v2342 = vsel %vm2331, %v2314, 0
      %v2345 = vsel %vm2331, %v2316, 0
      %v2348 = vsel %vm2331, %v2318, 0
      %v2351 = vsel %vm2331, %v2320, 0
      %v2354 = vsel %vm2331, %v2322, 0
      %v2357 = vsel %vm2331, %v2324, 0
      %v2360 = vsel %vm2331, %v2326, 0
      %v2363 = vsel %vm2331, %v2328, 0
      %v2366 = vsel %vm2331, %v2330, 0
      %v2369 = vsel %vm2091, %v2306, 0
      %2371 = vmatprep.subr.mxu0 0.0
      %2372 = vmatpush1.msra.mxu0 %v2283
      %2373 = vmatprep.subr.mxu0 0.0
      %2374 = vmatpush1.msra.mxu0 %v2284
      %2375 = vmatprep.subr.mxu0 0.0
      %2376 = vmatpush1.msra.mxu0 %v2285
      %2377 = vmatprep.subr.mxu0 0.0
      %2378 = vmatpush1.msra.mxu0 %v2286
      %2379 = vmatprep.subr.mxu0 0.0
      %2380 = vmatpush1.msra.mxu0 %v2287
      %2381 = vmatprep.subr.mxu0 0.0
      %2382 = vmatpush1.msra.mxu0 %v2288
      %2383 = vmatprep.subr.mxu0 0.0
      %2384 = vmatpush1.msra.mxu0 %v2289
      %2385 = vmatprep.subr.mxu0 0.0
      %2386 = vmatpush1.msra.mxu0 %v2290
      %2387 = vmatprep.subr.mxu0 0.0
      %2388 = vmatpush1.msra.mxu0 %v2291
      %2389 = vmatprep.subr.mxu0 0.0
      %2390 = vmatpush1.msra.mxu0 %v2292
      %2391 = vmatprep.subr.mxu0 0.0
      %2392 = vmatpush1.msra.mxu0 %v2293
      %2393 = vmatprep.subr.mxu0 0.0
      %2394 = vmatpush1.msra.mxu0 %v2294
      %2395 = vmatprep.subr.mxu0 0.0
      %2396 = vmatpush1.msra.mxu0 %v2295
      %2397 = vmatprep.subr.mxu0 0.0
      %2398 = vmatpush1.msra.mxu0 %v2296
      %2399 = vmatprep.subr.mxu0 0.0
      %2400 = vmatpush1.msra.mxu0 %v2297
      %2401 = vmatprep.subr.mxu0 0.0
      %2402 = vmatpush1.msra.mxu0 %v2298
      %2403 = vmatprep.subr.mxu0 0.0
      %2404 = vmatpush1.msra.mxu0 %v2299
      %2405 = vmatprep.subr.mxu0 0.0
      %2406 = vmatpush1.msra.mxu0 %v2300
      %2407 = vmatprep.subr.mxu0 0.0
      %2408 = vmatpush1.msra.mxu0 %v2301
      %2409 = vmatprep.subr.mxu0 0.0
      %2410 = vmatpush1.msra.mxu0 %v2302
      %2411 = vmatprep.subr.mxu0 0.0
      %2412 = vmatpush1.msra.mxu0 %v2303
      %2413 = vmatprep.subr.mxu0 0.0
      %2414 = vmatpush1.msra.mxu0 %v2304
      %2415 = vmatprep.subr.mxu0 0.0
      %2416 = vmatpush1.msra.mxu0 %v2305
      %2417 = vmatprep.subr.mxu0 0.0
      %2418 = vmatpush1.msra.mxu0 %v2369
      %2419 = vmatprep.subr.mxu0 0.0
      %2420 = vmatpush1.msra.mxu0 0.0
      %2421 = vmatprep.subr.mxu0 0.0
      %2422 = vmatpush1.msra.mxu0 0.0
      %2423 = vmatprep.subr.mxu0 0.0
      %2424 = vmatpush1.msra.mxu0 0.0
      %2425 = vmatprep.subr.mxu0 0.0
      %2426 = vmatpush1.msra.mxu0 0.0
      %2427 = vmatprep.subr.mxu0 0.0
      %2428 = vmatpush1.msra.mxu0 0.0
      %2429 = vmatprep.subr.mxu0 0.0
      %2430 = vmatpush1.msra.mxu0 0.0
      %2431 = vmatprep.subr.mxu0 0.0
      %2432 = vmatpush1.msra.mxu0 0.0
      %2433 = vmatprep.subr.mxu0 0.0
      %2434 = vmatpush1.msra.mxu0 0.0
      %2435 = vmatprep.mubr.f32.mxu0 %v2333
      %2436 = vmatmul.mubr.f32.gmra.mrb[0].mxu0 %v2307
      %v2437 = vpop.f32.mrb[0].mxu0
      %v2438 = vadd.f32 0.0, %v2437
      %v2439 = vpop.f32.mrb[0].mxu0
      %2440 = vmatprep.mubr.f32.mxu0 %v2336
      %2441 = vmatmul.mubr.f32.gmra.mrb[0].mxu0 %v2309
      %v2442 = vpop.f32.mrb[0].mxu0
      %v2443 = vadd.f32 0.0, %v2442
      %v2444 = vpop.f32.mrb[0].mxu0
      %2445 = vmatprep.mubr.f32.mxu0 %v2339
      %2446 = vmatmul.mubr.f32.gmra.mrb[0].mxu0 %v2311
      %v2447 = vpop.f32.mrb[0].mxu0
      %v2448 = vadd.f32 0.0, %v2447
      %v2449 = vpop.f32.mrb[0].mxu0
      %2450 = vmatprep.mubr.f32.mxu0 %v2342
      %2451 = vmatmul.mubr.f32.gmra.mrb[0].mxu0 %v2313
      %v2452 = vpop.f32.mrb[0].mxu0
      %v2453 = vadd.f32 0.0, %v2452
      %v2454 = vpop.f32.mrb[0].mxu0
      %2455 = vmatprep.mubr.f32.mxu0 %v2345
      %2456 = vmatmul.mubr.f32.gmra.mrb[0].mxu0 %v2315
      %v2457 = vpop.f32.mrb[0].mxu0
      %v2458 = vadd.f32 0.0, %v2457
      %v2459 = vpop.f32.mrb[0].mxu0
      %2460 = vmatprep.mubr.f32.mxu0 %v2348
      %2461 = vmatmul.mubr.f32.gmra.mrb[0].mxu0 %v2317
      %v2462 = vpop.f32.mrb[0].mxu0
      %v2463 = vadd.f32 0.0, %v2462
      %v2464 = vpop.f32.mrb[0].mxu0
      %2465 = vmatprep.mubr.f32.mxu0 %v2351
      %2466 = vmatmul.mubr.f32.gmra.mrb[0].mxu0 %v2319
      %v2467 = vpop.f32.mrb[0].mxu0
      %v2468 = vadd.f32 0.0, %v2467
      %v2469 = vpop.f32.mrb[0].mxu0
      %2470 = vmatprep.mubr.f32.mxu0 %v2354
      %2471 = vmatmul.mubr.f32.gmra.mrb[0].mxu0 %v2321
      %v2472 = vpop.f32.mrb[0].mxu0
      %v2473 = vadd.f32 0.0, %v2472
      %v2474 = vpop.f32.mrb[0].mxu0
      %2475 = vmatprep.mubr.f32.mxu0 %v2357
      %2476 = vmatmul.mubr.f32.gmra.mrb[0].mxu0 %v2323
      %v2477 = vpop.f32.mrb[0].mxu0
      %v2478 = vadd.f32 0.0, %v2477
      %v2479 = vpop.f32.mrb[0].mxu0
      %2480 = vmatprep.mubr.f32.mxu0 %v2360
      %2481 = vmatmul.mubr.f32.gmra.mrb[0].mxu0 %v2325
      %v2482 = vpop.f32.mrb[0].mxu0
      %v2483 = vadd.f32 0.0, %v2482
      %v2484 = vpop.f32.mrb[0].mxu0
      %2485 = vmatprep.mubr.f32.mxu0 %v2363
      %2486 = vmatmul.mubr.f32.gmra.mrb[0].mxu0 %v2327
      %v2487 = vpop.f32.mrb[0].mxu0
      %v2488 = vadd.f32 0.0, %v2487
      %v2489 = vpop.f32.mrb[0].mxu0
      %2490 = vmatprep.mubr.f32.mxu0 %v2366
      %2491 = vmatmul.mubr.f32.gmra.mrb[0].mxu0 %v2329
      %v2492 = vpop.f32.mrb[0].mxu0
      %v2493 = vadd.f32 0.0, %v2492
      %v2494 = vpop.f32.mrb[0].mxu0
      %2495 = vdwg.mxu0
      %v2496 = vld [vmem:[%s4] sm:$0xff]
      %v2497 = vld [vmem:[%s4 + $0x8] sm:$0x7]
      %vm2498 = vcmask 89088
      %v2500 = vsel %vm2498, %v2438, 0
      %v2503 = vsel %vm2498, %v2443, 0
      %v2506 = vsel %vm2498, %v2448, 0
      %v2509 = vsel %vm2498, %v2453, 0
      %v2512 = vsel %vm2498, %v2458, 0
      %v2515 = vsel %vm2498, %v2463, 0
      %v2518 = vsel %vm2498, %v2468, 0
      %v2521 = vsel %vm2498, %v2473, 0
      %v2524 = vsel %vm2498, %v2478, 0
      %v2527 = vsel %vm2498, %v2483, 0
      %v2530 = vsel %vm2498, %v2488, 0
      %v2533 = vsel %vm2498, %v2493, 0
      %vm2535 = vcmask 1042432
      %v2537 = vsel %vm2535, %v2497, 0
      %2539 = vmatprep.subr.mxu0 0.0
      %2540 = vmatpush1.msra.mxu0 %v2496
      %2541 = vmatprep.subr.mxu0 0.0
      %2542 = vmatpush1.msra.mxu0 %v2537
      %2543 = vmatprep.subr.mxu0 0.0
      %2544 = vmatpush1.msra.mxu0 0.0
      %2545 = vmatprep.subr.mxu0 0.0
      %2546 = vmatpush1.msra.mxu0 0.0
      %2547 = vmatprep.subr.mxu0 0.0
      %2548 = vmatpush1.msra.mxu0 0.0
      %2549 = vmatprep.subr.mxu0 0.0
      %2550 = vmatpush1.msra.mxu0 0.0
      %2551 = vmatprep.subr.mxu0 0.0
      %2552 = vmatpush1.msra.mxu0 0.0
      %2553 = vmatprep.subr.mxu0 0.0
      %2554 = vmatpush1.msra.mxu0 0.0
      %2555 = vmatprep.subr.mxu0 0.0
      %2556 = vmatpush1.msra.mxu0 0.0
      %2557 = vmatprep.subr.mxu0 0.0
      %2558 = vmatpush1.msra.mxu0 0.0
      %2559 = vmatprep.subr.mxu0 0.0
      %2560 = vmatpush1.msra.mxu0 0.0
      %2561 = vmatprep.subr.mxu0 0.0
      %2562 = vmatpush1.msra.mxu0 0.0
      %2563 = vmatprep.subr.mxu0 0.0
      %2564 = vmatpush1.msra.mxu0 0.0
      %2565 = vmatprep.subr.mxu0 0.0
      %2566 = vmatpush1.msra.mxu0 0.0
      %2567 = vmatprep.subr.mxu0 0.0
      %2568 = vmatpush1.msra.mxu0 0.0
      %2569 = vmatprep.subr.mxu0 0.0
      %2570 = vmatpush1.msra.mxu0 0.0
      %2571 = vmatprep.subr.mxu0 0.0
      %2572 = vmatpush1.msra.mxu0 0.0
      %2573 = vmatprep.subr.mxu0 0.0
      %2574 = vmatpush1.msra.mxu0 0.0
      %2575 = vmatprep.subr.mxu0 0.0
      %2576 = vmatpush1.msra.mxu0 0.0
      %2577 = vmatprep.subr.mxu0 0.0
      %2578 = vmatpush1.msra.mxu0 0.0
      %2579 = vmatprep.subr.mxu0 0.0
      %2580 = vmatpush1.msra.mxu0 0.0
      %2581 = vmatprep.subr.mxu0 0.0
      %2582 = vmatpush1.msra.mxu0 0.0
      %2583 = vmatprep.subr.mxu0 0.0
      %2584 = vmatpush1.msra.mxu0 0.0
      %2585 = vmatprep.subr.mxu0 0.0
      %2586 = vmatpush1.msra.mxu0 0.0
      %2587 = vmatprep.subr.mxu0 0.0
      %2588 = vmatpush1.msra.mxu0 0.0
      %2589 = vmatprep.subr.mxu0 0.0
      %2590 = vmatpush1.msra.mxu0 0.0
      %2591 = vmatprep.subr.mxu0 0.0
      %2592 = vmatpush1.msra.mxu0 0.0
      %2593 = vmatprep.subr.mxu0 0.0
      %2594 = vmatpush1.msra.mxu0 0.0
      %2595 = vmatprep.subr.mxu0 0.0
      %2596 = vmatpush1.msra.mxu0 0.0
      %2597 = vmatprep.subr.mxu0 0.0
      %2598 = vmatpush1.msra.mxu0 0.0
      %2599 = vmatprep.subr.mxu0 0.0
      %2600 = vmatpush1.msra.mxu0 0.0
      %2601 = vmatprep.subr.mxu0 0.0
      %2602 = vmatpush1.msra.mxu0 0.0
      %2603 = vmatprep.mubr.f32.mxu0 0.0
      %2604 = vmatmul.mubr.f32.gmra.mrb[0].mxu0 %v2500
      %v2605 = vpop.f32.mrb[0].mxu0
      %v2606 = vadd.f32 0.0, %v2605
      %v2607 = vpop.f32.mrb[0].mxu0
      %2608 = vmatprep.mubr.f32.mxu0 0.0
      %2609 = vmatmul.mubr.f32.gmra.mrb[0].mxu0 %v2503
      %v2610 = vpop.f32.mrb[0].mxu0
      %v2611 = vadd.f32 0.0, %v2610
      %v2612 = vpop.f32.mrb[0].mxu0
      %2613 = vmatprep.mubr.f32.mxu0 0.0
      %2614 = vmatmul.mubr.f32.gmra.mrb[0].mxu0 %v2506
      %v2615 = vpop.f32.mrb[0].mxu0
      %v2616 = vadd.f32 0.0, %v2615
      %v2617 = vpop.f32.mrb[0].mxu0
      %2618 = vmatprep.mubr.f32.mxu0 0.0
      %2619 = vmatmul.mubr.f32.gmra.mrb[0].mxu0 %v2509
      %v2620 = vpop.f32.mrb[0].mxu0
      %v2621 = vadd.f32 0.0, %v2620
      %v2622 = vpop.f32.mrb[0].mxu0
      %2623 = vmatprep.mubr.f32.mxu0 0.0
      %2624 = vmatmul.mubr.f32.gmra.mrb[0].mxu0 %v2512
      %v2625 = vpop.f32.mrb[0].mxu0
      %v2626 = vadd.f32 0.0, %v2625
      %v2627 = vpop.f32.mrb[0].mxu0
      %2628 = vmatprep.mubr.f32.mxu0 0.0
      %2629 = vmatmul.mubr.f32.gmra.mrb[0].mxu0 %v2515
      %v2630 = vpop.f32.mrb[0].mxu0
      %v2631 = vadd.f32 0.0, %v2630
      %v2632 = vpop.f32.mrb[0].mxu0
      %2633 = vmatprep.mubr.f32.mxu0 0.0
      %2634 = vmatmul.mubr.f32.gmra.mrb[0].mxu0 %v2518
      %v2635 = vpop.f32.mrb[0].mxu0
      %v2636 = vadd.f32 0.0, %v2635
      %v2637 = vpop.f32.mrb[0].mxu0
      %2638 = vmatprep.mubr.f32.mxu0 0.0
      %2639 = vmatmul.mubr.f32.gmra.mrb[0].mxu0 %v2521
      %v2640 = vpop.f32.mrb[0].mxu0
      %v2641 = vadd.f32 0.0, %v2640
      %v2642 = vpop.f32.mrb[0].mxu0
      %2643 = vmatprep.mubr.f32.mxu0 0.0
      %2644 = vmatmul.mubr.f32.gmra.mrb[0].mxu0 %v2524
      %v2645 = vpop.f32.mrb[0].mxu0
      %v2646 = vadd.f32 0.0, %v2645
      %v2647 = vpop.f32.mrb[0].mxu0
      %2648 = vmatprep.mubr.f32.mxu0 0.0
      %2649 = vmatmul.mubr.f32.gmra.mrb[0].mxu0 %v2527
      %v2650 = vpop.f32.mrb[0].mxu0
      %v2651 = vadd.f32 0.0, %v2650
      %v2652 = vpop.f32.mrb[0].mxu0
      %2653 = vmatprep.mubr.f32.mxu0 0.0
      %2654 = vmatmul.mubr.f32.gmra.mrb[0].mxu0 %v2530
      %v2655 = vpop.f32.mrb[0].mxu0
      %v2656 = vadd.f32 0.0, %v2655
      %v2657 = vpop.f32.mrb[0].mxu0
      %2658 = vmatprep.mubr.f32.mxu0 0.0
      %2659 = vmatmul.mubr.f32.gmra.mrb[0].mxu0 %v2533
      %v2660 = vpop.f32.mrb[0].mxu0
      %v2661 = vadd.f32 0.0, %v2660
      %v2662 = vpop.f32.mrb[0].mxu0
      %2663 = vdwg.mxu0
      %vm2664 = vcmask 48128
      %2665 = vst.msk [vmem:[%s224] sm:$0xff] %vm2664, %v2606
      %2666 = vst.msk [vmem:[%s224 + $0x8] sm:$0xff] %vm2664, %v2611
      %2667 = vst.msk [vmem:[%s224 + $0x10] sm:$0xff] %vm2664, %v2616
      %2668 = vst.msk [vmem:[%s224 + $0x18] sm:$0xff] %vm2664, %v2621
      %2669 = vst.msk [vmem:[%s224 + $0x20] sm:$0xff] %vm2664, %v2626
      %2670 = vst.msk [vmem:[%s224 + $0x28] sm:$0xff] %vm2664, %v2631
      %2671 = vst.msk [vmem:[%s224 + $0x30] sm:$0xff] %vm2664, %v2636
      %2672 = vst.msk [vmem:[%s224 + $0x38] sm:$0xff] %vm2664, %v2641
      %2673 = vst.msk [vmem:[%s224 + $0x40] sm:$0xff] %vm2664, %v2646
      %2674 = vst.msk [vmem:[%s224 + $0x48] sm:$0xff] %vm2664, %v2651
      %2675 = vst.msk [vmem:[%s224 + $0x50] sm:$0xff] %vm2664, %v2656
      %2676 = vst.msk [vmem:[%s224 + $0x58] sm:$0xff] %vm2664, %v2661
      %p2677 = scmp.lt.s32.totalorder %s16, 1
      %s2678 = scalar_select %p2677, %s16, 1
      %s2679 = smul.addr %s2678, 12
      %s2680 = smul.addr %s2679, 8
      %s2681 = scalar_lea.vmem %s5, %s2680
      // Predicated region
      $region41: #{net_forward.4} parent=39 // pred_check
        %p2682 = pneg %p144
      $region42: #{net_forward.4} parent=39 // pred_check_branch
        %2684 = sbr.rel (%p2682) target = $region44
      $region43: #{net_forward.4} parent=39 // pred_region
        _
      $region44: #{net_forward.4} parent=39 // pred_fallthru
        _
    $region40: #{net_forward.4} parent=5 // pred_fallthru
      _
    %p2685 = scmp.le.s32.totalorder 2, %s11
    // Predicated region
    $region45: #{net_forward.4} parent=5 // pred_check
      %p2686 = pneg %p2685
    $region46: #{net_forward.4} parent=5 // pred_check_branch
      %2688 = sbr.rel (%p2686) target = $region48
    $region47: #{net_forward.4} parent=5 // pred_region
      %s2689 = ssub.s32 %s11, 2
      // Predicated region
      $region49: #{net_forward.4} parent=47 // pred_check
        %p2690 = pneg %p150
      $region50: #{net_forward.4} parent=47 // pred_check_branch
        %2692 = sbr.rel (%p2690) target = $region52
      $region51: #{net_forward.4} parent=47 // pred_region
        %p2693 = scmp.lt.s32.totalorder %s17, 1
        %s2694 = scalar_select %p2693, %s17, 1
        %s2695 = smul.addr %s2694, 12
        %s2696 = smul.addr %s2695, 8
        %s2697 = scalar_lea.vmem %s5, %s2696
      $region52: #{net_forward.4} parent=47 // pred_fallthru
        _
    $region48: #{net_forward.4} parent=5 // pred_fallthru
      _
  $region6: #{net_forward.4} parent=0 // loop_footer
    %s15 = sadd.s32 1, %s11
  $region7: #{net_forward.4} parent=0 // loop_footer_branch
    %10 = sbr.rel target = $region3
  $region8: #{net_forward.4} parent=0 // loop_exit
    _

// kernel: net_forward.5
$region0: #{net_forward.5}
  #allocation0 [shape = 'u32[]', space=smem, size = 0x4, offset = 0x4, fixed_abs, tag = 'smem constant byte address 0x4 - core index']
  #allocation1 [shape = 'u32[144,128]{1,0:T(1,128)}', space=vmem, size = 0x12000, scoped, tag = 'internal scratch']
  %s0 = inlined_call_operand.vmem [shape: f32[2,576], index: 0, kind: input, shape index: {}]
  %s1 = inlined_call_operand.vmem [shape: f32[576,32], index: 1, kind: input, shape index: {}]
  %s2 = inlined_call_operand.vmem [shape: f32[1,32], index: 2, kind: input, shape index: {}]
  %s3 = inlined_call_operand.vmem [shape: f32[32,16], index: 3, kind: input, shape index: {}]
  %s4 = inlined_call_operand.vmem [shape: f32[1,16], index: 4, kind: input, shape index: {}]
  %s5 = inlined_call_operand.vmem [shape: f32[16,2], index: 5, kind: input, shape index: {}]
  %s6 = inlined_call_operand.vmem [shape: f32[1,2], index: 6, kind: input, shape index: {}]
  %s7 = inlined_call_operand.hbm [shape: f32[2,2], index: 7, kind: output, shape index: {}]
  %s8 = sld [smem:[#allocation0]]
  $region38: #{net_forward.5} parent=0
    _
  %s10 = ssub.s32 1, %s8
  %s11 = scalar_select 0, %s10, %s8
  $region1: #{net_forward.5} parent=0
    #allocation2 [shape = 'u8[1024]{0}', space=vmem, size = 0x400, scoped, tag = 'output window, operand 0, single buffered']
    #allocation3 [shape = 's32[1]{0}', space=sflag, size = 0x4, scoped, tag = 'scoped memory for net_forward.5']
    %12 = vsyncpa [#allocation3], 0
    // Predicated region
    $region2: #{net_forward.5} parent=1 // pred_check
      _
    $region3: #{net_forward.5} parent=1 // pred_check_branch
      %14 = sbr.rel (0) target = $region5
    $region4: #{net_forward.5} parent=1 // pred_region
      _
    $region5: #{net_forward.5} parent=1 // pred_fallthru
      _
    // Predicated region
    $region6: #{net_forward.5} parent=1 // pred_check
      _
    $region7: #{net_forward.5} parent=1 // pred_check_branch
      %16 = sbr.rel (0) target = $region9
    $region8: #{net_forward.5} parent=1 // pred_region
      _
    $region9: #{net_forward.5} parent=1 // pred_fallthru
      _
    // Predicated region
    $region10: #{net_forward.5} parent=1 // pred_check
      _
    $region11: #{net_forward.5} parent=1 // pred_check_branch
      %18 = sbr.rel (0) target = $region13
    $region12: #{net_forward.5} parent=1 // pred_region
      _
    $region13: #{net_forward.5} parent=1 // pred_fallthru
      _
    // Predicated region
    $region14: #{net_forward.5} parent=1 // pred_check
      _
    $region15: #{net_forward.5} parent=1 // pred_check_branch
      %20 = sbr.rel (0) target = $region17
    $region16: #{net_forward.5} parent=1 // pred_region
      _
    $region17: #{net_forward.5} parent=1 // pred_fallthru
      _
    // Predicated region
    $region18: #{net_forward.5} parent=1 // pred_check
      _
    $region19: #{net_forward.5} parent=1 // pred_check_branch
      %22 = sbr.rel (0) target = $region21
    $region20: #{net_forward.5} parent=1 // pred_region
      _
    $region21: #{net_forward.5} parent=1 // pred_fallthru
      _
    // Predicated region
    $region22: #{net_forward.5} parent=1 // pred_check
      _
    $region23: #{net_forward.5} parent=1 // pred_check_branch
      %24 = sbr.rel (0) target = $region25
    $region24: #{net_forward.5} parent=1 // pred_region
      _
    $region25: #{net_forward.5} parent=1 // pred_fallthru
      _
    // Predicated region
    $region26: #{net_forward.5} parent=1 // pred_check
      _
    $region27: #{net_forward.5} parent=1 // pred_check_branch
      %26 = sbr.rel (0) target = $region29
    $region28: #{net_forward.5} parent=1 // pred_region
      _
    $region29: #{net_forward.5} parent=1 // pred_fallthru
      _
    %v27 = vld [vmem:[%s0] sm:$0xff]
    %v28 = vld [vmem:[%s0 + $0x8] sm:$0x3]
    %v29 = vld [vmem:[%s1] sm:$0xff]
    %v30 = vld [vmem:[%s1 + $0x8] sm:$0xff]
    %v31 = vld [vmem:[%s1 + $0x10] sm:$0xff]
    %v32 = vld [vmem:[%s1 + $0x18] sm:$0xff]
    %v33 = vld [vmem:[%s1 + $0x20] sm:$0xff]
    %v34 = vld [vmem:[%s1 + $0x28] sm:$0xff]
    %v35 = vld [vmem:[%s1 + $0x30] sm:$0xff]
    %v36 = vld [vmem:[%s1 + $0x38] sm:$0xff]
    %v37 = vld [vmem:[%s1 + $0x40] sm:$0xff]
    %v38 = vld [vmem:[%s1 + $0x48] sm:$0xff]
    %v39 = vld [vmem:[%s1 + $0x50] sm:$0xff]
    %v40 = vld [vmem:[%s1 + $0x58] sm:$0xff]
    %v41 = vld [vmem:[%s1 + $0x60] sm:$0xff]
    %v42 = vld [vmem:[%s1 + $0x68] sm:$0xff]
    %v43 = vld [vmem:[%s1 + $0x70] sm:$0xff]
    %v44 = vld [vmem:[%s1 + $0x78] sm:$0xff]
    %v45 = vld [vmem:[%s1 + $0x80] sm:$0xff]
    %v46 = vld [vmem:[%s1 + $0x88] sm:$0xff]
    %v47 = vld [vmem:[%s1 + $0x90] sm:$0xff]
    %v48 = vld [vmem:[%s1 + $0x98] sm:$0xff]
    %v49 = vld [vmem:[%s1 + $0xa0] sm:$0xff]
    %v50 = vld [vmem:[%s1 + $0xa8] sm:$0xff]
    %v51 = vld [vmem:[%s1 + $0xb0] sm:$0xff]
    %v52 = vld [vmem:[%s1 + $0xb8] sm:$0xff]
    %v53 = vld [vmem:[%s1 + $0xc0] sm:$0xff]
    %v54 = vld [vmem:[%s1 + $0xc8] sm:$0xff]
    %v55 = vld [vmem:[%s1 + $0xd0] sm:$0xff]
    %v56 = vld [vmem:[%s1 + $0xd8] sm:$0xff]
    %v57 = vld [vmem:[%s1 + $0xe0] sm:$0xff]
    %v58 = vld [vmem:[%s1 + $0xe8] sm:$0xff]
    %v59 = vld [vmem:[%s1 + $0xf0] sm:$0xff]
    %v60 = vld [vmem:[%s1 + $0xf8] sm:$0xff]
    %v61 = vld [vmem:[%s1 + $0x100] sm:$0xff]
    %v62 = vld [vmem:[%s1 + $0x108] sm:$0xff]
    %v63 = vld [vmem:[%s1 + $0x110] sm:$0xff]
    %v64 = vld [vmem:[%s1 + $0x118] sm:$0xff]
    %v65 = vld [vmem:[%s1 + $0x120] sm:$0xff]
    %v66 = vld [vmem:[%s1 + $0x128] sm:$0xff]
    %v67 = vld [vmem:[%s1 + $0x130] sm:$0xff]
    %v68 = vld [vmem:[%s1 + $0x138] sm:$0xff]
    %v69 = vld [vmem:[%s1 + $0x140] sm:$0xff]
    %v70 = vld [vmem:[%s1 + $0x148] sm:$0xff]
    %v71 = vld [vmem:[%s1 + $0x150] sm:$0xff]
    %v72 = vld [vmem:[%s1 + $0x158] sm:$0xff]
    %v73 = vld [vmem:[%s1 + $0x160] sm:$0xff]
    %v74 = vld [vmem:[%s1 + $0x168] sm:$0xff]
    %v75 = vld [vmem:[%s1 + $0x170] sm:$0xff]
    %v76 = vld [vmem:[%s1 + $0x178] sm:$0xff]
    %v77 = vld [vmem:[%s1 + $0x180] sm:$0xff]
    %v78 = vld [vmem:[%s1 + $0x188] sm:$0xff]
    %v79 = vld [vmem:[%s1 + $0x190] sm:$0xff]
    %v80 = vld [vmem:[%s1 + $0x198] sm:$0xff]
    %v81 = vld [vmem:[%s1 + $0x1a0] sm:$0xff]
    %v82 = vld [vmem:[%s1 + $0x1a8] sm:$0xff]
    %v83 = vld [vmem:[%s1 + $0x1b0] sm:$0xff]
    %v84 = vld [vmem:[%s1 + $0x1b8] sm:$0xff]
    %v85 = vld [vmem:[%s1 + $0x1c0] sm:$0xff]
    %v86 = vld [vmem:[%s1 + $0x1c8] sm:$0xff]
    %v87 = vld [vmem:[%s1 + $0x1d0] sm:$0xff]
    %v88 = vld [vmem:[%s1 + $0x1d8] sm:$0xff]
    %v89 = vld [vmem:[%s1 + $0x1e0] sm:$0xff]
    %v90 = vld [vmem:[%s1 + $0x1e8] sm:$0xff]
    %v91 = vld [vmem:[%s1 + $0x1f0] sm:$0xff]
    %v92 = vld [vmem:[%s1 + $0x1f8] sm:$0xff]
    %v93 = vld [vmem:[%s1 + $0x200] sm:$0xff]
    %v94 = vld [vmem:[%s1 + $0x208] sm:$0xff]
    %v95 = vld [vmem:[%s1 + $0x210] sm:$0xff]
    %v96 = vld [vmem:[%s1 + $0x218] sm:$0xff]
    %v97 = vld [vmem:[%s1 + $0x220] sm:$0xff]
    %v98 = vld [vmem:[%s1 + $0x228] sm:$0xff]
    %v99 = vld [vmem:[%s1 + $0x230] sm:$0xff]
    %v100 = vld [vmem:[%s1 + $0x238] sm:$0xff]
    %v101 = vld [vmem:[%s2] sm:$0x1]
    %v103 = vlaneseq
    %v104 = vshrl.u32 %v103, 7
    %v105 = vsub.s32 0, %v104
    %v106 = vrot.slane %v101, %v105
    %v110 = vcombine.high %v27, %v27
    %v112 = vunpack.c.l.s4 1983009808
    %v113 = vunpack.c.0.s8 %v112
    %v114 = vlaneseq
    %v115 = vshrl.u32 %v114, 7
    %v116 = vsub.s32 %v113, %v115
    %v117 = vrot.slane %v27, %v116
    %v119 = vunpack.c.l.s4 1983009808
    %v120 = vunpack.c.0.s8 %v119
    %v121 = vlaneseq
    %v122 = vshrl.u32 %v121, 7
    %v123 = vsub.s32 %v120, %v122
    %v124 = vrot.slane %v110, %v123
    %v125 = vcombine.high %v117, %v117
    %v126 = vcombine.high %v124, %v124
    %v128 = vunpack.c.l.s4 1983009808
    %v129 = vunpack.c.0.s8 %v128
    %v130 = vlaneseq
    %v131 = vshrl.u32 %v130, 7
    %v132 = vsub.s32 %v129, %v131
    %v133 = vrot.slane %v28, %v132
    %vm138 = vcmask 523264
    %v139 = vsel %vm138, %v133, 0
    %141 = vmatprep.subr.mxu0 0.0
    %142 = vmatpush1.msra.mxu0 %v29
    %143 = vmatprep.subr.mxu0 0.0
    %144 = vmatpush1.msra.mxu0 %v30
    %145 = vmatprep.subr.mxu0 0.0
    %146 = vmatpush1.msra.mxu0 %v31
    %147 = vmatprep.subr.mxu0 0.0
    %148 = vmatpush1.msra.mxu0 %v32
    %149 = vmatprep.subr.mxu0 0.0
    %150 = vmatpush1.msra.mxu0 %v33
    %151 = vmatprep.subr.mxu0 0.0
    %152 = vmatpush1.msra.mxu0 %v34
    %153 = vmatprep.subr.mxu0 0.0
    %154 = vmatpush1.msra.mxu0 %v35
    %155 = vmatprep.subr.mxu0 0.0
    %156 = vmatpush1.msra.mxu0 %v36
    %157 = vmatprep.subr.mxu0 0.0
    %158 = vmatpush1.msra.mxu0 %v37
    %159 = vmatprep.subr.mxu0 0.0
    %160 = vmatpush1.msra.mxu0 %v38
    %161 = vmatprep.subr.mxu0 0.0
    %162 = vmatpush1.msra.mxu0 %v39
    %163 = vmatprep.subr.mxu0 0.0
    %164 = vmatpush1.msra.mxu0 %v40
    %165 = vmatprep.subr.mxu0 0.0
    %166 = vmatpush1.msra.mxu0 %v41
    %167 = vmatprep.subr.mxu0 0.0
    %168 = vmatpush1.msra.mxu0 %v42
    %169 = vmatprep.subr.mxu0 0.0
    %170 = vmatpush1.msra.mxu0 %v43
    %171 = vmatprep.subr.mxu0 0.0
    %172 = vmatpush1.msra.mxu0 %v44
    %173 = vmatprep.subr.mxu0 0.0
    %174 = vmatpush1.msra.mxu0 %v45
    %175 = vmatprep.subr.mxu0 0.0
    %176 = vmatpush1.msra.mxu0 %v46
    %177 = vmatprep.subr.mxu0 0.0
    %178 = vmatpush1.msra.mxu0 %v47
    %179 = vmatprep.subr.mxu0 0.0
    %180 = vmatpush1.msra.mxu0 %v48
    %181 = vmatprep.subr.mxu0 0.0
    %182 = vmatpush1.msra.mxu0 %v49
    %183 = vmatprep.subr.mxu0 0.0
    %184 = vmatpush1.msra.mxu0 %v50
    %185 = vmatprep.subr.mxu0 0.0
    %186 = vmatpush1.msra.mxu0 %v51
    %187 = vmatprep.subr.mxu0 0.0
    %188 = vmatpush1.msra.mxu0 %v52
    %189 = vmatprep.subr.mxu0 0.0
    %190 = vmatpush1.msra.mxu0 %v53
    %191 = vmatprep.subr.mxu0 0.0
    %192 = vmatpush1.msra.mxu0 %v54
    %193 = vmatprep.subr.mxu0 0.0
    %194 = vmatpush1.msra.mxu0 %v55
    %195 = vmatprep.subr.mxu0 0.0
    %196 = vmatpush1.msra.mxu0 %v56
    %197 = vmatprep.subr.mxu0 0.0
    %198 = vmatpush1.msra.mxu0 %v57
    %199 = vmatprep.subr.mxu0 0.0
    %200 = vmatpush1.msra.mxu0 %v58
    %201 = vmatprep.subr.mxu0 0.0
    %202 = vmatpush1.msra.mxu0 %v59
    %203 = vmatprep.subr.mxu0 0.0
    %204 = vmatpush1.msra.mxu0 %v60
    %205 = vmatprep.mubr.f32.mxu0 %v125
    %206 = vmatmul.mubr.f32.gmra.mrb[0].mxu0 %v117
    %v207 = vpop.f32.mrb[0].mxu0
    %v208 = vadd.f32 %v106, %v207
    %v209 = vpop.f32.mrb[0].mxu0
    %210 = vdwg.mxu0
    %211 = vmatprep.subr.mxu0 0.0
    %212 = vmatpush1.msra.mxu0 %v61
    %213 = vmatprep.subr.mxu0 0.0
    %214 = vmatpush1.msra.mxu0 %v62
    %215 = vmatprep.subr.mxu0 0.0
    %216 = vmatpush1.msra.mxu0 %v63
    %217 = vmatprep.subr.mxu0 0.0
    %218 = vmatpush1.msra.mxu0 %v64
    %219 = vmatprep.subr.mxu0 0.0
    %220 = vmatpush1.msra.mxu0 %v65
    %221 = vmatprep.subr.mxu0 0.0
    %222 = vmatpush1.msra.mxu0 %v66
    %223 = vmatprep.subr.mxu0 0.0
    %224 = vmatpush1.msra.mxu0 %v67
    %225 = vmatprep.subr.mxu0 0.0
    %226 = vmatpush1.msra.mxu0 %v68
    %227 = vmatprep.subr.mxu0 0.0
    %228 = vmatpush1.msra.mxu0 %v69
    %229 = vmatprep.subr.mxu0 0.0
    %230 = vmatpush1.msra.mxu0 %v70
    %231 = vmatprep.subr.mxu0 0.0
    %232 = vmatpush1.msra.mxu0 %v71
    %233 = vmatprep.subr.mxu0 0.0
    %234 = vmatpush1.msra.mxu0 %v72
    %235 = vmatprep.subr.mxu0 0.0
    %236 = vmatpush1.msra.mxu0 %v73
    %237 = vmatprep.subr.mxu0 0.0
    %238 = vmatpush1.msra.mxu0 %v74
    %239 = vmatprep.subr.mxu0 0.0
    %240 = vmatpush1.msra.mxu0 %v75
    %241 = vmatprep.subr.mxu0 0.0
    %242 = vmatpush1.msra.mxu0 %v76
    %243 = vmatprep.subr.mxu0 0.0
    %244 = vmatpush1.msra.mxu0 %v77
    %245 = vmatprep.subr.mxu0 0.0
    %246 = vmatpush1.msra.mxu0 %v78
    %247 = vmatprep.subr.mxu0 0.0
    %248 = vmatpush1.msra.mxu0 %v79
    %249 = vmatprep.subr.mxu0 0.0
    %250 = vmatpush1.msra.mxu0 %v80
    %251 = vmatprep.subr.mxu0 0.0
    %252 = vmatpush1.msra.mxu0 %v81
    %253 = vmatprep.subr.mxu0 0.0
    %254 = vmatpush1.msra.mxu0 %v82
    %255 = vmatprep.subr.mxu0 0.0
    %256 = vmatpush1.msra.mxu0 %v83
    %257 = vmatprep.subr.mxu0 0.0
    %258 = vmatpush1.msra.mxu0 %v84
    %259 = vmatprep.subr.mxu0 0.0
    %260 = vmatpush1.msra.mxu0 %v85
    %261 = vmatprep.subr.mxu0 0.0
    %262 = vmatpush1.msra.mxu0 %v86
    %263 = vmatprep.subr.mxu0 0.0
    %264 = vmatpush1.msra.mxu0 %v87
    %265 = vmatprep.subr.mxu0 0.0
    %266 = vmatpush1.msra.mxu0 %v88
    %267 = vmatprep.subr.mxu0 0.0
    %268 = vmatpush1.msra.mxu0 %v89
    %269 = vmatprep.subr.mxu0 0.0
    %270 = vmatpush1.msra.mxu0 %v90
    %271 = vmatprep.subr.mxu0 0.0
    %272 = vmatpush1.msra.mxu0 %v91
    %273 = vmatprep.subr.mxu0 0.0
    %274 = vmatpush1.msra.mxu0 %v92
    %275 = vmatprep.mubr.f32.mxu0 %v126
    %276 = vmatmul.mubr.f32.gmra.mrb[0].mxu0 %v124
    %v277 = vpop.f32.mrb[0].mxu0
    %v278 = vadd.f32 %v208, %v277
    %v279 = vpop.f32.mrb[0].mxu0
    %280 = vdwg.mxu0
    %281 = vmatprep.subr.mxu0 0.0
    %282 = vmatpush1.msra.mxu0 %v93
    %283 = vmatprep.subr.mxu0 0.0
    %284 = vmatpush1.msra.mxu0 %v94
    %285 = vmatprep.subr.mxu0 0.0
    %286 = vmatpush1.msra.mxu0 %v95
    %287 = vmatprep.subr.mxu0 0.0
    %288 = vmatpush1.msra.mxu0 %v96
    %289 = vmatprep.subr.mxu0 0.0
    %290 = vmatpush1.msra.mxu0 %v97
    %291 = vmatprep.subr.mxu0 0.0
    %292 = vmatpush1.msra.mxu0 %v98
    %293 = vmatprep.subr.mxu0 0.0
    %294 = vmatpush1.msra.mxu0 %v99
    %295 = vmatprep.subr.mxu0 0.0
    %296 = vmatpush1.msra.mxu0 %v100
    %297 = vmatprep.subr.mxu0 0.0
    %298 = vmatpush1.msra.mxu0 0.0
    %299 = vmatprep.subr.mxu0 0.0
    %300 = vmatpush1.msra.mxu0 0.0
    %301 = vmatprep.subr.mxu0 0.0
    %302 = vmatpush1.msra.mxu0 0.0
    %303 = vmatprep.subr.mxu0 0.0
    %304 = vmatpush1.msra.mxu0 0.0
    %305 = vmatprep.subr.mxu0 0.0
    %306 = vmatpush1.msra.mxu0 0.0
    %307 = vmatprep.subr.mxu0 0.0
    %308 = vmatpush1.msra.mxu0 0.0
    %309 = vmatprep.subr.mxu0 0.0
    %310 = vmatpush1.msra.mxu0 0.0
    %311 = vmatprep.subr.mxu0 0.0
    %312 = vmatpush1.msra.mxu0 0.0
    %313 = vmatprep.subr.mxu0 0.0
    %314 = vmatpush1.msra.mxu0 0.0
    %315 = vmatprep.subr.mxu0 0.0
    %316 = vmatpush1.msra.mxu0 0.0
    %317 = vmatprep.subr.mxu0 0.0
    %318 = vmatpush1.msra.mxu0 0.0
    %319 = vmatprep.subr.mxu0 0.0
    %320 = vmatpush1.msra.mxu0 0.0
    %321 = vmatprep.subr.mxu0 0.0
    %322 = vmatpush1.msra.mxu0 0.0
    %323 = vmatprep.subr.mxu0 0.0
    %324 = vmatpush1.msra.mxu0 0.0
    %325 = vmatprep.subr.mxu0 0.0
    %326 = vmatpush1.msra.mxu0 0.0
    %327 = vmatprep.subr.mxu0 0.0
    %328 = vmatpush1.msra.mxu0 0.0
    %329 = vmatprep.subr.mxu0 0.0
    %330 = vmatpush1.msra.mxu0 0.0
    %331 = vmatprep.subr.mxu0 0.0
    %332 = vmatpush1.msra.mxu0 0.0
    %333 = vmatprep.subr.mxu0 0.0
    %334 = vmatpush1.msra.mxu0 0.0
    %335 = vmatprep.subr.mxu0 0.0
    %336 = vmatpush1.msra.mxu0 0.0
    %337 = vmatprep.subr.mxu0 0.0
    %338 = vmatpush1.msra.mxu0 0.0
    %339 = vmatprep.subr.mxu0 0.0
    %340 = vmatpush1.msra.mxu0 0.0
    %341 = vmatprep.subr.mxu0 0.0
    %342 = vmatpush1.msra.mxu0 0.0
    %343 = vmatprep.subr.mxu0 0.0
    %344 = vmatpush1.msra.mxu0 0.0
    %345 = vmatprep.mubr.f32.mxu0 0.0
    %346 = vmatmul.mubr.f32.gmra.mrb[0].mxu0 %v139
    %v347 = vpop.f32.mrb[0].mxu0
    %v348 = vadd.f32 %v278, %v347
    %v349 = vpop.f32.mrb[0].mxu0
    %350 = vdwg.mxu0
    %v351 = vmax.f32 %v348, 0.0
    %v352 = vld [vmem:[%s3] sm:$0xff]
    %v353 = vld [vmem:[%s3 + $0x8] sm:$0xff]
    %v354 = vld [vmem:[%s3 + $0x10] sm:$0xff]
    %v355 = vld [vmem:[%s3 + $0x18] sm:$0xff]
    %v356 = vld [vmem:[%s4] sm:$0x1]
    %v358 = vlaneseq
    %v359 = vshrl.u32 %v358, 7
    %v360 = vsub.s32 0, %v359
    %v361 = vrot.slane %v356, %v360
    %vm363 = vcmask 261120
    %v365 = vsel %vm363, %v351, 0
    %367 = vmatprep.subr.mxu0 0.0
    %368 = vmatpush1.msra.mxu0 %v352
    %369 = vmatprep.subr.mxu0 0.0
    %370 = vmatpush1.msra.mxu0 %v353
    %371 = vmatprep.subr.mxu0 0.0
    %372 = vmatpush1.msra.mxu0 %v354
    %373 = vmatprep.subr.mxu0 0.0
    %374 = vmatpush1.msra.mxu0 %v355
    %375 = vmatprep.subr.mxu0 0.0
    %376 = vmatpush1.msra.mxu0 0.0
    %377 = vmatprep.subr.mxu0 0.0
    %378 = vmatpush1.msra.mxu0 0.0
    %379 = vmatprep.subr.mxu0 0.0
    %380 = vmatpush1.msra.mxu0 0.0
    %381 = vmatprep.subr.mxu0 0.0
    %382 = vmatpush1.msra.mxu0 0.0
    %383 = vmatprep.subr.mxu0 0.0
    %384 = vmatpush1.msra.mxu0 0.0
    %385 = vmatprep.subr.mxu0 0.0
    %386 = vmatpush1.msra.mxu0 0.0
    %387 = vmatprep.subr.mxu0 0.0
    %388 = vmatpush1.msra.mxu0 0.0
    %389 = vmatprep.subr.mxu0 0.0
    %390 = vmatpush1.msra.mxu0 0.0
    %391 = vmatprep.subr.mxu0 0.0
    %392 = vmatpush1.msra.mxu0 0.0
    %393 = vmatprep.subr.mxu0 0.0
    %394 = vmatpush1.msra.mxu0 0.0
    %395 = vmatprep.subr.mxu0 0.0
    %396 = vmatpush1.msra.mxu0 0.0
    %397 = vmatprep.subr.mxu0 0.0
    %398 = vmatpush1.msra.mxu0 0.0
    %399 = vmatprep.subr.mxu0 0.0
    %400 = vmatpush1.msra.mxu0 0.0
    %401 = vmatprep.subr.mxu0 0.0
    %402 = vmatpush1.msra.mxu0 0.0
    %403 = vmatprep.subr.mxu0 0.0
    %404 = vmatpush1.msra.mxu0 0.0
    %405 = vmatprep.subr.mxu0 0.0
    %406 = vmatpush1.msra.mxu0 0.0
    %407 = vmatprep.subr.mxu0 0.0
    %408 = vmatpush1.msra.mxu0 0.0
    %409 = vmatprep.subr.mxu0 0.0
    %410 = vmatpush1.msra.mxu0 0.0
    %411 = vmatprep.subr.mxu0 0.0
    %412 = vmatpush1.msra.mxu0 0.0
    %413 = vmatprep.subr.mxu0 0.0
    %414 = vmatpush1.msra.mxu0 0.0
    %415 = vmatprep.subr.mxu0 0.0
    %416 = vmatpush1.msra.mxu0 0.0
    %417 = vmatprep.subr.mxu0 0.0
    %418 = vmatpush1.msra.mxu0 0.0
    %419 = vmatprep.subr.mxu0 0.0
    %420 = vmatpush1.msra.mxu0 0.0
    %421 = vmatprep.subr.mxu0 0.0
    %422 = vmatpush1.msra.mxu0 0.0
    %423 = vmatprep.subr.mxu0 0.0
    %424 = vmatpush1.msra.mxu0 0.0
    %425 = vmatprep.subr.mxu0 0.0
    %426 = vmatpush1.msra.mxu0 0.0
    %427 = vmatprep.subr.mxu0 0.0
    %428 = vmatpush1.msra.mxu0 0.0
    %429 = vmatprep.subr.mxu0 0.0
    %430 = vmatpush1.msra.mxu0 0.0
    %431 = vmatprep.mubr.f32.mxu0 0.0
    %432 = vmatmul.mubr.f32.gmra.mrb[0].mxu0 %v365
    %v433 = vpop.f32.mrb[0].mxu0
    %v434 = vadd.f32 %v361, %v433
    %v435 = vpop.f32.mrb[0].mxu0
    %436 = vdwg.mxu0
    %v437 = vmax.f32 %v434, 0.0
    %v438 = vld [vmem:[%s5] sm:$0xff]
    %v439 = vld [vmem:[%s5 + $0x8] sm:$0xff]
    %v440 = vld [vmem:[%s6] sm:$0x1]
    %v442 = vlaneseq
    %v443 = vshrl.u32 %v442, 7
    %v444 = vsub.s32 0, %v443
    %v445 = vrot.slane %v440, %v444
    %vm447 = vcmask 130048
    %v449 = vsel %vm447, %v437, 0
    %451 = vmatprep.subr.mxu0 0.0
    %452 = vmatpush1.msra.mxu0 %v438
    %453 = vmatprep.subr.mxu0 0.0
    %454 = vmatpush1.msra.mxu0 %v439
    %455 = vmatprep.subr.mxu0 0.0
    %456 = vmatpush1.msra.mxu0 0.0
    %457 = vmatprep.subr.mxu0 0.0
    %458 = vmatpush1.msra.mxu0 0.0
    %459 = vmatprep.subr.mxu0 0.0
    %460 = vmatpush1.msra.mxu0 0.0
    %461 = vmatprep.subr.mxu0 0.0
    %462 = vmatpush1.msra.mxu0 0.0
    %463 = vmatprep.subr.mxu0 0.0
    %464 = vmatpush1.msra.mxu0 0.0
    %465 = vmatprep.subr.mxu0 0.0
    %466 = vmatpush1.msra.mxu0 0.0
    %467 = vmatprep.subr.mxu0 0.0
    %468 = vmatpush1.msra.mxu0 0.0
    %469 = vmatprep.subr.mxu0 0.0
    %470 = vmatpush1.msra.mxu0 0.0
    %471 = vmatprep.subr.mxu0 0.0
    %472 = vmatpush1.msra.mxu0 0.0
    %473 = vmatprep.subr.mxu0 0.0
    %474 = vmatpush1.msra.mxu0 0.0
    %475 = vmatprep.subr.mxu0 0.0
    %476 = vmatpush1.msra.mxu0 0.0
    %477 = vmatprep.subr.mxu0 0.0
    %478 = vmatpush1.msra.mxu0 0.0
    %479 = vmatprep.subr.mxu0 0.0
    %480 = vmatpush1.msra.mxu0 0.0
    %481 = vmatprep.subr.mxu0 0.0
    %482 = vmatpush1.msra.mxu0 0.0
    %483 = vmatprep.subr.mxu0 0.0
    %484 = vmatpush1.msra.mxu0 0.0
    %485 = vmatprep.subr.mxu0 0.0
    %486 = vmatpush1.msra.mxu0 0.0
    %487 = vmatprep.subr.mxu0 0.0
    %488 = vmatpush1.msra.mxu0 0.0
    %489 = vmatprep.subr.mxu0 0.0
    %490 = vmatpush1.msra.mxu0 0.0
    %491 = vmatprep.subr.mxu0 0.0
    %492 = vmatpush1.msra.mxu0 0.0
    %493 = vmatprep.subr.mxu0 0.0
    %494 = vmatpush1.msra.mxu0 0.0
    %495 = vmatprep.subr.mxu0 0.0
    %496 = vmatpush1.msra.mxu0 0.0
    %497 = vmatprep.subr.mxu0 0.0
    %498 = vmatpush1.msra.mxu0 0.0
    %499 = vmatprep.subr.mxu0 0.0
    %500 = vmatpush1.msra.mxu0 0.0
    %501 = vmatprep.subr.mxu0 0.0
    %502 = vmatpush1.msra.mxu0 0.0
    %503 = vmatprep.subr.mxu0 0.0
    %504 = vmatpush1.msra.mxu0 0.0
    %505 = vmatprep.subr.mxu0 0.0
    %506 = vmatpush1.msra.mxu0 0.0
    %507 = vmatprep.subr.mxu0 0.0
    %508 = vmatpush1.msra.mxu0 0.0
    %509 = vmatprep.subr.mxu0 0.0
    %510 = vmatpush1.msra.mxu0 0.0
    %511 = vmatprep.subr.mxu0 0.0
    %512 = vmatpush1.msra.mxu0 0.0
    %513 = vmatprep.subr.mxu0 0.0
    %514 = vmatpush1.msra.mxu0 0.0
    %515 = vmatprep.mubr.f32.mxu0 0.0
    %516 = vmatmul.mubr.f32.gmra.mrb[0].mxu0 %v449
    %v517 = vpop.f32.mrb[0].mxu0
    %v518 = vadd.f32 %v445, %v517
    %v519 = vpop.f32.mrb[0].mxu0
    %520 = vdwg.mxu0
    %vm521 = vcmask 9216
    %522 = vst.msk [vmem:[#allocation2] sm:$0x3] %vm521, %v518
    // Predicated region
    $region30: #{net_forward.5} parent=1 // pred_check
      _
    $region31: #{net_forward.5} parent=1 // pred_check_branch
      %524 = sbr.rel (0) target = $region33
    $region32: #{net_forward.5} parent=1 // pred_region
      %s526 = ssub.s32 32, 32
      %527 = vsyncadd [#allocation3], %s526
      %s529 = sshll.u32 [#allocation2], 4
      %s530 = int_to_ptr.vmem [resolvable:$true] %s529
      %532 = dma.vmem_to_hbm [thread:$0]  %s530, 32, %s7, [#allocation3]
    $region33: #{net_forward.5} parent=1 // pred_fallthru
      _
    // Predicated region
    $region34: #{net_forward.5} parent=1 // pred_check
      _
    $region35: #{net_forward.5} parent=1 // pred_check_branch
      %534 = sbr.rel (0) target = $region37
    $region36: #{net_forward.5} parent=1 // pred_region
      %535 = dma.done [#allocation3], 32
    $region37: #{net_forward.5} parent=1 // pred_fallthru
      _
    %536 = vsyncpa [#allocation3], 1

</llo_original>
